<compile_context>
chip_gen: v7x
topology: tpu7x:2x2x1
jax: 0.10.0
libtpu: 0.0.40
codegen_flags: <defaults>
</compile_context>

<pallas_src>
import functools
import math

import jax
import jax.numpy as jnp
import numpy as np
from jax.experimental import pallas as pl
from jax.experimental.pallas import tpu as pltpu

EPS = 1e-6


# ----------------------------- Pallas kernel -----------------------------

def _layer_norm(x, g, b, eps):
    # Annotated-Transformer LayerNorm: unbiased std (N-1), divide by (std + eps).
    # Divide replaced by an EUP approximate reciprocal (VPU slot stays free).
    mean = jnp.mean(x, axis=-1, keepdims=True)
    d = x - mean
    var = jnp.sum(d * d, axis=-1, keepdims=True) * (1.0 / (x.shape[-1] - 1))
    inv = pl.reciprocal(jnp.sqrt(var) + eps, approx=True)
    return g * d * inv + b


def encoder_stack_kernel(x_ref, mask_ref,
                         ln1g_ref, ln1b_ref, wqkv_ref, bqkv_ref, wo_ref, bo_ref,
                         ln2g_ref, ln2b_ref, w1_ref, b1_ref, w2_ref, b2_ref,
                         fng_ref, fnb_ref,
                         o_ref, act_ref, *, heads, eps):
    """One EncoderBlock per grid step (b, l); activation lives in VMEM scratch across layers."""
    l = pl.program_id(1)
    n_layers = pl.num_programs(1)

    # Load the batch-b activation from HBM only on the first layer; afterwards it stays in VMEM.
    @pl.when(l == 0)
    def _():
        act_ref[...] = x_ref[...]

    x = act_ref[...]                                  # (S, F) f32
    F = x.shape[-1]
    dk = F // heads

    # ---- sublayer 1: multi-head self-attention (pre-norm residual, dropout = identity) ----
    y = _layer_norm(x, ln1g_ref[...], ln1b_ref[...], eps)

    # fused QKV projection: one bf16 MXU pass, N = 3F.  1/sqrt(dk) is pre-folded into the
    # Q columns of wqkv/bqkv, so no per-score scaling below.
    qkv = jnp.dot(y.astype(jnp.bfloat16), wqkv_ref[...],
                  preferred_element_type=jnp.float32) + bqkv_ref[...]

    # additive mask bias computed in-kernel (pure VPU select, hides under MXU slack)
    bias = jnp.where(mask_ref[...] == 0, jnp.float32(-1e9), jnp.float32(0.0))   # (S, S)

    head_outs = []
    for h in range(heads):                            # static unroll, heads is small
        q = qkv[:, h * dk:(h + 1) * dk].astype(jnp.bfloat16)             # (S, dk)
        k = qkv[:, F + h * dk:F + (h + 1) * dk].astype(jnp.bfloat16)
        v = qkv[:, 2 * F + h * dk:2 * F + (h + 1) * dk].astype(jnp.bfloat16)

        # QK^T without materializing k.T: contract the dk axis of both operands.
        # TODO(synk): if the bundle dump shows per-head vxpose pressure on v6e/v7x (2 XLUs),
        #             transpose k once per head right after the QKV matmul instead.
        s = jax.lax.dot_general(q, k, (((1,), (1,)), ((), ())),
                                preferred_element_type=jnp.float32)      # (S, S) f32
        s = s + bias
        s = s - jnp.max(s, axis=-1, keepdims=True)    # numerically-stable softmax
        p = jnp.exp(s)
        p = p * pl.reciprocal(jnp.sum(p, axis=-1, keepdims=True), approx=True)

        head_outs.append(jnp.dot(p.astype(jnp.bfloat16), v,
                                 preferred_element_type=jnp.float32))    # (S, dk)

    # pack heads into lane columns -> ONE (S,F)@(F,F) output projection (K=128 instead of 4x K=32)
    attn = jnp.concatenate(head_outs, axis=-1)        # (S, F)
    x1 = x + bo_ref[...] + jnp.dot(attn.astype(jnp.bfloat16), wo_ref[...],
                                   preferred_element_type=jnp.float32)

    # ---- sublayer 2: position-wise feed-forward ----
    y2 = _layer_norm(x1, ln2g_ref[...], ln2b_ref[...], eps)
    h1 = jnp.maximum(jnp.dot(y2.astype(jnp.bfloat16), w1_ref[...],
                             preferred_element_type=jnp.float32) + b1_ref[...], 0.0)
    x2 = x1 + jnp.dot(h1.astype(jnp.bfloat16), w2_ref[...],
                      preferred_element_type=jnp.float32) + b2_ref[...]

    act_ref[...] = x2                                 # carry to the next layer (VMEM resident)

    # epilogue: final LayerNorm of the Encoder, written to HBM once per batch element
    @pl.when(l == n_layers - 1)
    def _():
        o_ref[...] = _layer_norm(x2, fng_ref[...], fnb_ref[...], eps).astype(o_ref.dtype)


# ----------------------------- wrapper -----------------------------

def stack_params(layers, final_norm, *, heads):
    """Stack per-layer params along a leading layer axis, fold 1/sqrt(dk) into Q, cast matmul
    weights to bf16 for MXU throughput (biases / LN params stay f32)."""
    F = layers[0]["wqkv"].shape[0]
    dk = F // heads
    scale = 1.0 / math.sqrt(dk)

    def stack(name):
        return jnp.stack([p[name] for p in layers], axis=0)

    qscale = jnp.concatenate([jnp.full((F,), scale, jnp.float32),
                              jnp.ones((2 * F,), jnp.float32)], axis=0)   # scale only Q columns
    wqkv = stack("wqkv") * qscale
    bqkv = stack("bqkv") * qscale

    return dict(
        ln1_g=stack("ln1_g"), ln1_b=stack("ln1_b"),
        wqkv=wqkv.astype(jnp.bfloat16), bqkv=bqkv,
        wo=stack("wo").astype(jnp.bfloat16), bo=stack("bo"),
        ln2_g=stack("ln2_g"), ln2_b=stack("ln2_b"),
        w1=stack("w1").astype(jnp.bfloat16), b1=stack("b1"),
        w2=stack("w2").astype(jnp.bfloat16), b2=stack("b2"),
        fn_g=final_norm["g"], fn_b=final_norm["b"],
    )


def encoder_forward(x, mask, sp, *, heads, n_layers):
    B, S, F = x.shape
    d_ff = sp["w1"].shape[-1]

    def lspec(shape):  # per-layer stacked weight: pick layer l, squeeze the layer dim
        return pl.BlockSpec((None,) + shape, lambda b, l: (l,) + (0,) * len(shape))

    def cspec(shape):  # constant (final-norm) params
        return pl.BlockSpec(shape, lambda b, l: (0,) * len(shape))

    return pl.pallas_call(
        functools.partial(encoder_stack_kernel, heads=heads, eps=EPS),
        out_shape=jax.ShapeDtypeStruct((B, S, F), x.dtype),
        grid=(B, n_layers),
        in_specs=[
            pl.BlockSpec((None, S, F), lambda b, l: (b, 0, 0)),           # x
            pl.BlockSpec((None, None, S, S), lambda b, l: (b, 0, 0, 0)),  # mask
            lspec((1, F)), lspec((1, F)),                                 # ln1 gamma/beta
            lspec((F, 3 * F)), lspec((1, 3 * F)),                         # fused Wqkv, bqkv
            lspec((F, F)), lspec((1, F)),                                 # Wo, bo
            lspec((1, F)), lspec((1, F)),                                 # ln2 gamma/beta
            lspec((F, d_ff)), lspec((1, d_ff)),                           # W1, b1
            lspec((d_ff, F)), lspec((1, F)),                              # W2, b2
            cspec((1, F)), cspec((1, F)),                                 # final LayerNorm
        ],
        out_specs=pl.BlockSpec((None, S, F), lambda b, l: (b, 0, 0)),
        scratch_shapes=[pltpu.VMEM((S, F), jnp.float32)],                 # layer-resident activation
        compiler_params=pltpu.CompilerParams(
            dimension_semantics=("parallel", "arbitrary"),
            vmem_limit_bytes=32 * 1024 * 1024),
    )(x, mask,
      sp["ln1_g"], sp["ln1_b"], sp["wqkv"], sp["bqkv"], sp["wo"], sp["bo"],
      sp["ln2_g"], sp["ln2_b"], sp["w1"], sp["b1"], sp["w2"], sp["b2"],
      sp["fn_g"], sp["fn_b"])


# ----------------------------- params & reference -----------------------------

def init_params(key, n_layers, F, H, d_ff):
    def w(k, shape):
        return 0.02 * jax.random.normal(k, shape, jnp.float32)

    layers = []
    for _ in range(n_layers):
        key, *ks = jax.random.split(key, 9)
        layers.append(dict(
            wqkv=w(ks[0], (F, 3 * F)), bqkv=w(ks[1], (1, 3 * F)),
            wo=w(ks[2], (F, F)), bo=w(ks[3], (1, F)),
            w1=w(ks[4], (F, d_ff)), b1=w(ks[5], (1, d_ff)),
            w2=w(ks[6], (d_ff, F)), b2=w(ks[7], (1, F)),
            ln1_g=jnp.ones((1, F), jnp.float32), ln1_b=jnp.zeros((1, F), jnp.float32),
            ln2_g=jnp.ones((1, F), jnp.float32), ln2_b=jnp.zeros((1, F), jnp.float32),
        ))
    final_norm = dict(g=jnp.ones((1, F), jnp.float32), b=jnp.zeros((1, F), jnp.float32))
    return layers, final_norm


def ref_layernorm(x, g, b, eps=EPS):
    mean = x.mean(-1, keepdims=True)
    d = x - mean
    var = jnp.sum(d * d, -1, keepdims=True) / (x.shape[-1] - 1)
    return g * d / (jnp.sqrt(var) + eps) + b


def ref_encoder(x, mask, layers, final_norm, H):
    B, S, F = x.shape
    dk = F // H
    for p in layers:
        y = ref_layernorm(x, p["ln1_g"], p["ln1_b"])
        qkv = y @ p["wqkv"] + p["bqkv"]
        q, k, v = qkv[..., :F], qkv[..., F:2 * F], qkv[..., 2 * F:]

        def heads(z):
            return z.reshape(B, S, H, dk).transpose(0, 2, 1, 3)

        q, k, v = heads(q), heads(k), heads(v)
        s = jnp.einsum("bhqd,bhkd->bhqk", q, k) / math.sqrt(dk)
        s = jnp.where(mask == 0, -1e9, s)
        pattn = jax.nn.softmax(s, axis=-1)
        o = jnp.einsum("bhqk,bhkd->bhqd", pattn, v)
        o = o.transpose(0, 2, 1, 3).reshape(B, S, F)
        x = x + o @ p["wo"] + p["bo"]

        y = ref_layernorm(x, p["ln2_g"], p["ln2_b"])
        h = jnp.maximum(y @ p["w1"] + p["b1"], 0.0)
        x = x + h @ p["w2"] + p["b2"]
    return ref_layernorm(x, final_norm["g"], final_norm["b"])


# ----------------------------- main -----------------------------

if __name__ == "__main__":
    # Small but lane-aligned shapes (128-multiples in the last dim).
    B, S, F, H, D_FF, N_LAYERS = 2, 128, 128, 4, 256, 2

    key = jax.random.PRNGKey(0)
    kx, kp = jax.random.split(key)
    x = jax.random.normal(kx, (B, S, F), jnp.float32)
    # mask: [B, 1, S, S]; zero entries are masked out (PyTorch masked_fill(mask==0, -1e9)).
    mask = jnp.ones((B, 1, S, S), jnp.float32).at[1, :, :, S - 16:].set(0.0)

    layers, final_norm = init_params(kp, N_LAYERS, F, H, D_FF)
    stacked = stack_params(layers, final_norm, heads=H)   # layer-stacked, Q-scaled, bf16 weights

    fwd = jax.jit(functools.partial(encoder_forward, heads=H, n_layers=N_LAYERS))
    out = jax.block_until_ready(fwd(x, mask, stacked))

    ref = ref_encoder(x, mask, layers, final_norm, H)
    # bf16 MXU operands (with f32 accumulation) relax the match vs. the f32 reference.
    np.testing.assert_allclose(np.asarray(out), np.asarray(ref), rtol=2e-2, atol=2e-2)

    # TODO(synk): dropout inside EncoderBlock is treated as identity (eval mode).
    print("KERNEL_OK")
</pallas_src>

<mosaic_0001>
module attributes {stable_mosaic.version = 11 : i64} {
  func.func @encoder_stack_kernel(%arg0: i32, %arg1: i32, %arg2: memref<1x128x128xf32, #tpu.memory_space<vmem>>, %arg3: memref<1x1x128x128xf32, #tpu.memory_space<vmem>>, %arg4: memref<1x1x128xf32, #tpu.memory_space<vmem>>, %arg5: memref<1x1x128xf32, #tpu.memory_space<vmem>>, %arg6: memref<1x128x384xbf16, #tpu.memory_space<vmem>>, %arg7: memref<1x1x384xf32, #tpu.memory_space<vmem>>, %arg8: memref<1x128x128xbf16, #tpu.memory_space<vmem>>, %arg9: memref<1x1x128xf32, #tpu.memory_space<vmem>>, %arg10: memref<1x1x128xf32, #tpu.memory_space<vmem>>, %arg11: memref<1x1x128xf32, #tpu.memory_space<vmem>>, %arg12: memref<1x128x256xbf16, #tpu.memory_space<vmem>>, %arg13: memref<1x1x256xf32, #tpu.memory_space<vmem>>, %arg14: memref<1x256x128xbf16, #tpu.memory_space<vmem>>, %arg15: memref<1x1x128xf32, #tpu.memory_space<vmem>>, %arg16: memref<1x128xf32, #tpu.memory_space<vmem>>, %arg17: memref<1x128xf32, #tpu.memory_space<vmem>>, %arg18: memref<1x128x128xf32, #tpu.memory_space<vmem>>, %arg19: memref<128x128xf32, #tpu.memory_space<vmem>>) attributes {dimension_semantics = [#tpu.dimension_semantics<parallel>, #tpu.dimension_semantics<arbitrary>], iteration_bounds = array<i64: 2, 2>, scalar_prefetch = 0 : i64, scratch_operands = 1 : i64, tpu.core_type = #tpu.core_type<tc>, window_params = [{transform_indices = @transform_0, window_bounds = array<i64: 1, 128, 128>}, {transform_indices = @transform_1, window_bounds = array<i64: 1, 1, 128, 128>}, {transform_indices = @transform_2, window_bounds = array<i64: 1, 1, 128>}, {transform_indices = @transform_3, window_bounds = array<i64: 1, 1, 128>}, {transform_indices = @transform_4, window_bounds = array<i64: 1, 128, 384>}, {transform_indices = @transform_5, window_bounds = array<i64: 1, 1, 384>}, {transform_indices = @transform_6, window_bounds = array<i64: 1, 128, 128>}, {transform_indices = @transform_7, window_bounds = array<i64: 1, 1, 128>}, {transform_indices = @transform_8, window_bounds = array<i64: 1, 1, 128>}, {transform_indices = @transform_9, window_bounds = array<i64: 1, 1, 128>}, {transform_indices = @transform_10, window_bounds = array<i64: 1, 128, 256>}, {transform_indices = @transform_11, window_bounds = array<i64: 1, 1, 256>}, {transform_indices = @transform_12, window_bounds = array<i64: 1, 256, 128>}, {transform_indices = @transform_13, window_bounds = array<i64: 1, 1, 128>}, {pipeline_mode = #tpu.pipeline_mode<synchronous>, transform_indices = @transform_14, window_bounds = array<i64: 1, 128>}, {pipeline_mode = #tpu.pipeline_mode<synchronous>, transform_indices = @transform_15, window_bounds = array<i64: 1, 128>}, {transform_indices = @transform_16, window_bounds = array<i64: 1, 128, 128>}]} {
    %c0_i32 = arith.constant 0 : i32
    %0 = arith.cmpi eq, %arg1, %c0_i32 : i32
    %1 = arith.extui %0 : i1 to i32
    %c0_i32_0 = arith.constant 0 : i32
    %2 = arith.cmpi ne, %1, %c0_i32_0 : i32
    scf.if %2 {
      %c0_78 = arith.constant 0 : index
      %c0_79 = arith.constant 0 : index
      %c0_80 = arith.constant 0 : index
      %182 = vector.load %arg2[%c0_78, %c0_79, %c0_80] : memref<1x128x128xf32, #tpu.memory_space<vmem>>, vector<1x128x128xf32>
      %183 = vector.shape_cast %182 : vector<1x128x128xf32> to vector<128x128xf32>
      %c0_81 = arith.constant 0 : index
      %c0_82 = arith.constant 0 : index
      %184 = vector.load %arg19[%c0_81, %c0_82] : memref<128x128xf32, #tpu.memory_space<vmem>>, vector<128x128xf32>
      tpu.vector_store %arg19[%c0_81, %c0_82], %183 {strides = array<i32>} : memref<128x128xf32, #tpu.memory_space<vmem>>, vector<128x128xf32>,
    } else {
    }
    %c0 = arith.constant 0 : index
    %c0_1 = arith.constant 0 : index
    %3 = vector.load %arg19[%c0, %c0_1] : memref<128x128xf32, #tpu.memory_space<vmem>>, vector<128x128xf32>
    %c0_2 = arith.constant 0 : index
    %c0_3 = arith.constant 0 : index
    %c0_4 = arith.constant 0 : index
    %4 = vector.load %arg4[%c0_2, %c0_3, %c0_4] : memref<1x1x128xf32, #tpu.memory_space<vmem>>, vector<1x1x128xf32>
    %5 = vector.shape_cast %4 : vector<1x1x128xf32> to vector<1x128xf32>
    %c0_5 = arith.constant 0 : index
    %c0_6 = arith.constant 0 : index
    %c0_7 = arith.constant 0 : index
    %6 = vector.load %arg5[%c0_5, %c0_6, %c0_7] : memref<1x1x128xf32, #tpu.memory_space<vmem>>, vector<1x1x128xf32>
    %7 = vector.shape_cast %6 : vector<1x1x128xf32> to vector<1x128xf32>
    %cst = arith.constant dense<0.000000e+00> : vector<128xf32>
    %8 = vector.multi_reduction <add>, %3, %cst [1] : vector<128x128xf32> to vector<128xf32>
    %9 = vector.shape_cast %8 : vector<128xf32> to vector<128x1xf32>
    %cst_8 = arith.constant 1.280000e+02 : f32
    %10 = vector.broadcast %cst_8 : f32 to vector<128x1xf32>
    %11 = arith.divf %9, %10 : vector<128x1xf32>
    %12 = vector.broadcast %11 : vector<128x1xf32> to vector<128x128xf32>
    %13 = arith.subf %3, %12 : vector<128x128xf32>
    %14 = arith.mulf %13, %13 : vector<128x128xf32>
    %cst_9 = arith.constant dense<0.000000e+00> : vector<128xf32>
    %15 = vector.multi_reduction <add>, %14, %cst_9 [1] : vector<128x128xf32> to vector<128xf32>
    %16 = vector.shape_cast %15 : vector<128xf32> to vector<128x1xf32>
    %cst_10 = arith.constant 0.00787401571 : f32
    %17 = vector.broadcast %cst_10 : f32 to vector<128x1xf32>
    %18 = arith.mulf %16, %17 : vector<128x1xf32>
    %19 = math.sqrt %18 : vector<128x1xf32>
    %cst_11 = arith.constant 9.99999997E-7 : f32
    %20 = vector.broadcast %cst_11 : f32 to vector<128x1xf32>
    %21 = arith.addf %19, %20 : vector<128x1xf32>
    %22 = tpu.reciprocal %21 {approx = true} : vector<128x1xf32> -> vector<128x1xf32>
    %23 = vector.broadcast %5 : vector<1x128xf32> to vector<128x128xf32>
    %24 = arith.mulf %23, %13 : vector<128x128xf32>
    %25 = vector.broadcast %22 : vector<128x1xf32> to vector<128x128xf32>
    %26 = arith.mulf %24, %25 : vector<128x128xf32>
    %27 = vector.broadcast %7 : vector<1x128xf32> to vector<128x128xf32>
    %28 = arith.addf %26, %27 : vector<128x128xf32>
    %29 = arith.truncf %28 : vector<128x128xf32> to vector<128x128xbf16>
    %c0_12 = arith.constant 0 : index
    %c0_13 = arith.constant 0 : index
    %c0_14 = arith.constant 0 : index
    %30 = vector.load %arg6[%c0_12, %c0_13, %c0_14] : memref<1x128x384xbf16, #tpu.memory_space<vmem>>, vector<1x128x384xbf16>
    %31 = vector.shape_cast %30 : vector<1x128x384xbf16> to vector<128x384xbf16>
    %cst_15 = arith.constant dense<0.000000e+00> : vector<128x384xf32>
    %32 = tpu.matmul %29, %31, %cst_15 {dimension_numbers = #tpu.dot_dimension_numbers<[1], [0], [0], [1], [0, 0, 1, 1], [], []>} : vector<128x128xbf16>, vector<128x384xbf16>, vector<128x384xf32> -> vector<128x384xf32>
    %c0_16 = arith.constant 0 : index
    %c0_17 = arith.constant 0 : index
    %c0_18 = arith.constant 0 : index
    %33 = vector.load %arg7[%c0_16, %c0_17, %c0_18] : memref<1x1x384xf32, #tpu.memory_space<vmem>>, vector<1x1x384xf32>
    %34 = vector.shape_cast %33 : vector<1x1x384xf32> to vector<1x384xf32>
    %35 = vector.broadcast %34 : vector<1x384xf32> to vector<128x384xf32>
    %36 = arith.addf %32, %35 : vector<128x384xf32>
    %c0_19 = arith.constant 0 : index
    %c0_20 = arith.constant 0 : index
    %c0_21 = arith.constant 0 : index
    %c0_22 = arith.constant 0 : index
    %37 = vector.load %arg3[%c0_19, %c0_20, %c0_21, %c0_22] : memref<1x1x128x128xf32, #tpu.memory_space<vmem>>, vector<1x1x128x128xf32>
    %38 = vector.shape_cast %37 : vector<1x1x128x128xf32> to vector<128x128xf32>
    %cst_23 = arith.constant 0.000000e+00 : f32
    %39 = vector.broadcast %cst_23 : f32 to vector<128x128xf32>
    %40 = arith.cmpf oeq, %38, %39 : vector<128x128xf32>
    %cst_24 = arith.constant -1.000000e+09 : f32
    %cst_25 = arith.constant 0.000000e+00 : f32
    %41 = vector.broadcast %cst_24 : f32 to vector<128x128xf32>
    %42 = vector.broadcast %cst_25 : f32 to vector<128x128xf32>
    %43 = arith.select %40, %41, %42 : vector<128x128xi1>, vector<128x128xf32>
    %44 = vector.extract_strided_slice %36 {offsets = [0, 0], sizes = [128, 32], strides = [1, 1]} : vector<128x384xf32> to vector<128x32xf32>
    %45 = arith.truncf %44 : vector<128x32xf32> to vector<128x32xbf16>
    %46 = vector.extract_strided_slice %36 {offsets = [0, 128], sizes = [128, 32], strides = [1, 1]} : vector<128x384xf32> to vector<128x32xf32>
    %47 = arith.truncf %46 : vector<128x32xf32> to vector<128x32xbf16>
    %48 = vector.extract_strided_slice %36 {offsets = [0, 256], sizes = [128, 32], strides = [1, 1]} : vector<128x384xf32> to vector<128x32xf32>
    %49 = arith.truncf %48 : vector<128x32xf32> to vector<128x32xbf16>
    %cst_26 = arith.constant dense<0.000000e+00> : vector<128x128xf32>
    %50 = tpu.matmul %45, %47, %cst_26 {dimension_numbers = #tpu.dot_dimension_numbers<[1], [1], [0], [0], [0, 0, 1, 0], [], []>} : vector<128x32xbf16>, vector<128x32xbf16>, vector<128x128xf32> -> vector<128x128xf32>
    %51 = arith.addf %50, %43 : vector<128x128xf32>
    %cst_27 = arith.constant dense<0xFF800000> : vector<128xf32>
    %52 = vector.multi_reduction <maximumf>, %51, %cst_27 [1] : vector<128x128xf32> to vector<128xf32>
    %53 = vector.shape_cast %52 : vector<128xf32> to vector<128x1xf32>
    %54 = vector.broadcast %53 : vector<128x1xf32> to vector<128x128xf32>
    %55 = arith.subf %51, %54 : vector<128x128xf32>
    %56 = math.exp %55 : vector<128x128xf32>
    %cst_28 = arith.constant dense<0.000000e+00> : vector<128xf32>
    %57 = vector.multi_reduction <add>, %56, %cst_28 [1] : vector<128x128xf32> to vector<128xf32>
    %58 = vector.shape_cast %57 : vector<128xf32> to vector<128x1xf32>
    %59 = tpu.reciprocal %58 {approx = true} : vector<128x1xf32> -> vector<128x1xf32>
    %60 = vector.broadcast %59 : vector<128x1xf32> to vector<128x128xf32>
    %61 = arith.mulf %56, %60 : vector<128x128xf32>
    %62 = arith.truncf %61 : vector<128x128xf32> to vector<128x128xbf16>
    %cst_29 = arith.constant dense<0.000000e+00> : vector<128x32xf32>
    %63 = tpu.matmul %62, %49, %cst_29 {dimension_numbers = #tpu.dot_dimension_numbers<[1], [0], [0], [1], [0, 0, 1, 1], [], []>} : vector<128x128xbf16>, vector<128x32xbf16>, vector<128x32xf32> -> vector<128x32xf32>
    %64 = vector.extract_strided_slice %36 {offsets = [0, 32], sizes = [128, 32], strides = [1, 1]} : vector<128x384xf32> to vector<128x32xf32>
    %65 = arith.truncf %64 : vector<128x32xf32> to vector<128x32xbf16>
    %66 = vector.extract_strided_slice %36 {offsets = [0, 160], sizes = [128, 32], strides = [1, 1]} : vector<128x384xf32> to vector<128x32xf32>
    %67 = arith.truncf %66 : vector<128x32xf32> to vector<128x32xbf16>
    %68 = vector.extract_strided_slice %36 {offsets = [0, 288], sizes = [128, 32], strides = [1, 1]} : vector<128x384xf32> to vector<128x32xf32>
    %69 = arith.truncf %68 : vector<128x32xf32> to vector<128x32xbf16>
    %cst_30 = arith.constant dense<0.000000e+00> : vector<128x128xf32>
    %70 = tpu.matmul %65, %67, %cst_30 {dimension_numbers = #tpu.dot_dimension_numbers<[1], [1], [0], [0], [0, 0, 1, 0], [], []>} : vector<128x32xbf16>, vector<128x32xbf16>, vector<128x128xf32> -> vector<128x128xf32>
    %71 = arith.addf %70, %43 : vector<128x128xf32>
    %cst_31 = arith.constant dense<0xFF800000> : vector<128xf32>
    %72 = vector.multi_reduction <maximumf>, %71, %cst_31 [1] : vector<128x128xf32> to vector<128xf32>
    %73 = vector.shape_cast %72 : vector<128xf32> to vector<128x1xf32>
    %74 = vector.broadcast %73 : vector<128x1xf32> to vector<128x128xf32>
    %75 = arith.subf %71, %74 : vector<128x128xf32>
    %76 = math.exp %75 : vector<128x128xf32>
    %cst_32 = arith.constant dense<0.000000e+00> : vector<128xf32>
    %77 = vector.multi_reduction <add>, %76, %cst_32 [1] : vector<128x128xf32> to vector<128xf32>
    %78 = vector.shape_cast %77 : vector<128xf32> to vector<128x1xf32>
    %79 = tpu.reciprocal %78 {approx = true} : vector<128x1xf32> -> vector<128x1xf32>
    %80 = vector.broadcast %79 : vector<128x1xf32> to vector<128x128xf32>
    %81 = arith.mulf %76, %80 : vector<128x128xf32>
    %82 = arith.truncf %81 : vector<128x128xf32> to vector<128x128xbf16>
    %cst_33 = arith.constant dense<0.000000e+00> : vector<128x32xf32>
    %83 = tpu.matmul %82, %69, %cst_33 {dimension_numbers = #tpu.dot_dimension_numbers<[1], [0], [0], [1], [0, 0, 1, 1], [], []>} : vector<128x128xbf16>, vector<128x32xbf16>, vector<128x32xf32> -> vector<128x32xf32>
    %84 = vector.extract_strided_slice %36 {offsets = [0, 64], sizes = [128, 32], strides = [1, 1]} : vector<128x384xf32> to vector<128x32xf32>
    %85 = arith.truncf %84 : vector<128x32xf32> to vector<128x32xbf16>
    %86 = vector.extract_strided_slice %36 {offsets = [0, 192], sizes = [128, 32], strides = [1, 1]} : vector<128x384xf32> to vector<128x32xf32>
    %87 = arith.truncf %86 : vector<128x32xf32> to vector<128x32xbf16>
    %88 = vector.extract_strided_slice %36 {offsets = [0, 320], sizes = [128, 32], strides = [1, 1]} : vector<128x384xf32> to vector<128x32xf32>
    %89 = arith.truncf %88 : vector<128x32xf32> to vector<128x32xbf16>
    %cst_34 = arith.constant dense<0.000000e+00> : vector<128x128xf32>
    %90 = tpu.matmul %85, %87, %cst_34 {dimension_numbers = #tpu.dot_dimension_numbers<[1], [1], [0], [0], [0, 0, 1, 0], [], []>} : vector<128x32xbf16>, vector<128x32xbf16>, vector<128x128xf32> -> vector<128x128xf32>
    %91 = arith.addf %90, %43 : vector<128x128xf32>
    %cst_35 = arith.constant dense<0xFF800000> : vector<128xf32>
    %92 = vector.multi_reduction <maximumf>, %91, %cst_35 [1] : vector<128x128xf32> to vector<128xf32>
    %93 = vector.shape_cast %92 : vector<128xf32> to vector<128x1xf32>
    %94 = vector.broadcast %93 : vector<128x1xf32> to vector<128x128xf32>
    %95 = arith.subf %91, %94 : vector<128x128xf32>
    %96 = math.exp %95 : vector<128x128xf32>
    %cst_36 = arith.constant dense<0.000000e+00> : vector<128xf32>
    %97 = vector.multi_reduction <add>, %96, %cst_36 [1] : vector<128x128xf32> to vector<128xf32>
    %98 = vector.shape_cast %97 : vector<128xf32> to vector<128x1xf32>
    %99 = tpu.reciprocal %98 {approx = true} : vector<128x1xf32> -> vector<128x1xf32>
    %100 = vector.broadcast %99 : vector<128x1xf32> to vector<128x128xf32>
    %101 = arith.mulf %96, %100 : vector<128x128xf32>
    %102 = arith.truncf %101 : vector<128x128xf32> to vector<128x128xbf16>
    %cst_37 = arith.constant dense<0.000000e+00> : vector<128x32xf32>
    %103 = tpu.matmul %102, %89, %cst_37 {dimension_numbers = #tpu.dot_dimension_numbers<[1], [0], [0], [1], [0, 0, 1, 1], [], []>} : vector<128x128xbf16>, vector<128x32xbf16>, vector<128x32xf32> -> vector<128x32xf32>
    %104 = vector.extract_strided_slice %36 {offsets = [0, 96], sizes = [128, 32], strides = [1, 1]} : vector<128x384xf32> to vector<128x32xf32>
    %105 = arith.truncf %104 : vector<128x32xf32> to vector<128x32xbf16>
    %106 = vector.extract_strided_slice %36 {offsets = [0, 224], sizes = [128, 32], strides = [1, 1]} : vector<128x384xf32> to vector<128x32xf32>
    %107 = arith.truncf %106 : vector<128x32xf32> to vector<128x32xbf16>
    %108 = vector.extract_strided_slice %36 {offsets = [0, 352], sizes = [128, 32], strides = [1, 1]} : vector<128x384xf32> to vector<128x32xf32>
    %109 = arith.truncf %108 : vector<128x32xf32> to vector<128x32xbf16>
    %cst_38 = arith.constant dense<0.000000e+00> : vector<128x128xf32>
    %110 = tpu.matmul %105, %107, %cst_38 {dimension_numbers = #tpu.dot_dimension_numbers<[1], [1], [0], [0], [0, 0, 1, 0], [], []>} : vector<128x32xbf16>, vector<128x32xbf16>, vector<128x128xf32> -> vector<128x128xf32>
    %111 = arith.addf %110, %43 : vector<128x128xf32>
    %cst_39 = arith.constant dense<0xFF800000> : vector<128xf32>
    %112 = vector.multi_reduction <maximumf>, %111, %cst_39 [1] : vector<128x128xf32> to vector<128xf32>
    %113 = vector.shape_cast %112 : vector<128xf32> to vector<128x1xf32>
    %114 = vector.broadcast %113 : vector<128x1xf32> to vector<128x128xf32>
    %115 = arith.subf %111, %114 : vector<128x128xf32>
    %116 = math.exp %115 : vector<128x128xf32>
    %cst_40 = arith.constant dense<0.000000e+00> : vector<128xf32>
    %117 = vector.multi_reduction <add>, %116, %cst_40 [1] : vector<128x128xf32> to vector<128xf32>
    %118 = vector.shape_cast %117 : vector<128xf32> to vector<128x1xf32>
    %119 = tpu.reciprocal %118 {approx = true} : vector<128x1xf32> -> vector<128x1xf32>
    %120 = vector.broadcast %119 : vector<128x1xf32> to vector<128x128xf32>
    %121 = arith.mulf %116, %120 : vector<128x128xf32>
    %122 = arith.truncf %121 : vector<128x128xf32> to vector<128x128xbf16>
    %cst_41 = arith.constant dense<0.000000e+00> : vector<128x32xf32>
    %123 = tpu.matmul %122, %109, %cst_41 {dimension_numbers = #tpu.dot_dimension_numbers<[1], [0], [0], [1], [0, 0, 1, 1], [], []>} : vector<128x128xbf16>, vector<128x32xbf16>, vector<128x32xf32> -> vector<128x32xf32>
    %124 = tpu.concatenate %63, %83, %103, %123 in 1 : vector<128x32xf32>, vector<128x32xf32>, vector<128x32xf32>, vector<128x32xf32> -> vector<128x128xf32>
    %c0_42 = arith.constant 0 : index
    %c0_43 = arith.constant 0 : index
    %c0_44 = arith.constant 0 : index
    %125 = vector.load %arg9[%c0_42, %c0_43, %c0_44] : memref<1x1x128xf32, #tpu.memory_space<vmem>>, vector<1x1x128xf32>
    %126 = vector.shape_cast %125 : vector<1x1x128xf32> to vector<1x128xf32>
    %127 = vector.broadcast %126 : vector<1x128xf32> to vector<128x128xf32>
    %128 = arith.addf %3, %127 : vector<128x128xf32>
    %129 = arith.truncf %124 : vector<128x128xf32> to vector<128x128xbf16>
    %c0_45 = arith.constant 0 : index
    %c0_46 = arith.constant 0 : index
    %c0_47 = arith.constant 0 : index
    %130 = vector.load %arg8[%c0_45, %c0_46, %c0_47] : memref<1x128x128xbf16, #tpu.memory_space<vmem>>, vector<1x128x128xbf16>
    %131 = vector.shape_cast %130 : vector<1x128x128xbf16> to vector<128x128xbf16>
    %cst_48 = arith.constant dense<0.000000e+00> : vector<128x128xf32>
    %132 = tpu.matmul %129, %131, %cst_48 {dimension_numbers = #tpu.dot_dimension_numbers<[1], [0], [0], [1], [0, 0, 1, 1], [], []>} : vector<128x128xbf16>, vector<128x128xbf16>, vector<128x128xf32> -> vector<128x128xf32>
    %133 = arith.addf %128, %132 : vector<128x128xf32>
    %c0_49 = arith.constant 0 : index
    %c0_50 = arith.constant 0 : index
    %c0_51 = arith.constant 0 : index
    %134 = vector.load %arg10[%c0_49, %c0_50, %c0_51] : memref<1x1x128xf32, #tpu.memory_space<vmem>>, vector<1x1x128xf32>
    %135 = vector.shape_cast %134 : vector<1x1x128xf32> to vector<1x128xf32>
    %c0_52 = arith.constant 0 : index
    %c0_53 = arith.constant 0 : index
    %c0_54 = arith.constant 0 : index
    %136 = vector.load %arg11[%c0_52, %c0_53, %c0_54] : memref<1x1x128xf32, #tpu.memory_space<vmem>>, vector<1x1x128xf32>
    %137 = vector.shape_cast %136 : vector<1x1x128xf32> to vector<1x128xf32>
    %cst_55 = arith.constant dense<0.000000e+00> : vector<128xf32>
    %138 = vector.multi_reduction <add>, %133, %cst_55 [1] : vector<128x128xf32> to vector<128xf32>
    %139 = vector.shape_cast %138 : vector<128xf32> to vector<128x1xf32>
    %cst_56 = arith.constant 1.280000e+02 : f32
    %140 = vector.broadcast %cst_56 : f32 to vector<128x1xf32>
    %141 = arith.divf %139, %140 : vector<128x1xf32>
    %142 = vector.broadcast %141 : vector<128x1xf32> to vector<128x128xf32>
    %143 = arith.subf %133, %142 : vector<128x128xf32>
    %144 = arith.mulf %143, %143 : vector<128x128xf32>
    %cst_57 = arith.constant dense<0.000000e+00> : vector<128xf32>
    %145 = vector.multi_reduction <add>, %144, %cst_57 [1] : vector<128x128xf32> to vector<128xf32>
    %146 = vector.shape_cast %145 : vector<128xf32> to vector<128x1xf32>
    %cst_58 = arith.constant 0.00787401571 : f32
    %147 = vector.broadcast %cst_58 : f32 to vector<128x1xf32>
    %148 = arith.mulf %146, %147 : vector<128x1xf32>
    %149 = math.sqrt %148 : vector<128x1xf32>
    %cst_59 = arith.constant 9.99999997E-7 : f32
    %150 = vector.broadcast %cst_59 : f32 to vector<128x1xf32>
    %151 = arith.addf %149, %150 : vector<128x1xf32>
    %152 = tpu.reciprocal %151 {approx = true} : vector<128x1xf32> -> vector<128x1xf32>
    %153 = vector.broadcast %135 : vector<1x128xf32> to vector<128x128xf32>
    %154 = arith.mulf %153, %143 : vector<128x128xf32>
    %155 = vector.broadcast %152 : vector<128x1xf32> to vector<128x128xf32>
    %156 = arith.mulf %154, %155 : vector<128x128xf32>
    %157 = vector.broadcast %137 : vector<1x128xf32> to vector<128x128xf32>
    %158 = arith.addf %156, %157 : vector<128x128xf32>
    %159 = arith.truncf %158 : vector<128x128xf32> to vector<128x128xbf16>
    %c0_60 = arith.constant 0 : index
    %c0_61 = arith.constant 0 : index
    %c0_62 = arith.constant 0 : index
    %160 = vector.load %arg12[%c0_60, %c0_61, %c0_62] : memref<1x128x256xbf16, #tpu.memory_space<vmem>>, vector<1x128x256xbf16>
    %161 = vector.shape_cast %160 : vector<1x128x256xbf16> to vector<128x256xbf16>
    %cst_63 = arith.constant dense<0.000000e+00> : vector<128x256xf32>
    %162 = tpu.matmul %159, %161, %cst_63 {dimension_numbers = #tpu.dot_dimension_numbers<[1], [0], [0], [1], [0, 0, 1, 1], [], []>} : vector<128x128xbf16>, vector<128x256xbf16>, vector<128x256xf32> -> vector<128x256xf32>
    %c0_64 = arith.constant 0 : index
    %c0_65 = arith.constant 0 : index
    %c0_66 = arith.constant 0 : index
    %163 = vector.load %arg13[%c0_64, %c0_65, %c0_66] : memref<1x1x256xf32, #tpu.memory_space<vmem>>, vector<1x1x256xf32>
    %164 = vector.shape_cast %163 : vector<1x1x256xf32> to vector<1x256xf32>
    %165 = vector.broadcast %164 : vector<1x256xf32> to vector<128x256xf32>
    %166 = arith.addf %162, %165 : vector<128x256xf32>
    %cst_67 = arith.constant 0.000000e+00 : f32
    %167 = vector.broadcast %cst_67 : f32 to vector<128x256xf32>
    %168 = arith.maximumf %166, %167 : vector<128x256xf32>
    %169 = arith.truncf %168 : vector<128x256xf32> to vector<128x256xbf16>
    %c0_68 = arith.constant 0 : index
    %c0_69 = arith.constant 0 : index
    %c0_70 = arith.constant 0 : index
    %170 = vector.load %arg14[%c0_68, %c0_69, %c0_70] : memref<1x256x128xbf16, #tpu.memory_space<vmem>>, vector<1x256x128xbf16>
    %171 = vector.shape_cast %170 : vector<1x256x128xbf16> to vector<256x128xbf16>
    %cst_71 = arith.constant dense<0.000000e+00> : vector<128x128xf32>
    %172 = tpu.matmul %169, %171, %cst_71 {dimension_numbers = #tpu.dot_dimension_numbers<[1], [0], [0], [1], [0, 0, 1, 1], [], []>} : vector<128x256xbf16>, vector<256x128xbf16>, vector<128x128xf32> -> vector<128x128xf32>
    %173 = arith.addf %133, %172 : vector<128x128xf32>
    %c0_72 = arith.constant 0 : index
    %c0_73 = arith.constant 0 : index
    %c0_74 = arith.constant 0 : index
    %174 = vector.load %arg15[%c0_72, %c0_73, %c0_74] : memref<1x1x128xf32, #tpu.memory_space<vmem>>, vector<1x1x128xf32>
    %175 = vector.shape_cast %174 : vector<1x1x128xf32> to vector<1x128xf32>
    %176 = vector.broadcast %175 : vector<1x128xf32> to vector<128x128xf32>
    %177 = arith.addf %173, %176 : vector<128x128xf32>
    %c0_75 = arith.constant 0 : index
    %c0_76 = arith.constant 0 : index
    %178 = vector.load %arg19[%c0_75, %c0_76] : memref<128x128xf32, #tpu.memory_space<vmem>>, vector<128x128xf32>
    tpu.vector_store %arg19[%c0_75, %c0_76], %177 {strides = array<i32>} : memref<128x128xf32, #tpu.memory_space<vmem>>, vector<128x128xf32>,
    %c1_i32 = arith.constant 1 : i32
    %179 = arith.cmpi eq, %arg1, %c1_i32 : i32
    %180 = arith.extui %179 : i1 to i32
    %c0_i32_77 = arith.constant 0 : i32
    %181 = arith.cmpi ne, %180, %c0_i32_77 : i32
    scf.if %181 {
      %c0_78 = arith.constant 0 : index
      %c0_79 = arith.constant 0 : index
      %182 = vector.load %arg16[%c0_78, %c0_79] : memref<1x128xf32, #tpu.memory_space<vmem>>, vector<1x128xf32>
      %c0_80 = arith.constant 0 : index
      %c0_81 = arith.constant 0 : index
      %183 = vector.load %arg17[%c0_80, %c0_81] : memref<1x128xf32, #tpu.memory_space<vmem>>, vector<1x128xf32>
      %cst_82 = arith.constant dense<0.000000e+00> : vector<128xf32>
      %184 = vector.multi_reduction <add>, %177, %cst_82 [1] : vector<128x128xf32> to vector<128xf32>
      %185 = vector.shape_cast %184 : vector<128xf32> to vector<128x1xf32>
      %cst_83 = arith.constant 1.280000e+02 : f32
      %186 = vector.broadcast %cst_83 : f32 to vector<128x1xf32>
      %187 = arith.divf %185, %186 : vector<128x1xf32>
      %188 = vector.broadcast %187 : vector<128x1xf32> to vector<128x128xf32>
      %189 = arith.subf %177, %188 : vector<128x128xf32>
      %190 = arith.mulf %189, %189 : vector<128x128xf32>
      %cst_84 = arith.constant dense<0.000000e+00> : vector<128xf32>
      %191 = vector.multi_reduction <add>, %190, %cst_84 [1] : vector<128x128xf32> to vector<128xf32>
      %192 = vector.shape_cast %191 : vector<128xf32> to vector<128x1xf32>
      %cst_85 = arith.constant 0.00787401571 : f32
      %193 = vector.broadcast %cst_85 : f32 to vector<128x1xf32>
      %194 = arith.mulf %192, %193 : vector<128x1xf32>
      %195 = math.sqrt %194 : vector<128x1xf32>
      %cst_86 = arith.constant 9.99999997E-7 : f32
      %196 = vector.broadcast %cst_86 : f32 to vector<128x1xf32>
      %197 = arith.addf %195, %196 : vector<128x1xf32>
      %198 = tpu.reciprocal %197 {approx = true} : vector<128x1xf32> -> vector<128x1xf32>
      %199 = vector.broadcast %182 : vector<1x128xf32> to vector<128x128xf32>
      %200 = arith.mulf %199, %189 : vector<128x128xf32>
      %201 = vector.broadcast %198 : vector<128x1xf32> to vector<128x128xf32>
      %202 = arith.mulf %200, %201 : vector<128x128xf32>
      %203 = vector.broadcast %183 : vector<1x128xf32> to vector<128x128xf32>
      %204 = arith.addf %202, %203 : vector<128x128xf32>
      %c0_87 = arith.constant 0 : index
      %c0_88 = arith.constant 0 : index
      %c0_89 = arith.constant 0 : index
      %205 = vector.load %arg18[%c0_87, %c0_88, %c0_89] : memref<1x128x128xf32, #tpu.memory_space<vmem>>, vector<1x128x128xf32>
      %206 = vector.shape_cast %205 : vector<1x128x128xf32> to vector<128x128xf32>
      %207 = vector.shape_cast %204 : vector<128x128xf32> to vector<1x128x128xf32>
      tpu.vector_store %arg18[%c0_87, %c0_88, %c0_89], %207 {strides = array<i32>} : memref<1x128x128xf32, #tpu.memory_space<vmem>>, vector<1x128x128xf32>,
    } else {
    }
    return
  }
  func.func @transform_0(%arg0: i32, %arg1: i32) -> (i32, i32, i32) {
    %c0_i32 = arith.constant 0 : i32
    %c0_i32_0 = arith.constant 0 : i32
    %c0_i32_1 = arith.constant 0 : i32
    return %arg0, %c0_i32, %c0_i32_0 : i32, i32, i32
  }
  func.func @transform_1(%arg0: i32, %arg1: i32) -> (i32, i32, i32, i32) {
    %c0_i32 = arith.constant 0 : i32
    %c0_i32_0 = arith.constant 0 : i32
    %c0_i32_1 = arith.constant 0 : i32
    %c0_i32_2 = arith.constant 0 : i32
    return %arg0, %c0_i32, %c0_i32_0, %c0_i32_1 : i32, i32, i32, i32
  }
  func.func @transform_2(%arg0: i32, %arg1: i32) -> (i32, i32, i32) {
    %c0_i32 = arith.constant 0 : i32
    %c0_i32_0 = arith.constant 0 : i32
    %c0_i32_1 = arith.constant 0 : i32
    return %arg1, %c0_i32, %c0_i32_0 : i32, i32, i32
  }
  func.func @transform_3(%arg0: i32, %arg1: i32) -> (i32, i32, i32) {
    %c0_i32 = arith.constant 0 : i32
    %c0_i32_0 = arith.constant 0 : i32
    %c0_i32_1 = arith.constant 0 : i32
    return %arg1, %c0_i32, %c0_i32_0 : i32, i32, i32
  }
  func.func @transform_4(%arg0: i32, %arg1: i32) -> (i32, i32, i32) {
    %c0_i32 = arith.constant 0 : i32
    %c0_i32_0 = arith.constant 0 : i32
    %c0_i32_1 = arith.constant 0 : i32
    return %arg1, %c0_i32, %c0_i32_0 : i32, i32, i32
  }
  func.func @transform_5(%arg0: i32, %arg1: i32) -> (i32, i32, i32) {
    %c0_i32 = arith.constant 0 : i32
    %c0_i32_0 = arith.constant 0 : i32
    %c0_i32_1 = arith.constant 0 : i32
    return %arg1, %c0_i32, %c0_i32_0 : i32, i32, i32
  }
  func.func @transform_6(%arg0: i32, %arg1: i32) -> (i32, i32, i32) {
    %c0_i32 = arith.constant 0 : i32
    %c0_i32_0 = arith.constant 0 : i32
    %c0_i32_1 = arith.constant 0 : i32
    return %arg1, %c0_i32, %c0_i32_0 : i32, i32, i32
  }
  func.func @transform_7(%arg0: i32, %arg1: i32) -> (i32, i32, i32) {
    %c0_i32 = arith.constant 0 : i32
    %c0_i32_0 = arith.constant 0 : i32
    %c0_i32_1 = arith.constant 0 : i32
    return %arg1, %c0_i32, %c0_i32_0 : i32, i32, i32
  }
  func.func @transform_8(%arg0: i32, %arg1: i32) -> (i32, i32, i32) {
    %c0_i32 = arith.constant 0 : i32
    %c0_i32_0 = arith.constant 0 : i32
    %c0_i32_1 = arith.constant 0 : i32
    return %arg1, %c0_i32, %c0_i32_0 : i32, i32, i32
  }
  func.func @transform_9(%arg0: i32, %arg1: i32) -> (i32, i32, i32) {
    %c0_i32 = arith.constant 0 : i32
    %c0_i32_0 = arith.constant 0 : i32
    %c0_i32_1 = arith.constant 0 : i32
    return %arg1, %c0_i32, %c0_i32_0 : i32, i32, i32
  }
  func.func @transform_10(%arg0: i32, %arg1: i32) -> (i32, i32, i32) {
    %c0_i32 = arith.constant 0 : i32
    %c0_i32_0 = arith.constant 0 : i32
    %c0_i32_1 = arith.constant 0 : i32
    return %arg1, %c0_i32, %c0_i32_0 : i32, i32, i32
  }
  func.func @transform_11(%arg0: i32, %arg1: i32) -> (i32, i32, i32) {
    %c0_i32 = arith.constant 0 : i32
    %c0_i32_0 = arith.constant 0 : i32
    %c0_i32_1 = arith.constant 0 : i32
    return %arg1, %c0_i32, %c0_i32_0 : i32, i32, i32
  }
  func.func @transform_12(%arg0: i32, %arg1: i32) -> (i32, i32, i32) {
    %c0_i32 = arith.constant 0 : i32
    %c0_i32_0 = arith.constant 0 : i32
    %c0_i32_1 = arith.constant 0 : i32
    return %arg1, %c0_i32, %c0_i32_0 : i32, i32, i32
  }
  func.func @transform_13(%arg0: i32, %arg1: i32) -> (i32, i32, i32) {
    %c0_i32 = arith.constant 0 : i32
    %c0_i32_0 = arith.constant 0 : i32
    %c0_i32_1 = arith.constant 0 : i32
    return %arg1, %c0_i32, %c0_i32_0 : i32, i32, i32
  }
  func.func @transform_14(%arg0: i32, %arg1: i32) -> (i32, i32) {
    %c0_i32 = arith.constant 0 : i32
    %c0_i32_0 = arith.constant 0 : i32
    %c0_i32_1 = arith.constant 0 : i32
    return %c0_i32, %c0_i32_0 : i32, i32
  }
  func.func @transform_15(%arg0: i32, %arg1: i32) -> (i32, i32) {
    %c0_i32 = arith.constant 0 : i32
    %c0_i32_0 = arith.constant 0 : i32
    %c0_i32_1 = arith.constant 0 : i32
    return %c0_i32, %c0_i32_0 : i32, i32
  }
  func.func @transform_16(%arg0: i32, %arg1: i32) -> (i32, i32, i32) {
    %c0_i32 = arith.constant 0 : i32
    %c0_i32_0 = arith.constant 0 : i32
    %c0_i32_1 = arith.constant 0 : i32
    return %arg0, %c0_i32, %c0_i32_0 : i32, i32, i32
  }
}

</mosaic_0001>

<llo_original>
// kernel: encoder_forward.1
$region0: #{encoder_forward.1}
  #allocation0 [shape = 'u32[]', space=smem, size = 0x4, offset = 0x4, fixed_abs, tag = 'smem constant byte address 0x4 - core index']
  #allocation1 [shape = 'u32[144,128]{1,0:T(1,128)}', space=vmem, size = 0x12000, scoped, tag = 'internal scratch']
  #allocation2 [shape = 'f32[128,128]{1,0:T(8,128)}', space=vmem, size = 0x10000, scoped, tag = 'scratch operand']
  %s0 = inlined_call_operand.hbm [shape: f32[2,128,128], index: 0, kind: input, shape index: {}]
  %s1 = inlined_call_operand.hbm [shape: f32[2,1,128,128], index: 1, kind: input, shape index: {}]
  %s2 = inlined_call_operand.vmem [shape: f32[2,1,128], index: 2, kind: input, shape index: {}]
  %s3 = inlined_call_operand.vmem [shape: f32[2,1,128], index: 3, kind: input, shape index: {}]
  %s4 = inlined_call_operand.hbm [shape: bf16[2,128,384], index: 4, kind: input, shape index: {}]
  %s5 = inlined_call_operand.vmem [shape: f32[2,1,384], index: 5, kind: input, shape index: {}]
  %s6 = inlined_call_operand.hbm [shape: bf16[2,128,128], index: 6, kind: input, shape index: {}]
  %s7 = inlined_call_operand.hbm [shape: f32[2,1,128], index: 7, kind: input, shape index: {}]
  %s8 = inlined_call_operand.vmem [shape: f32[2,1,128], index: 8, kind: input, shape index: {}]
  %s9 = inlined_call_operand.vmem [shape: f32[2,1,128], index: 9, kind: input, shape index: {}]
  %s10 = inlined_call_operand.hbm [shape: bf16[2,128,256], index: 10, kind: input, shape index: {}]
  %s11 = inlined_call_operand.vmem [shape: f32[2,1,256], index: 11, kind: input, shape index: {}]
  %s12 = inlined_call_operand.hbm [shape: bf16[2,256,128], index: 12, kind: input, shape index: {}]
  %s13 = inlined_call_operand.hbm [shape: f32[2,1,128], index: 13, kind: input, shape index: {}]
  %s14 = inlined_call_operand.vmem [shape: f32[1,128], index: 14, kind: input, shape index: {}]
  %s15 = inlined_call_operand.vmem [shape: f32[1,128], index: 15, kind: input, shape index: {}]
  %s16 = inlined_call_operand.hbm [shape: f32[2,128,128], index: 16, kind: output, shape index: {}]
  %s17 = sld [smem:[#allocation0]]
  $region137: #{encoder_forward.1} parent=0
    _
  %s19 = ssub.s32 1, %s17
  %s20 = scalar_select 0, %s19, %s17
  $region1: #{encoder_forward.1} parent=0
    #allocation3 [shape = 'u8[131072]{0}', space=vmem, size = 0x20000, scoped, tag = 'input window, operand 0']
    #allocation4 [shape = 's32[2]{0}', space=sflag, size = 0x8, scoped, tag = 'scoped memory for encoder_forward.1']
    #allocation5 [shape = 's32[2]{0}', space=sflag, size = 0x8, scoped, tag = 'scoped memory for encoder_forward.1']
    #allocation6 [shape = 'u8[131072]{0}', space=vmem, size = 0x20000, scoped, tag = 'input window, operand 1']
    #allocation7 [shape = 's32[2]{0}', space=sflag, size = 0x8, scoped, tag = 'scoped memory for encoder_forward.1']
    #allocation8 [shape = 'u8[196608]{0}', space=vmem, size = 0x30000, scoped, tag = 'input window, operand 4']
    #allocation9 [shape = 'u8[65536]{0}', space=vmem, size = 0x10000, scoped, tag = 'input window, operand 6']
    #allocation10 [shape = 's32[2]{0}', space=sflag, size = 0x8, scoped, tag = 'scoped memory for encoder_forward.1']
    #allocation11 [shape = 'u8[1024]{0}', space=vmem, size = 0x400, scoped, tag = 'input window, operand 7']
    #allocation12 [shape = 'u8[131072]{0}', space=vmem, size = 0x20000, scoped, tag = 'input window, operand 10']
    #allocation13 [shape = 's32[2]{0}', space=sflag, size = 0x8, scoped, tag = 'scoped memory for encoder_forward.1']
    #allocation14 [shape = 'u8[131072]{0}', space=vmem, size = 0x20000, scoped, tag = 'input window, operand 12']
    #allocation15 [shape = 'u8[1024]{0}', space=vmem, size = 0x400, scoped, tag = 'input window, operand 13']
    #allocation16 [shape = 's32[2]{0}', space=sflag, size = 0x8, scoped, tag = 'scoped memory for encoder_forward.1']
    #allocation17 [shape = 'u8[131072]{0}', space=vmem, size = 0x20000, scoped, tag = 'output window, operand 0']
    %21 = vsyncpa [#allocation4], 0
    %s22 = scalar_lea.sflag [#allocation4], 1
    %23 = vsyncpa %s22, 0
    %24 = vsyncpa [#allocation7], 0
    %s25 = scalar_lea.sflag [#allocation7], 1
    %26 = vsyncpa %s25, 0
    %27 = vsyncpa [#allocation10], 0
    %s28 = scalar_lea.sflag [#allocation10], 1
    %29 = vsyncpa %s28, 0
    %30 = vsyncpa [#allocation13], 0
    %s31 = scalar_lea.sflag [#allocation13], 1
    %32 = vsyncpa %s31, 0
    %33 = vsyncpa [#allocation16], 0
    %s34 = scalar_lea.sflag [#allocation16], 1
    %35 = vsyncpa %s34, 0
    %36 = vsyncpa [#allocation5], 0
    %s37 = scalar_lea.sflag [#allocation5], 1
    %38 = vsyncpa %s37, 0
    loop: start=0, step=1, limit=6
    $region2: #{encoder_forward.1} parent=1 // loop_pre_header
      _
    $region3: #{encoder_forward.1} parent=1 // loop_header
      %s40 = sphi 0, %s44
      %p41 = scmp.ge.s32.totalorder %s40, 6
      %s47 = sphi 0, %s59
      %s48 = sphi 0, %s55
      %s49 = sphi 0, %s47
      %s50 = sphi 0, %s48
      %s51 = sphi 0, %s49
      %s52 = sphi 0, %s50
      %s62 = sphi 0, %s64
      %s65 = sphi 0, %s62
      %s66 = sphi 0, %s65
      %s82 = sphi 0, %s66
      %s88 = sphi 0, %s90
      %s91 = sphi 0, %s88
      %s92 = sphi 0, %s91
      %s108 = sphi 0, %s92
      %s114 = sphi 0, %s116
      %s117 = sphi 0, %s114
      %s118 = sphi 0, %s117
      %s134 = sphi 0, %s118
      %s140 = sphi 0, %s142
      %s143 = sphi 0, %s140
      %s144 = sphi 0, %s143
      %s160 = sphi 0, %s144
      %s166 = sphi 0, %s168
      %s169 = sphi 0, %s166
      %s170 = sphi 0, %s169
      %s186 = sphi 0, %s170
      %s192 = sphi 0, %s194
      %s195 = sphi 0, %s192
      %s196 = sphi 0, %s195
      %s212 = sphi 0, %s196
      %s218 = sphi 0, %s220
      %s221 = sphi 0, %s218
      %s222 = sphi 0, %s221
      %s238 = sphi 0, %s222
      %s244 = sphi 0, %s246
      %s247 = sphi 0, %s244
      %s248 = sphi 0, %s247
      %s264 = sphi 0, %s248
      %s270 = sphi 0, %s272
      %s273 = sphi 0, %s270
      %s274 = sphi 0, %s273
      %s290 = sphi 0, %s274
      %s296 = sphi 0, %s298
      %s299 = sphi 0, %s296
      %s300 = sphi 0, %s299
      %s316 = sphi 0, %s300
      %s322 = sphi 0, %s324
      %s325 = sphi 0, %s322
      %s326 = sphi 0, %s325
      %s342 = sphi 0, %s326
      %s348 = sphi 0, %s350
      %s351 = sphi 0, %s348
      %s352 = sphi 0, %s351
      %s368 = sphi 0, %s352
      %s374 = sphi 0, %s376
      %s377 = sphi 0, %s374
      %s378 = sphi 0, %s377
      %s394 = sphi 0, %s378
      %s400 = sphi 0, %s402
      %s403 = sphi 0, %s400
      %s404 = sphi 0, %s403
      %s420 = sphi 0, %s404
      %s424 = sphi 0, %s424
      %s426 = sphi 0, %s424
      %s427 = sphi 0, %s426
      %s441 = sphi 0, %s427
      %s445 = sphi 0, %s445
      %s447 = sphi 0, %s445
      %s448 = sphi 0, %s447
      %s462 = sphi 0, %s448
      %s468 = sphi 0, %s470
      %s471 = sphi 0, %s468
      %s472 = sphi 0, %s471
      %s488 = sphi 0, %s472
    $region4: #{encoder_forward.1} parent=1 // loop_header_branch
      %43 = sbr.rel (%p41) target = $region8
    $region5: #{encoder_forward.1} parent=1 // loop_body
      %s45 = ssub.s32 %s40, 1
      %s46 = ssub.s32 %s40, 2
      %s53 = sadd.s32 1, %s48
      %p54 = scmp.ge.s32.totalorder %s53, 2
      %s55 = scalar_select %p54, 0, %s53
      %s56 = sadd.s32 1, %s47
      %s57 = scalar_select %p54, %s56, %s47
      %p58 = scmp.ge.s32.totalorder %s57, 2
      %s59 = scalar_select %p58, 0, %s57
      %s60 = ssub.s32 %s47, %s59
      %p61 = scmp.eq.s32.totalorder %s60, 0
      %s63 = sadd.s32 %s62, 1
      %s64 = scalar_select %p61, %s62, %s63
      %p67 = pneg %p61
      %p68 = scmp.eq.s32.totalorder %s40, 3
      %p69 = por %p67, %p68
      %p70 = scmp.ne.s32.totalorder %s62, %s65
      %p71 = scmp.eq.s32.totalorder %s40, 0
      %p72 = por %p70, %p71
      %p73 = scmp.ne.s32.totalorder %s62, %s65
      %p74 = scmp.eq.s32.totalorder %s45, 3
      %p75 = por %p73, %p74
      %p76 = scmp.ne.s32.totalorder %s65, %s66
      %p77 = scmp.eq.s32.totalorder %s45, 0
      %p78 = por %p76, %p77
      %p79 = scmp.ne.s32.totalorder %s65, %s66
      %p80 = scmp.eq.s32.totalorder %s46, 3
      %p81 = por %p79, %p80
      %p83 = scmp.ne.s32.totalorder %s66, %s82
      %p84 = scmp.eq.s32.totalorder %s46, 0
      %p85 = por %p83, %p84
      %s86 = ssub.s32 %s47, %s59
      %p87 = scmp.eq.s32.totalorder %s86, 0
      %s89 = sadd.s32 %s88, 1
      %s90 = scalar_select %p87, %s88, %s89
      %p93 = pneg %p87
      %p94 = scmp.eq.s32.totalorder %s40, 3
      %p95 = por %p93, %p94
      %p96 = scmp.ne.s32.totalorder %s88, %s91
      %p97 = scmp.eq.s32.totalorder %s40, 0
      %p98 = por %p96, %p97
      %p99 = scmp.ne.s32.totalorder %s88, %s91
      %p100 = scmp.eq.s32.totalorder %s45, 3
      %p101 = por %p99, %p100
      %p102 = scmp.ne.s32.totalorder %s91, %s92
      %p103 = scmp.eq.s32.totalorder %s45, 0
      %p104 = por %p102, %p103
      %p105 = scmp.ne.s32.totalorder %s91, %s92
      %p106 = scmp.eq.s32.totalorder %s46, 3
      %p107 = por %p105, %p106
      %p109 = scmp.ne.s32.totalorder %s92, %s108
      %p110 = scmp.eq.s32.totalorder %s46, 0
      %p111 = por %p109, %p110
      %s112 = ssub.s32 %s48, %s55
      %p113 = scmp.eq.s32.totalorder %s112, 0
      %s115 = sadd.s32 %s114, 1
      %s116 = scalar_select %p113, %s114, %s115
      %p119 = pneg %p113
      %p120 = scmp.eq.s32.totalorder %s40, 3
      %p121 = por %p119, %p120
      %p122 = scmp.ne.s32.totalorder %s114, %s117
      %p123 = scmp.eq.s32.totalorder %s40, 0
      %p124 = por %p122, %p123
      %p125 = scmp.ne.s32.totalorder %s114, %s117
      %p126 = scmp.eq.s32.totalorder %s45, 3
      %p127 = por %p125, %p126
      %p128 = scmp.ne.s32.totalorder %s117, %s118
      %p129 = scmp.eq.s32.totalorder %s45, 0
      %p130 = por %p128, %p129
      %p131 = scmp.ne.s32.totalorder %s117, %s118
      %p132 = scmp.eq.s32.totalorder %s46, 3
      %p133 = por %p131, %p132
      %p135 = scmp.ne.s32.totalorder %s118, %s134
      %p136 = scmp.eq.s32.totalorder %s46, 0
      %p137 = por %p135, %p136
      %s138 = ssub.s32 %s48, %s55
      %p139 = scmp.eq.s32.totalorder %s138, 0
      %s141 = sadd.s32 %s140, 1
      %s142 = scalar_select %p139, %s140, %s141
      %p145 = pneg %p139
      %p146 = scmp.eq.s32.totalorder %s40, 3
      %p147 = por %p145, %p146
      %p148 = scmp.ne.s32.totalorder %s140, %s143
      %p149 = scmp.eq.s32.totalorder %s40, 0
      %p150 = por %p148, %p149
      %p151 = scmp.ne.s32.totalorder %s140, %s143
      %p152 = scmp.eq.s32.totalorder %s45, 3
      %p153 = por %p151, %p152
      %p154 = scmp.ne.s32.totalorder %s143, %s144
      %p155 = scmp.eq.s32.totalorder %s45, 0
      %p156 = por %p154, %p155
      %p157 = scmp.ne.s32.totalorder %s143, %s144
      %p158 = scmp.eq.s32.totalorder %s46, 3
      %p159 = por %p157, %p158
      %p161 = scmp.ne.s32.totalorder %s144, %s160
      %p162 = scmp.eq.s32.totalorder %s46, 0
      %p163 = por %p161, %p162
      %s164 = ssub.s32 %s48, %s55
      %p165 = scmp.eq.s32.totalorder %s164, 0
      %s167 = sadd.s32 %s166, 1
      %s168 = scalar_select %p165, %s166, %s167
      %p171 = pneg %p165
      %p172 = scmp.eq.s32.totalorder %s40, 3
      %p173 = por %p171, %p172
      %p174 = scmp.ne.s32.totalorder %s166, %s169
      %p175 = scmp.eq.s32.totalorder %s40, 0
      %p176 = por %p174, %p175
      %p177 = scmp.ne.s32.totalorder %s166, %s169
      %p178 = scmp.eq.s32.totalorder %s45, 3
      %p179 = por %p177, %p178
      %p180 = scmp.ne.s32.totalorder %s169, %s170
      %p181 = scmp.eq.s32.totalorder %s45, 0
      %p182 = por %p180, %p181
      %p183 = scmp.ne.s32.totalorder %s169, %s170
      %p184 = scmp.eq.s32.totalorder %s46, 3
      %p185 = por %p183, %p184
      %p187 = scmp.ne.s32.totalorder %s170, %s186
      %p188 = scmp.eq.s32.totalorder %s46, 0
      %p189 = por %p187, %p188
      %s190 = ssub.s32 %s48, %s55
      %p191 = scmp.eq.s32.totalorder %s190, 0
      %s193 = sadd.s32 %s192, 1
      %s194 = scalar_select %p191, %s192, %s193
      %p197 = pneg %p191
      %p198 = scmp.eq.s32.totalorder %s40, 3
      %p199 = por %p197, %p198
      %p200 = scmp.ne.s32.totalorder %s192, %s195
      %p201 = scmp.eq.s32.totalorder %s40, 0
      %p202 = por %p200, %p201
      %p203 = scmp.ne.s32.totalorder %s192, %s195
      %p204 = scmp.eq.s32.totalorder %s45, 3
      %p205 = por %p203, %p204
      %p206 = scmp.ne.s32.totalorder %s195, %s196
      %p207 = scmp.eq.s32.totalorder %s45, 0
      %p208 = por %p206, %p207
      %p209 = scmp.ne.s32.totalorder %s195, %s196
      %p210 = scmp.eq.s32.totalorder %s46, 3
      %p211 = por %p209, %p210
      %p213 = scmp.ne.s32.totalorder %s196, %s212
      %p214 = scmp.eq.s32.totalorder %s46, 0
      %p215 = por %p213, %p214
      %s216 = ssub.s32 %s48, %s55
      %p217 = scmp.eq.s32.totalorder %s216, 0
      %s219 = sadd.s32 %s218, 1
      %s220 = scalar_select %p217, %s218, %s219
      %p223 = pneg %p217
      %p224 = scmp.eq.s32.totalorder %s40, 3
      %p225 = por %p223, %p224
      %p226 = scmp.ne.s32.totalorder %s218, %s221
      %p227 = scmp.eq.s32.totalorder %s40, 0
      %p228 = por %p226, %p227
      %p229 = scmp.ne.s32.totalorder %s218, %s221
      %p230 = scmp.eq.s32.totalorder %s45, 3
      %p231 = por %p229, %p230
      %p232 = scmp.ne.s32.totalorder %s221, %s222
      %p233 = scmp.eq.s32.totalorder %s45, 0
      %p234 = por %p232, %p233
      %p235 = scmp.ne.s32.totalorder %s221, %s222
      %p236 = scmp.eq.s32.totalorder %s46, 3
      %p237 = por %p235, %p236
      %p239 = scmp.ne.s32.totalorder %s222, %s238
      %p240 = scmp.eq.s32.totalorder %s46, 0
      %p241 = por %p239, %p240
      %s242 = ssub.s32 %s48, %s55
      %p243 = scmp.eq.s32.totalorder %s242, 0
      %s245 = sadd.s32 %s244, 1
      %s246 = scalar_select %p243, %s244, %s245
      %p249 = pneg %p243
      %p250 = scmp.eq.s32.totalorder %s40, 3
      %p251 = por %p249, %p250
      %p252 = scmp.ne.s32.totalorder %s244, %s247
      %p253 = scmp.eq.s32.totalorder %s40, 0
      %p254 = por %p252, %p253
      %p255 = scmp.ne.s32.totalorder %s244, %s247
      %p256 = scmp.eq.s32.totalorder %s45, 3
      %p257 = por %p255, %p256
      %p258 = scmp.ne.s32.totalorder %s247, %s248
      %p259 = scmp.eq.s32.totalorder %s45, 0
      %p260 = por %p258, %p259
      %p261 = scmp.ne.s32.totalorder %s247, %s248
      %p262 = scmp.eq.s32.totalorder %s46, 3
      %p263 = por %p261, %p262
      %p265 = scmp.ne.s32.totalorder %s248, %s264
      %p266 = scmp.eq.s32.totalorder %s46, 0
      %p267 = por %p265, %p266
      %s268 = ssub.s32 %s48, %s55
      %p269 = scmp.eq.s32.totalorder %s268, 0
      %s271 = sadd.s32 %s270, 1
      %s272 = scalar_select %p269, %s270, %s271
      %p275 = pneg %p269
      %p276 = scmp.eq.s32.totalorder %s40, 3
      %p277 = por %p275, %p276
      %p278 = scmp.ne.s32.totalorder %s270, %s273
      %p279 = scmp.eq.s32.totalorder %s40, 0
      %p280 = por %p278, %p279
      %p281 = scmp.ne.s32.totalorder %s270, %s273
      %p282 = scmp.eq.s32.totalorder %s45, 3
      %p283 = por %p281, %p282
      %p284 = scmp.ne.s32.totalorder %s273, %s274
      %p285 = scmp.eq.s32.totalorder %s45, 0
      %p286 = por %p284, %p285
      %p287 = scmp.ne.s32.totalorder %s273, %s274
      %p288 = scmp.eq.s32.totalorder %s46, 3
      %p289 = por %p287, %p288
      %p291 = scmp.ne.s32.totalorder %s274, %s290
      %p292 = scmp.eq.s32.totalorder %s46, 0
      %p293 = por %p291, %p292
      %s294 = ssub.s32 %s48, %s55
      %p295 = scmp.eq.s32.totalorder %s294, 0
      %s297 = sadd.s32 %s296, 1
      %s298 = scalar_select %p295, %s296, %s297
      %p301 = pneg %p295
      %p302 = scmp.eq.s32.totalorder %s40, 3
      %p303 = por %p301, %p302
      %p304 = scmp.ne.s32.totalorder %s296, %s299
      %p305 = scmp.eq.s32.totalorder %s40, 0
      %p306 = por %p304, %p305
      %p307 = scmp.ne.s32.totalorder %s296, %s299
      %p308 = scmp.eq.s32.totalorder %s45, 3
      %p309 = por %p307, %p308
      %p310 = scmp.ne.s32.totalorder %s299, %s300
      %p311 = scmp.eq.s32.totalorder %s45, 0
      %p312 = por %p310, %p311
      %p313 = scmp.ne.s32.totalorder %s299, %s300
      %p314 = scmp.eq.s32.totalorder %s46, 3
      %p315 = por %p313, %p314
      %p317 = scmp.ne.s32.totalorder %s300, %s316
      %p318 = scmp.eq.s32.totalorder %s46, 0
      %p319 = por %p317, %p318
      %s320 = ssub.s32 %s48, %s55
      %p321 = scmp.eq.s32.totalorder %s320, 0
      %s323 = sadd.s32 %s322, 1
      %s324 = scalar_select %p321, %s322, %s323
      %p327 = pneg %p321
      %p328 = scmp.eq.s32.totalorder %s40, 3
      %p329 = por %p327, %p328
      %p330 = scmp.ne.s32.totalorder %s322, %s325
      %p331 = scmp.eq.s32.totalorder %s40, 0
      %p332 = por %p330, %p331
      %p333 = scmp.ne.s32.totalorder %s322, %s325
      %p334 = scmp.eq.s32.totalorder %s45, 3
      %p335 = por %p333, %p334
      %p336 = scmp.ne.s32.totalorder %s325, %s326
      %p337 = scmp.eq.s32.totalorder %s45, 0
      %p338 = por %p336, %p337
      %p339 = scmp.ne.s32.totalorder %s325, %s326
      %p340 = scmp.eq.s32.totalorder %s46, 3
      %p341 = por %p339, %p340
      %p343 = scmp.ne.s32.totalorder %s326, %s342
      %p344 = scmp.eq.s32.totalorder %s46, 0
      %p345 = por %p343, %p344
      %s346 = ssub.s32 %s48, %s55
      %p347 = scmp.eq.s32.totalorder %s346, 0
      %s349 = sadd.s32 %s348, 1
      %s350 = scalar_select %p347, %s348, %s349
      %p353 = pneg %p347
      %p354 = scmp.eq.s32.totalorder %s40, 3
      %p355 = por %p353, %p354
      %p356 = scmp.ne.s32.totalorder %s348, %s351
      %p357 = scmp.eq.s32.totalorder %s40, 0
      %p358 = por %p356, %p357
      %p359 = scmp.ne.s32.totalorder %s348, %s351
      %p360 = scmp.eq.s32.totalorder %s45, 3
      %p361 = por %p359, %p360
      %p362 = scmp.ne.s32.totalorder %s351, %s352
      %p363 = scmp.eq.s32.totalorder %s45, 0
      %p364 = por %p362, %p363
      %p365 = scmp.ne.s32.totalorder %s351, %s352
      %p366 = scmp.eq.s32.totalorder %s46, 3
      %p367 = por %p365, %p366
      %p369 = scmp.ne.s32.totalorder %s352, %s368
      %p370 = scmp.eq.s32.totalorder %s46, 0
      %p371 = por %p369, %p370
      %s372 = ssub.s32 %s48, %s55
      %p373 = scmp.eq.s32.totalorder %s372, 0
      %s375 = sadd.s32 %s374, 1
      %s376 = scalar_select %p373, %s374, %s375
      %p379 = pneg %p373
      %p380 = scmp.eq.s32.totalorder %s40, 3
      %p381 = por %p379, %p380
      %p382 = scmp.ne.s32.totalorder %s374, %s377
      %p383 = scmp.eq.s32.totalorder %s40, 0
      %p384 = por %p382, %p383
      %p385 = scmp.ne.s32.totalorder %s374, %s377
      %p386 = scmp.eq.s32.totalorder %s45, 3
      %p387 = por %p385, %p386
      %p388 = scmp.ne.s32.totalorder %s377, %s378
      %p389 = scmp.eq.s32.totalorder %s45, 0
      %p390 = por %p388, %p389
      %p391 = scmp.ne.s32.totalorder %s377, %s378
      %p392 = scmp.eq.s32.totalorder %s46, 3
      %p393 = por %p391, %p392
      %p395 = scmp.ne.s32.totalorder %s378, %s394
      %p396 = scmp.eq.s32.totalorder %s46, 0
      %p397 = por %p395, %p396
      %s398 = ssub.s32 %s48, %s55
      %p399 = scmp.eq.s32.totalorder %s398, 0
      %s401 = sadd.s32 %s400, 1
      %s402 = scalar_select %p399, %s400, %s401
      %p405 = pneg %p399
      %p406 = scmp.eq.s32.totalorder %s40, 3
      %p407 = por %p405, %p406
      %p408 = scmp.ne.s32.totalorder %s400, %s403
      %p409 = scmp.eq.s32.totalorder %s40, 0
      %p410 = por %p408, %p409
      %p411 = scmp.ne.s32.totalorder %s400, %s403
      %p412 = scmp.eq.s32.totalorder %s45, 3
      %p413 = por %p411, %p412
      %p414 = scmp.ne.s32.totalorder %s403, %s404
      %p415 = scmp.eq.s32.totalorder %s45, 0
      %p416 = por %p414, %p415
      %p417 = scmp.ne.s32.totalorder %s403, %s404
      %p418 = scmp.eq.s32.totalorder %s46, 3
      %p419 = por %p417, %p418
      %p421 = scmp.ne.s32.totalorder %s404, %s420
      %p422 = scmp.eq.s32.totalorder %s46, 0
      %p423 = por %p421, %p422
      %s425 = sadd.s32 %s424, 1
      %p428 = scmp.eq.s32.totalorder %s40, 3
      %p429 = scmp.ne.s32.totalorder %s424, %s426
      %p430 = scmp.eq.s32.totalorder %s40, 0
      %p431 = por %p429, %p430
      %p432 = scmp.ne.s32.totalorder %s424, %s426
      %p433 = scmp.eq.s32.totalorder %s45, 3
      %p434 = por %p432, %p433
      %p435 = scmp.ne.s32.totalorder %s426, %s427
      %p436 = scmp.eq.s32.totalorder %s45, 0
      %p437 = por %p435, %p436
      %p438 = scmp.ne.s32.totalorder %s426, %s427
      %p439 = scmp.eq.s32.totalorder %s46, 3
      %p440 = por %p438, %p439
      %p442 = scmp.ne.s32.totalorder %s427, %s441
      %p443 = scmp.eq.s32.totalorder %s46, 0
      %p444 = por %p442, %p443
      %s446 = sadd.s32 %s445, 1
      %p449 = scmp.eq.s32.totalorder %s40, 3
      %p450 = scmp.ne.s32.totalorder %s445, %s447
      %p451 = scmp.eq.s32.totalorder %s40, 0
      %p452 = por %p450, %p451
      %p453 = scmp.ne.s32.totalorder %s445, %s447
      %p454 = scmp.eq.s32.totalorder %s45, 3
      %p455 = por %p453, %p454
      %p456 = scmp.ne.s32.totalorder %s447, %s448
      %p457 = scmp.eq.s32.totalorder %s45, 0
      %p458 = por %p456, %p457
      %p459 = scmp.ne.s32.totalorder %s447, %s448
      %p460 = scmp.eq.s32.totalorder %s46, 3
      %p461 = por %p459, %p460
      %p463 = scmp.ne.s32.totalorder %s448, %s462
      %p464 = scmp.eq.s32.totalorder %s46, 0
      %p465 = por %p463, %p464
      %s466 = ssub.s32 %s47, %s59
      %p467 = scmp.eq.s32.totalorder %s466, 0
      %s469 = sadd.s32 %s468, 1
      %s470 = scalar_select %p467, %s468, %s469
      %p473 = pneg %p467
      %p474 = scmp.eq.s32.totalorder %s40, 3
      %p475 = por %p473, %p474
      %p476 = scmp.ne.s32.totalorder %s468, %s471
      %p477 = scmp.eq.s32.totalorder %s40, 0
      %p478 = por %p476, %p477
      %p479 = scmp.ne.s32.totalorder %s468, %s471
      %p480 = scmp.eq.s32.totalorder %s45, 3
      %p481 = por %p479, %p480
      %p482 = scmp.ne.s32.totalorder %s471, %s472
      %p483 = scmp.eq.s32.totalorder %s45, 0
      %p484 = por %p482, %p483
      %p485 = scmp.ne.s32.totalorder %s471, %s472
      %p486 = scmp.eq.s32.totalorder %s46, 3
      %p487 = por %p485, %p486
      %p489 = scmp.ne.s32.totalorder %s472, %s488
      %p490 = scmp.eq.s32.totalorder %s46, 0
      %p491 = por %p489, %p490
      %p492 = scmp.le.s32.totalorder 1, %s40
      %p493 = scmp.lt.s32.totalorder %s40, 5
      %p494 = pnand %p492, %p493
      %p495 = pneg %p494
      // Predicated region
      $region9: #{encoder_forward.1} parent=5 // pred_check
        _
      $region10: #{encoder_forward.1} parent=5 // pred_check_branch
        %497 = sbr.rel (%p494) target = $region12
      $region11: #{encoder_forward.1} parent=5 // pred_region
        %s498 = ssub.s32 %s40, 1
        // Predicated region
        $region13: #{encoder_forward.1} parent=11 // pred_check
          %p499 = pneg %p437
        $region14: #{encoder_forward.1} parent=11 // pred_check_branch
          %501 = sbr.rel (%p499) target = $region16
        $region15: #{encoder_forward.1} parent=11 // pred_region
          _
        $region16: #{encoder_forward.1} parent=11 // pred_fallthru
          _
        // Predicated region
        $region17: #{encoder_forward.1} parent=11 // pred_check
          %p502 = pneg %p458
        $region18: #{encoder_forward.1} parent=11 // pred_check_branch
          %504 = sbr.rel (%p502) target = $region20
        $region19: #{encoder_forward.1} parent=11 // pred_region
          _
        $region20: #{encoder_forward.1} parent=11 // pred_fallthru
          _
      $region12: #{encoder_forward.1} parent=5 // pred_fallthru
        _
      %p505 = scmp.lt.s32.totalorder %s40, 4
      // Predicated region
      $region21: #{encoder_forward.1} parent=5 // pred_check
        %p506 = pneg %p505
      $region22: #{encoder_forward.1} parent=5 // pred_check_branch
        %508 = sbr.rel (%p506) target = $region24
      $region23: #{encoder_forward.1} parent=5 // pred_region
        // Predicated region
        $region25: #{encoder_forward.1} parent=23 // pred_check
          %p509 = pneg %p72
        $region26: #{encoder_forward.1} parent=23 // pred_check_branch
          %511 = sbr.rel (%p509) target = $region28
        $region27: #{encoder_forward.1} parent=23 // pred_region
          %s512 = sand.u32 %s62, 1
          %s513 = scalar_lea.sflag [#allocation4], %s512
          %s514 = sand.u32 %s62, 1
          %s515 = smul.addr %s514, 128
          %s516 = scalar_lea.vmem [#allocation3], %s515
          %s518 = ssub.s32 2048, 2048
          %519 = vsyncadd %s513, %s518
          %s520 = smul.addr %s47, 16
          %s521 = smul.addr %s520, 128
          %s522 = scalar_lea.hbm %s0, %s521
          %s523 = sshll.u32 %s516, 4
          %s524 = int_to_ptr.vmem [resolvable:$true] %s523
          %529 = dma.hbm_to_vmem [thread:$0]  %s522, 2048, %s524, %s513, 128, 128, 8
        $region28: #{encoder_forward.1} parent=23 // pred_fallthru
          _
        // Predicated region
        $region29: #{encoder_forward.1} parent=23 // pred_check
          %p530 = pneg %p98
        $region30: #{encoder_forward.1} parent=23 // pred_check_branch
          %532 = sbr.rel (%p530) target = $region32
        $region31: #{encoder_forward.1} parent=23 // pred_region
          %s533 = sand.u32 %s40, 1
          %s534 = scalar_lea.sflag [#allocation7], %s533
          %s535 = sand.u32 %s88, 1
          %s536 = smul.addr %s535, 128
          %s537 = scalar_lea.vmem [#allocation6], %s536
          %s539 = ssub.s32 2048, 2048
          %540 = vsyncadd %s534, %s539
          %s541 = smul.addr %s47, 16
          %s542 = smul.addr %s541, 128
          %s543 = scalar_lea.hbm %s1, %s542
          %s544 = sshll.u32 %s537, 4
          %s545 = int_to_ptr.vmem [resolvable:$true] %s544
          %550 = dma.hbm_to_vmem [thread:$0]  %s543, 2048, %s545, %s534, 128, 128, 8
        $region32: #{encoder_forward.1} parent=23 // pred_fallthru
          _
        // Predicated region
        $region33: #{encoder_forward.1} parent=23 // pred_check
          %p551 = pneg %p124
        $region34: #{encoder_forward.1} parent=23 // pred_check_branch
          %553 = sbr.rel (%p551) target = $region36
        $region35: #{encoder_forward.1} parent=23 // pred_region
          %p554 = scmp.lt.s32.totalorder %s48, 1
          %s555 = scalar_select %p554, %s48, 1
          %s556 = scalar_lea.vmem %s2, %s555
        $region36: #{encoder_forward.1} parent=23 // pred_fallthru
          _
        // Predicated region
        $region37: #{encoder_forward.1} parent=23 // pred_check
          %p557 = pneg %p150
        $region38: #{encoder_forward.1} parent=23 // pred_check_branch
          %559 = sbr.rel (%p557) target = $region40
        $region39: #{encoder_forward.1} parent=23 // pred_region
          %p560 = scmp.lt.s32.totalorder %s48, 1
          %s561 = scalar_select %p560, %s48, 1
          %s562 = scalar_lea.vmem %s3, %s561
        $region40: #{encoder_forward.1} parent=23 // pred_fallthru
          _
        // Predicated region
        $region41: #{encoder_forward.1} parent=23 // pred_check
          %p563 = pneg %p176
        $region42: #{encoder_forward.1} parent=23 // pred_check_branch
          %565 = sbr.rel (%p563) target = $region44
        $region43: #{encoder_forward.1} parent=23 // pred_region
          %s566 = sand.u32 %s40, 1
          %s567 = scalar_lea.sflag [#allocation7], %s566
          %s568 = sand.u32 %s166, 1
          %s569 = smul.addr %s568, 192
          %s570 = scalar_lea.vmem [#allocation8], %s569
          %s572 = ssub.s32 3072, 3072
          %573 = vsyncadd %s567, %s572
          %s574 = smul.addr %s48, 48
          %s575 = smul.addr %s574, 64
          %s576 = scalar_lea.hbm %s4, %s575
          %s577 = sshll.u32 %s570, 4
          %s578 = int_to_ptr.vmem [resolvable:$true] %s577
          %583 = dma.hbm_to_vmem [thread:$0]  %s576, 3072, %s578, %s567, 192, 192, 12
        $region44: #{encoder_forward.1} parent=23 // pred_fallthru
          _
        // Predicated region
        $region45: #{encoder_forward.1} parent=23 // pred_check
          %p584 = pneg %p202
        $region46: #{encoder_forward.1} parent=23 // pred_check_branch
          %586 = sbr.rel (%p584) target = $region48
        $region47: #{encoder_forward.1} parent=23 // pred_region
          %p587 = scmp.lt.s32.totalorder %s48, 1
          %s588 = scalar_select %p587, %s48, 1
          %s589 = smul.addr %s588, 3
          %s590 = scalar_lea.vmem %s5, %s589
        $region48: #{encoder_forward.1} parent=23 // pred_fallthru
          _
        // Predicated region
        $region49: #{encoder_forward.1} parent=23 // pred_check
          %p591 = pneg %p228
        $region50: #{encoder_forward.1} parent=23 // pred_check_branch
          %593 = sbr.rel (%p591) target = $region52
        $region51: #{encoder_forward.1} parent=23 // pred_region
          %s594 = sand.u32 %s40, 1
          %s595 = scalar_lea.sflag [#allocation10], %s594
          %s596 = sand.u32 %s218, 1
          %s597 = smul.addr %s596, 64
          %s598 = scalar_lea.vmem [#allocation9], %s597
          %s600 = ssub.s32 1024, 1024
          %601 = vsyncadd %s595, %s600
          %s602 = smul.addr %s48, 16
          %s603 = smul.addr %s602, 64
          %s604 = scalar_lea.hbm %s6, %s603
          %s605 = sshll.u32 %s598, 4
          %s606 = int_to_ptr.vmem [resolvable:$true] %s605
          %611 = dma.hbm_to_vmem [thread:$0]  %s604, 1024, %s606, %s595, 64, 64, 4
        $region52: #{encoder_forward.1} parent=23 // pred_fallthru
          _
        // Predicated region
        $region53: #{encoder_forward.1} parent=23 // pred_check
          %p612 = pneg %p254
        $region54: #{encoder_forward.1} parent=23 // pred_check_branch
          %614 = sbr.rel (%p612) target = $region56
        $region55: #{encoder_forward.1} parent=23 // pred_region
          %s615 = sand.u32 %s40, 1
          %s616 = scalar_lea.sflag [#allocation10], %s615
          %s617 = sand.u32 %s244, 1
          %s618 = scalar_lea.vmem [#allocation11], %s617
          %s620 = ssub.s32 16, 16
          %621 = vsyncadd %s616, %s620
          %s622 = smul.addr %s48, 16
          %s623 = scalar_lea.hbm %s7, %s622
          %s625 = sshll.u32 %s618, 4
          %s626 = int_to_ptr.vmem [resolvable:$true] %s625
          %628 = dma.hbm_to_vmem [thread:$0]  %s623, 16, %s626, %s616
        $region56: #{encoder_forward.1} parent=23 // pred_fallthru
          _
        // Predicated region
        $region57: #{encoder_forward.1} parent=23 // pred_check
          %p629 = pneg %p280
        $region58: #{encoder_forward.1} parent=23 // pred_check_branch
          %631 = sbr.rel (%p629) target = $region60
        $region59: #{encoder_forward.1} parent=23 // pred_region
          %p632 = scmp.lt.s32.totalorder %s48, 1
          %s633 = scalar_select %p632, %s48, 1
          %s634 = scalar_lea.vmem %s8, %s633
        $region60: #{encoder_forward.1} parent=23 // pred_fallthru
          _
        // Predicated region
        $region61: #{encoder_forward.1} parent=23 // pred_check
          %p635 = pneg %p306
        $region62: #{encoder_forward.1} parent=23 // pred_check_branch
          %637 = sbr.rel (%p635) target = $region64
        $region63: #{encoder_forward.1} parent=23 // pred_region
          %p638 = scmp.lt.s32.totalorder %s48, 1
          %s639 = scalar_select %p638, %s48, 1
          %s640 = scalar_lea.vmem %s9, %s639
        $region64: #{encoder_forward.1} parent=23 // pred_fallthru
          _
        // Predicated region
        $region65: #{encoder_forward.1} parent=23 // pred_check
          %p641 = pneg %p332
        $region66: #{encoder_forward.1} parent=23 // pred_check_branch
          %643 = sbr.rel (%p641) target = $region68
        $region67: #{encoder_forward.1} parent=23 // pred_region
          %s644 = sand.u32 %s40, 1
          %s645 = scalar_lea.sflag [#allocation13], %s644
          %s646 = sand.u32 %s322, 1
          %s647 = smul.addr %s646, 128
          %s648 = scalar_lea.vmem [#allocation12], %s647
          %s650 = ssub.s32 2048, 2048
          %651 = vsyncadd %s645, %s650
          %s652 = smul.addr %s48, 32
          %s653 = smul.addr %s652, 64
          %s654 = scalar_lea.hbm %s10, %s653
          %s655 = sshll.u32 %s648, 4
          %s656 = int_to_ptr.vmem [resolvable:$true] %s655
          %661 = dma.hbm_to_vmem [thread:$0]  %s654, 2048, %s656, %s645, 128, 128, 8
        $region68: #{encoder_forward.1} parent=23 // pred_fallthru
          _
        // Predicated region
        $region69: #{encoder_forward.1} parent=23 // pred_check
          %p662 = pneg %p358
        $region70: #{encoder_forward.1} parent=23 // pred_check_branch
          %664 = sbr.rel (%p662) target = $region72
        $region71: #{encoder_forward.1} parent=23 // pred_region
          %p665 = scmp.lt.s32.totalorder %s48, 1
          %s666 = scalar_select %p665, %s48, 1
          %s667 = smul.addr %s666, 2
          %s668 = scalar_lea.vmem %s11, %s667
        $region72: #{encoder_forward.1} parent=23 // pred_fallthru
          _
        // Predicated region
        $region73: #{encoder_forward.1} parent=23 // pred_check
          %p669 = pneg %p384
        $region74: #{encoder_forward.1} parent=23 // pred_check_branch
          %671 = sbr.rel (%p669) target = $region76
        $region75: #{encoder_forward.1} parent=23 // pred_region
          %s672 = sand.u32 %s40, 1
          %s673 = scalar_lea.sflag [#allocation13], %s672
          %s674 = sand.u32 %s374, 1
          %s675 = smul.addr %s674, 128
          %s676 = scalar_lea.vmem [#allocation14], %s675
          %s678 = ssub.s32 2048, 2048
          %679 = vsyncadd %s673, %s678
          %s680 = smul.addr %s48, 32
          %s681 = smul.addr %s680, 64
          %s682 = scalar_lea.hbm %s12, %s681
          %s683 = sshll.u32 %s676, 4
          %s684 = int_to_ptr.vmem [resolvable:$true] %s683
          %689 = dma.hbm_to_vmem [thread:$0]  %s682, 2048, %s684, %s673, 64, 64, 4
        $region76: #{encoder_forward.1} parent=23 // pred_fallthru
          _
        // Predicated region
        $region77: #{encoder_forward.1} parent=23 // pred_check
          %p690 = pneg %p410
        $region78: #{encoder_forward.1} parent=23 // pred_check_branch
          %692 = sbr.rel (%p690) target = $region80
        $region79: #{encoder_forward.1} parent=23 // pred_region
          %s693 = sand.u32 %s400, 1
          %s694 = scalar_lea.sflag [#allocation16], %s693
          %s695 = sand.u32 %s400, 1
          %s696 = scalar_lea.vmem [#allocation15], %s695
          %s698 = ssub.s32 16, 16
          %699 = vsyncadd %s694, %s698
          %s700 = smul.addr %s48, 16
          %s701 = scalar_lea.hbm %s13, %s700
          %s703 = sshll.u32 %s696, 4
          %s704 = int_to_ptr.vmem [resolvable:$true] %s703
          %706 = dma.hbm_to_vmem [thread:$0]  %s701, 16, %s704, %s694
        $region80: #{encoder_forward.1} parent=23 // pred_fallthru
          _
      $region24: #{encoder_forward.1} parent=5 // pred_fallthru
        _
      %p707 = scmp.le.s32.totalorder 1, %s40
      %p708 = scmp.lt.s32.totalorder %s40, 5
      %p709 = pnand %p707, %p708
      %p710 = pneg %p709
      // Predicated region
      $region81: #{encoder_forward.1} parent=5 // pred_check
        _
      $region82: #{encoder_forward.1} parent=5 // pred_check_branch
        %712 = sbr.rel (%p709) target = $region84
      $region83: #{encoder_forward.1} parent=5 // pred_region
        %s713 = ssub.s32 %s40, 1
        %s714 = sand.u32 %s65, 1
        %s715 = scalar_lea.sflag [#allocation4], %s714
        %s716 = sand.u32 %s65, 1
        %s717 = smul.addr %s716, 128
        %s718 = scalar_lea.vmem [#allocation3], %s717
        // Predicated region
        $region85: #{encoder_forward.1} parent=83 // pred_check
          %p719 = pneg %p78
        $region86: #{encoder_forward.1} parent=83 // pred_check_branch
          %721 = sbr.rel (%p719) target = $region88
        $region87: #{encoder_forward.1} parent=83 // pred_region
          %722 = dma.done %s715, 2048
        $region88: #{encoder_forward.1} parent=83 // pred_fallthru
          _
        %s723 = sand.u32 %s45, 1
        %s724 = scalar_lea.sflag [#allocation7], %s723
        %s725 = sand.u32 %s91, 1
        %s726 = smul.addr %s725, 128
        %s727 = scalar_lea.vmem [#allocation6], %s726
        // Predicated region
        $region89: #{encoder_forward.1} parent=83 // pred_check
          %p728 = pneg %p104
        $region90: #{encoder_forward.1} parent=83 // pred_check_branch
          %730 = sbr.rel (%p728) target = $region92
        $region91: #{encoder_forward.1} parent=83 // pred_region
          %731 = dma.done %s724, 2048
        $region92: #{encoder_forward.1} parent=83 // pred_fallthru
          _
        %s732 = sand.u32 %s45, 1
        %s733 = scalar_lea.sflag [#allocation7], %s732
        %s734 = sand.u32 %s169, 1
        %s735 = smul.addr %s734, 192
        %s736 = scalar_lea.vmem [#allocation8], %s735
        // Predicated region
        $region93: #{encoder_forward.1} parent=83 // pred_check
          %p737 = pneg %p182
        $region94: #{encoder_forward.1} parent=83 // pred_check_branch
          %739 = sbr.rel (%p737) target = $region96
        $region95: #{encoder_forward.1} parent=83 // pred_region
          %740 = dma.done %s733, 3072
        $region96: #{encoder_forward.1} parent=83 // pred_fallthru
          _
        %s741 = sand.u32 %s45, 1
        %s742 = scalar_lea.sflag [#allocation10], %s741
        %s743 = sand.u32 %s221, 1
        %s744 = smul.addr %s743, 64
        %s745 = scalar_lea.vmem [#allocation9], %s744
        // Predicated region
        $region97: #{encoder_forward.1} parent=83 // pred_check
          %p746 = pneg %p234
        $region98: #{encoder_forward.1} parent=83 // pred_check_branch
          %748 = sbr.rel (%p746) target = $region100
        $region99: #{encoder_forward.1} parent=83 // pred_region
          %749 = dma.done %s742, 1024
        $region100: #{encoder_forward.1} parent=83 // pred_fallthru
          _
        %s750 = sand.u32 %s45, 1
        %s751 = scalar_lea.sflag [#allocation10], %s750
        %s752 = sand.u32 %s247, 1
        %s753 = scalar_lea.vmem [#allocation11], %s752
        // Predicated region
        $region101: #{encoder_forward.1} parent=83 // pred_check
          %p754 = pneg %p260
        $region102: #{encoder_forward.1} parent=83 // pred_check_branch
          %756 = sbr.rel (%p754) target = $region104
        $region103: #{encoder_forward.1} parent=83 // pred_region
          %757 = dma.done %s751, 16
        $region104: #{encoder_forward.1} parent=83 // pred_fallthru
          _
        %s758 = sand.u32 %s45, 1
        %s759 = scalar_lea.sflag [#allocation13], %s758
        %s760 = sand.u32 %s325, 1
        %s761 = smul.addr %s760, 128
        %s762 = scalar_lea.vmem [#allocation12], %s761
        // Predicated region
        $region105: #{encoder_forward.1} parent=83 // pred_check
          %p763 = pneg %p338
        $region106: #{encoder_forward.1} parent=83 // pred_check_branch
          %765 = sbr.rel (%p763) target = $region108
        $region107: #{encoder_forward.1} parent=83 // pred_region
          %766 = dma.done %s759, 2048
        $region108: #{encoder_forward.1} parent=83 // pred_fallthru
          _
        %s767 = sand.u32 %s45, 1
        %s768 = scalar_lea.sflag [#allocation13], %s767
        %s769 = sand.u32 %s377, 1
        %s770 = smul.addr %s769, 128
        %s771 = scalar_lea.vmem [#allocation14], %s770
        // Predicated region
        $region109: #{encoder_forward.1} parent=83 // pred_check
          %p772 = pneg %p390
        $region110: #{encoder_forward.1} parent=83 // pred_check_branch
          %774 = sbr.rel (%p772) target = $region112
        $region111: #{encoder_forward.1} parent=83 // pred_region
          %775 = dma.done %s768, 2048
        $region112: #{encoder_forward.1} parent=83 // pred_fallthru
          _
        %s776 = sand.u32 %s403, 1
        %s777 = scalar_lea.sflag [#allocation16], %s776
        %s778 = sand.u32 %s403, 1
        %s779 = scalar_lea.vmem [#allocation15], %s778
        // Predicated region
        $region113: #{encoder_forward.1} parent=83 // pred_check
          %p780 = pneg %p416
        $region114: #{encoder_forward.1} parent=83 // pred_check_branch
          %782 = sbr.rel (%p780) target = $region116
        $region115: #{encoder_forward.1} parent=83 // pred_region
          %783 = dma.done %s777, 16
        $region116: #{encoder_forward.1} parent=83 // pred_fallthru
          _
        %s784 = sand.u32 %s65, 1
        %s785 = scalar_lea.sflag [#allocation4], %s784
        %s786 = sand.u32 %s65, 1
        %s787 = smul.addr %s786, 128
        %s788 = scalar_lea.vmem [#allocation3], %s787
        %p789 = pneg %p78
        %p790 = pneg %p75
        %s791 = sand.u32 %s45, 1
        %s792 = scalar_lea.sflag [#allocation7], %s791
        %s793 = sand.u32 %s91, 1
        %s794 = smul.addr %s793, 128
        %s795 = scalar_lea.vmem [#allocation6], %s794
        %p796 = pneg %p104
        %p797 = pneg %p101
        %p798 = scmp.lt.s32.totalorder %s50, 1
        %s799 = scalar_select %p798, %s50, 1
        %s800 = scalar_lea.vmem %s2, %s799
        %p801 = pneg %p130
        %p802 = pneg %p127
        %p803 = scmp.lt.s32.totalorder %s50, 1
        %s804 = scalar_select %p803, %s50, 1
        %s805 = scalar_lea.vmem %s3, %s804
        %p806 = pneg %p156
        %p807 = pneg %p153
        %s808 = sand.u32 %s45, 1
        %s809 = scalar_lea.sflag [#allocation7], %s808
        %s810 = sand.u32 %s169, 1
        %s811 = smul.addr %s810, 192
        %s812 = scalar_lea.vmem [#allocation8], %s811
        %p813 = pneg %p182
        %p814 = pneg %p179
        %p815 = scmp.lt.s32.totalorder %s50, 1
        %s816 = scalar_select %p815, %s50, 1
        %s817 = smul.addr %s816, 3
        %s818 = scalar_lea.vmem %s5, %s817
        %p819 = pneg %p208
        %p820 = pneg %p205
        %s821 = sand.u32 %s45, 1
        %s822 = scalar_lea.sflag [#allocation10], %s821
        %s823 = sand.u32 %s221, 1
        %s824 = smul.addr %s823, 64
        %s825 = scalar_lea.vmem [#allocation9], %s824
        %p826 = pneg %p234
        %p827 = pneg %p231
        %s828 = sand.u32 %s45, 1
        %s829 = scalar_lea.sflag [#allocation10], %s828
        %s830 = sand.u32 %s247, 1
        %s831 = scalar_lea.vmem [#allocation11], %s830
        %p832 = pneg %p260
        %p833 = pneg %p257
        %p834 = scmp.lt.s32.totalorder %s50, 1
        %s835 = scalar_select %p834, %s50, 1
        %s836 = scalar_lea.vmem %s8, %s835
        %p837 = pneg %p286
        %p838 = pneg %p283
        %p839 = scmp.lt.s32.totalorder %s50, 1
        %s840 = scalar_select %p839, %s50, 1
        %s841 = scalar_lea.vmem %s9, %s840
        %p842 = pneg %p312
        %p843 = pneg %p309
        %s844 = sand.u32 %s45, 1
        %s845 = scalar_lea.sflag [#allocation13], %s844
        %s846 = sand.u32 %s325, 1
        %s847 = smul.addr %s846, 128
        %s848 = scalar_lea.vmem [#allocation12], %s847
        %p849 = pneg %p338
        %p850 = pneg %p335
        %p851 = scmp.lt.s32.totalorder %s50, 1
        %s852 = scalar_select %p851, %s50, 1
        %s853 = smul.addr %s852, 2
        %s854 = scalar_lea.vmem %s11, %s853
        %p855 = pneg %p364
        %p856 = pneg %p361
        %s857 = sand.u32 %s45, 1
        %s858 = scalar_lea.sflag [#allocation13], %s857
        %s859 = sand.u32 %s377, 1
        %s860 = smul.addr %s859, 128
        %s861 = scalar_lea.vmem [#allocation14], %s860
        %p862 = pneg %p390
        %p863 = pneg %p387
        %s864 = sand.u32 %s403, 1
        %s865 = scalar_lea.sflag [#allocation16], %s864
        %s866 = sand.u32 %s403, 1
        %s867 = scalar_lea.vmem [#allocation15], %s866
        %p868 = pneg %p416
        %p869 = pneg %p413
        %p870 = pneg %p437
        %p871 = pneg %p434
        %p872 = pneg %p458
        %p873 = pneg %p455
        %p874 = pneg %p484
        %p875 = pneg %p481
        %s876 = sand.u32 %s471, 1
        %s877 = scalar_lea.sflag [#allocation5], %s876
        %s878 = sand.u32 %s471, 1
        %s879 = smul.addr %s878, 128
        %s880 = scalar_lea.vmem [#allocation17], %s879
        %p881 = scmp.lt.s32.totalorder %s50, 1
        %s882 = scalar_select %p881, %s50, 1
        %s883 = scalar_lea.vmem %s2, %s882
        %p884 = scmp.lt.s32.totalorder %s50, 1
        %s885 = scalar_select %p884, %s50, 1
        %s886 = scalar_lea.vmem %s3, %s885
        %p887 = scmp.lt.s32.totalorder %s50, 1
        %s888 = scalar_select %p887, %s50, 1
        %s889 = smul.addr %s888, 3
        %s890 = scalar_lea.vmem %s5, %s889
        %p891 = scmp.lt.s32.totalorder %s50, 1
        %s892 = scalar_select %p891, %s50, 1
        %s893 = scalar_lea.vmem %s8, %s892
        %p894 = scmp.lt.s32.totalorder %s50, 1
        %s895 = scalar_select %p894, %s50, 1
        %s896 = scalar_lea.vmem %s9, %s895
        %p897 = scmp.lt.s32.totalorder %s50, 1
        %s898 = scalar_select %p897, %s50, 1
        %s899 = smul.addr %s898, 2
        %s900 = scalar_lea.vmem %s11, %s899
        %p902 = scmp.eq.s32.totalorder %s50, 0
        // Predicated region
        $region117: #{encoder_forward.1} parent=83 // pred_check
          %p903 = pneg %p902
        $region118: #{encoder_forward.1} parent=83 // pred_check_branch
          %905 = sbr.rel (%p903) target = $region120
        $region119: #{encoder_forward.1} parent=83 // pred_region
          %v906 = vld [vmem:[%s718] sm:$0xff]
          %v907 = vld [vmem:[%s718 + $0x8] sm:$0xff]
          %v908 = vld [vmem:[%s718 + $0x10] sm:$0xff]
          %v909 = vld [vmem:[%s718 + $0x18] sm:$0xff]
          %v910 = vld [vmem:[%s718 + $0x20] sm:$0xff]
          %v911 = vld [vmem:[%s718 + $0x28] sm:$0xff]
          %v912 = vld [vmem:[%s718 + $0x30] sm:$0xff]
          %v913 = vld [vmem:[%s718 + $0x38] sm:$0xff]
          %v914 = vld [vmem:[%s718 + $0x40] sm:$0xff]
          %v915 = vld [vmem:[%s718 + $0x48] sm:$0xff]
          %v916 = vld [vmem:[%s718 + $0x50] sm:$0xff]
          %v917 = vld [vmem:[%s718 + $0x58] sm:$0xff]
          %v918 = vld [vmem:[%s718 + $0x60] sm:$0xff]
          %v919 = vld [vmem:[%s718 + $0x68] sm:$0xff]
          %v920 = vld [vmem:[%s718 + $0x70] sm:$0xff]
          %v921 = vld [vmem:[%s718 + $0x78] sm:$0xff]
          %922 = vst [vmem:[#allocation2] sm:$0xff] %v906
          %923 = vst [vmem:[#allocation2 + $0x8] sm:$0xff] %v907
          %924 = vst [vmem:[#allocation2 + $0x10] sm:$0xff] %v908
          %925 = vst [vmem:[#allocation2 + $0x18] sm:$0xff] %v909
          %926 = vst [vmem:[#allocation2 + $0x20] sm:$0xff] %v910
          %927 = vst [vmem:[#allocation2 + $0x28] sm:$0xff] %v911
          %928 = vst [vmem:[#allocation2 + $0x30] sm:$0xff] %v912
          %929 = vst [vmem:[#allocation2 + $0x38] sm:$0xff] %v913
          %930 = vst [vmem:[#allocation2 + $0x40] sm:$0xff] %v914
          %931 = vst [vmem:[#allocation2 + $0x48] sm:$0xff] %v915
          %932 = vst [vmem:[#allocation2 + $0x50] sm:$0xff] %v916
          %933 = vst [vmem:[#allocation2 + $0x58] sm:$0xff] %v917
          %934 = vst [vmem:[#allocation2 + $0x60] sm:$0xff] %v918
          %935 = vst [vmem:[#allocation2 + $0x68] sm:$0xff] %v919
          %936 = vst [vmem:[#allocation2 + $0x70] sm:$0xff] %v920
          %937 = vst [vmem:[#allocation2 + $0x78] sm:$0xff] %v921
        $region120: #{encoder_forward.1} parent=83 // pred_fallthru
          _
        %v938 = vld [vmem:[#allocation2] sm:$0xff]
        %v939 = vld [vmem:[#allocation2 + $0x8] sm:$0xff]
        %v940 = vld [vmem:[#allocation2 + $0x10] sm:$0xff]
        %v941 = vld [vmem:[#allocation2 + $0x18] sm:$0xff]
        %v942 = vld [vmem:[#allocation2 + $0x20] sm:$0xff]
        %v943 = vld [vmem:[#allocation2 + $0x28] sm:$0xff]
        %v944 = vld [vmem:[#allocation2 + $0x30] sm:$0xff]
        %v945 = vld [vmem:[#allocation2 + $0x38] sm:$0xff]
        %v946 = vld [vmem:[#allocation2 + $0x40] sm:$0xff]
        %v947 = vld [vmem:[#allocation2 + $0x48] sm:$0xff]
        %v948 = vld [vmem:[#allocation2 + $0x50] sm:$0xff]
        %v949 = vld [vmem:[#allocation2 + $0x58] sm:$0xff]
        %v950 = vld [vmem:[#allocation2 + $0x60] sm:$0xff]
        %v951 = vld [vmem:[#allocation2 + $0x68] sm:$0xff]
        %v952 = vld [vmem:[#allocation2 + $0x70] sm:$0xff]
        %v953 = vld [vmem:[#allocation2 + $0x78] sm:$0xff]
        %v954 = vld [vmem:[%s883] sm:$0x1]
        %v955 = vld [vmem:[%s886] sm:$0x1]
        %956 = vadd.xlane.f32.xlu0 %v938
        %v957 = vpop.xlane.xlu0 %956
        %958 = vadd.xlane.f32.xlu0 %v939
        %v959 = vpop.xlane.xlu0 %958
        %960 = vadd.xlane.f32.xlu0 %v940
        %v961 = vpop.xlane.xlu0 %960
        %962 = vadd.xlane.f32.xlu0 %v941
        %v963 = vpop.xlane.xlu0 %962
        %964 = vadd.xlane.f32.xlu0 %v942
        %v965 = vpop.xlane.xlu0 %964
        %966 = vadd.xlane.f32.xlu0 %v943
        %v967 = vpop.xlane.xlu0 %966
        %968 = vadd.xlane.f32.xlu0 %v944
        %v969 = vpop.xlane.xlu0 %968
        %970 = vadd.xlane.f32.xlu0 %v945
        %v971 = vpop.xlane.xlu0 %970
        %972 = vadd.xlane.f32.xlu0 %v946
        %v973 = vpop.xlane.xlu0 %972
        %974 = vadd.xlane.f32.xlu0 %v947
        %v975 = vpop.xlane.xlu0 %974
        %976 = vadd.xlane.f32.xlu0 %v948
        %v977 = vpop.xlane.xlu0 %976
        %978 = vadd.xlane.f32.xlu0 %v949
        %v979 = vpop.xlane.xlu0 %978
        %980 = vadd.xlane.f32.xlu0 %v950
        %v981 = vpop.xlane.xlu0 %980
        %982 = vadd.xlane.f32.xlu0 %v951
        %v983 = vpop.xlane.xlu0 %982
        %984 = vadd.xlane.f32.xlu0 %v952
        %v985 = vpop.xlane.xlu0 %984
        %986 = vadd.xlane.f32.xlu0 %v953
        %v987 = vpop.xlane.xlu0 %986
        %v988 = vrcp.pop 128.0
        %v989 = vmul.f32 %v957, %v988
        %v990 = vmul.f32 %v959, %v988
        %v991 = vmul.f32 %v961, %v988
        %v992 = vmul.f32 %v963, %v988
        %v993 = vmul.f32 %v965, %v988
        %v994 = vmul.f32 %v967, %v988
        %v995 = vmul.f32 %v969, %v988
        %v996 = vmul.f32 %v971, %v988
        %v997 = vmul.f32 %v973, %v988
        %v998 = vmul.f32 %v975, %v988
        %v999 = vmul.f32 %v977, %v988
        %v1000 = vmul.f32 %v979, %v988
        %v1001 = vmul.f32 %v981, %v988
        %v1002 = vmul.f32 %v983, %v988
        %v1003 = vmul.f32 %v985, %v988
        %v1004 = vmul.f32 %v987, %v988
        %v1005 = vsub.f32 %v938, %v989
        %v1006 = vsub.f32 %v939, %v990
        %v1007 = vsub.f32 %v940, %v991
        %v1008 = vsub.f32 %v941, %v992
        %v1009 = vsub.f32 %v942, %v993
        %v1010 = vsub.f32 %v943, %v994
        %v1011 = vsub.f32 %v944, %v995
        %v1012 = vsub.f32 %v945, %v996
        %v1013 = vsub.f32 %v946, %v997
        %v1014 = vsub.f32 %v947, %v998
        %v1015 = vsub.f32 %v948, %v999
        %v1016 = vsub.f32 %v949, %v1000
        %v1017 = vsub.f32 %v950, %v1001
        %v1018 = vsub.f32 %v951, %v1002
        %v1019 = vsub.f32 %v952, %v1003
        %v1020 = vsub.f32 %v953, %v1004
        %v1021 = vmul.f32 %v1005, %v1005
        %v1022 = vmul.f32 %v1006, %v1006
        %v1023 = vmul.f32 %v1007, %v1007
        %v1024 = vmul.f32 %v1008, %v1008
        %v1025 = vmul.f32 %v1009, %v1009
        %v1026 = vmul.f32 %v1010, %v1010
        %v1027 = vmul.f32 %v1011, %v1011
        %v1028 = vmul.f32 %v1012, %v1012
        %v1029 = vmul.f32 %v1013, %v1013
        %v1030 = vmul.f32 %v1014, %v1014
        %v1031 = vmul.f32 %v1015, %v1015
        %v1032 = vmul.f32 %v1016, %v1016
        %v1033 = vmul.f32 %v1017, %v1017
        %v1034 = vmul.f32 %v1018, %v1018
        %v1035 = vmul.f32 %v1019, %v1019
        %v1036 = vmul.f32 %v1020, %v1020
        %1037 = vadd.xlane.f32.xlu0 %v1021
        %v1038 = vpop.xlane.xlu0 %1037
        %1039 = vadd.xlane.f32.xlu0 %v1022
        %v1040 = vpop.xlane.xlu0 %1039
        %1041 = vadd.xlane.f32.xlu0 %v1023
        %v1042 = vpop.xlane.xlu0 %1041
        %1043 = vadd.xlane.f32.xlu0 %v1024
        %v1044 = vpop.xlane.xlu0 %1043
        %1045 = vadd.xlane.f32.xlu0 %v1025
        %v1046 = vpop.xlane.xlu0 %1045
        %1047 = vadd.xlane.f32.xlu0 %v1026
        %v1048 = vpop.xlane.xlu0 %1047
        %1049 = vadd.xlane.f32.xlu0 %v1027
        %v1050 = vpop.xlane.xlu0 %1049
        %1051 = vadd.xlane.f32.xlu0 %v1028
        %v1052 = vpop.xlane.xlu0 %1051
        %1053 = vadd.xlane.f32.xlu0 %v1029
        %v1054 = vpop.xlane.xlu0 %1053
        %1055 = vadd.xlane.f32.xlu0 %v1030
        %v1056 = vpop.xlane.xlu0 %1055
        %1057 = vadd.xlane.f32.xlu0 %v1031
        %v1058 = vpop.xlane.xlu0 %1057
        %1059 = vadd.xlane.f32.xlu0 %v1032
        %v1060 = vpop.xlane.xlu0 %1059
        %1061 = vadd.xlane.f32.xlu0 %v1033
        %v1062 = vpop.xlane.xlu0 %1061
        %1063 = vadd.xlane.f32.xlu0 %v1034
        %v1064 = vpop.xlane.xlu0 %1063
        %1065 = vadd.xlane.f32.xlu0 %v1035
        %v1066 = vpop.xlane.xlu0 %1065
        %1067 = vadd.xlane.f32.xlu0 %v1036
        %v1068 = vpop.xlane.xlu0 %1067
        %v1069 = vmul.f32 %v1038, 0.007874016
        %v1070 = vmul.f32 %v1040, 0.007874016
        %v1071 = vmul.f32 %v1042, 0.007874016
        %v1072 = vmul.f32 %v1044, 0.007874016
        %v1073 = vmul.f32 %v1046, 0.007874016
        %v1074 = vmul.f32 %v1048, 0.007874016
        %v1075 = vmul.f32 %v1050, 0.007874016
        %v1076 = vmul.f32 %v1052, 0.007874016
        %v1077 = vmul.f32 %v1054, 0.007874016
        %v1078 = vmul.f32 %v1056, 0.007874016
        %v1079 = vmul.f32 %v1058, 0.007874016
        %v1080 = vmul.f32 %v1060, 0.007874016
        %v1081 = vmul.f32 %v1062, 0.007874016
        %v1082 = vmul.f32 %v1064, 0.007874016
        %v1083 = vmul.f32 %v1066, 0.007874016
        %v1084 = vmul.f32 %v1068, 0.007874016
        %v1085 = vrsqrt.pop %v1069
        %v1086 = vmul.f32 %v1069, %v1085
        %vm1087 = vcmp.eq.f32.partialorder %v1069, inf
        %v1088 = vsel %vm1087, %v1069, %v1086
        %vm1089 = vcmp.eq.f32.partialorder %v1069, 0.0
        %v1090 = vand.u32 %v1069, 2147483648
        %v1091 = vsel %vm1089, %v1090, %v1088
        %v1092 = vrsqrt.pop %v1070
        %v1093 = vmul.f32 %v1070, %v1092
        %vm1094 = vcmp.eq.f32.partialorder %v1070, inf
        %v1095 = vsel %vm1094, %v1070, %v1093
        %vm1096 = vcmp.eq.f32.partialorder %v1070, 0.0
        %v1097 = vand.u32 %v1070, 2147483648
        %v1098 = vsel %vm1096, %v1097, %v1095
        %v1099 = vrsqrt.pop %v1071
        %v1100 = vmul.f32 %v1071, %v1099
        %vm1101 = vcmp.eq.f32.partialorder %v1071, inf
        %v1102 = vsel %vm1101, %v1071, %v1100
        %vm1103 = vcmp.eq.f32.partialorder %v1071, 0.0
        %v1104 = vand.u32 %v1071, 2147483648
        %v1105 = vsel %vm1103, %v1104, %v1102
        %v1106 = vrsqrt.pop %v1072
        %v1107 = vmul.f32 %v1072, %v1106
        %vm1108 = vcmp.eq.f32.partialorder %v1072, inf
        %v1109 = vsel %vm1108, %v1072, %v1107
        %vm1110 = vcmp.eq.f32.partialorder %v1072, 0.0
        %v1111 = vand.u32 %v1072, 2147483648
        %v1112 = vsel %vm1110, %v1111, %v1109
        %v1113 = vrsqrt.pop %v1073
        %v1114 = vmul.f32 %v1073, %v1113
        %vm1115 = vcmp.eq.f32.partialorder %v1073, inf
        %v1116 = vsel %vm1115, %v1073, %v1114
        %vm1117 = vcmp.eq.f32.partialorder %v1073, 0.0
        %v1118 = vand.u32 %v1073, 2147483648
        %v1119 = vsel %vm1117, %v1118, %v1116
        %v1120 = vrsqrt.pop %v1074
        %v1121 = vmul.f32 %v1074, %v1120
        %vm1122 = vcmp.eq.f32.partialorder %v1074, inf
        %v1123 = vsel %vm1122, %v1074, %v1121
        %vm1124 = vcmp.eq.f32.partialorder %v1074, 0.0
        %v1125 = vand.u32 %v1074, 2147483648
        %v1126 = vsel %vm1124, %v1125, %v1123
        %v1127 = vrsqrt.pop %v1075
        %v1128 = vmul.f32 %v1075, %v1127
        %vm1129 = vcmp.eq.f32.partialorder %v1075, inf
        %v1130 = vsel %vm1129, %v1075, %v1128
        %vm1131 = vcmp.eq.f32.partialorder %v1075, 0.0
        %v1132 = vand.u32 %v1075, 2147483648
        %v1133 = vsel %vm1131, %v1132, %v1130
        %v1134 = vrsqrt.pop %v1076
        %v1135 = vmul.f32 %v1076, %v1134
        %vm1136 = vcmp.eq.f32.partialorder %v1076, inf
        %v1137 = vsel %vm1136, %v1076, %v1135
        %vm1138 = vcmp.eq.f32.partialorder %v1076, 0.0
        %v1139 = vand.u32 %v1076, 2147483648
        %v1140 = vsel %vm1138, %v1139, %v1137
        %v1141 = vrsqrt.pop %v1077
        %v1142 = vmul.f32 %v1077, %v1141
        %vm1143 = vcmp.eq.f32.partialorder %v1077, inf
        %v1144 = vsel %vm1143, %v1077, %v1142
        %vm1145 = vcmp.eq.f32.partialorder %v1077, 0.0
        %v1146 = vand.u32 %v1077, 2147483648
        %v1147 = vsel %vm1145, %v1146, %v1144
        %v1148 = vrsqrt.pop %v1078
        %v1149 = vmul.f32 %v1078, %v1148
        %vm1150 = vcmp.eq.f32.partialorder %v1078, inf
        %v1151 = vsel %vm1150, %v1078, %v1149
        %vm1152 = vcmp.eq.f32.partialorder %v1078, 0.0
        %v1153 = vand.u32 %v1078, 2147483648
        %v1154 = vsel %vm1152, %v1153, %v1151
        %v1155 = vrsqrt.pop %v1079
        %v1156 = vmul.f32 %v1079, %v1155
        %vm1157 = vcmp.eq.f32.partialorder %v1079, inf
        %v1158 = vsel %vm1157, %v1079, %v1156
        %vm1159 = vcmp.eq.f32.partialorder %v1079, 0.0
        %v1160 = vand.u32 %v1079, 2147483648
        %v1161 = vsel %vm1159, %v1160, %v1158
        %v1162 = vrsqrt.pop %v1080
        %v1163 = vmul.f32 %v1080, %v1162
        %vm1164 = vcmp.eq.f32.partialorder %v1080, inf
        %v1165 = vsel %vm1164, %v1080, %v1163
        %vm1166 = vcmp.eq.f32.partialorder %v1080, 0.0
        %v1167 = vand.u32 %v1080, 2147483648
        %v1168 = vsel %vm1166, %v1167, %v1165
        %v1169 = vrsqrt.pop %v1081
        %v1170 = vmul.f32 %v1081, %v1169
        %vm1171 = vcmp.eq.f32.partialorder %v1081, inf
        %v1172 = vsel %vm1171, %v1081, %v1170
        %vm1173 = vcmp.eq.f32.partialorder %v1081, 0.0
        %v1174 = vand.u32 %v1081, 2147483648
        %v1175 = vsel %vm1173, %v1174, %v1172
        %v1176 = vrsqrt.pop %v1082
        %v1177 = vmul.f32 %v1082, %v1176
        %vm1178 = vcmp.eq.f32.partialorder %v1082, inf
        %v1179 = vsel %vm1178, %v1082, %v1177
        %vm1180 = vcmp.eq.f32.partialorder %v1082, 0.0
        %v1181 = vand.u32 %v1082, 2147483648
        %v1182 = vsel %vm1180, %v1181, %v1179
        %v1183 = vrsqrt.pop %v1083
        %v1184 = vmul.f32 %v1083, %v1183
        %vm1185 = vcmp.eq.f32.partialorder %v1083, inf
        %v1186 = vsel %vm1185, %v1083, %v1184
        %vm1187 = vcmp.eq.f32.partialorder %v1083, 0.0
        %v1188 = vand.u32 %v1083, 2147483648
        %v1189 = vsel %vm1187, %v1188, %v1186
        %v1190 = vrsqrt.pop %v1084
        %v1191 = vmul.f32 %v1084, %v1190
        %vm1192 = vcmp.eq.f32.partialorder %v1084, inf
        %v1193 = vsel %vm1192, %v1084, %v1191
        %vm1194 = vcmp.eq.f32.partialorder %v1084, 0.0
        %v1195 = vand.u32 %v1084, 2147483648
        %v1196 = vsel %vm1194, %v1195, %v1193
        %v1197 = vadd.f32 %v1091, 1e-06
        %v1198 = vadd.f32 %v1098, 1e-06
        %v1199 = vadd.f32 %v1105, 1e-06
        %v1200 = vadd.f32 %v1112, 1e-06
        %v1201 = vadd.f32 %v1119, 1e-06
        %v1202 = vadd.f32 %v1126, 1e-06
        %v1203 = vadd.f32 %v1133, 1e-06
        %v1204 = vadd.f32 %v1140, 1e-06
        %v1205 = vadd.f32 %v1147, 1e-06
        %v1206 = vadd.f32 %v1154, 1e-06
        %v1207 = vadd.f32 %v1161, 1e-06
        %v1208 = vadd.f32 %v1168, 1e-06
        %v1209 = vadd.f32 %v1175, 1e-06
        %v1210 = vadd.f32 %v1182, 1e-06
        %v1211 = vadd.f32 %v1189, 1e-06
        %v1212 = vadd.f32 %v1196, 1e-06
        %v1213 = vrcp.pop %v1197
        %v1214 = vrcp.pop %v1198
        %v1215 = vrcp.pop %v1199
        %v1216 = vrcp.pop %v1200
        %v1217 = vrcp.pop %v1201
        %v1218 = vrcp.pop %v1202
        %v1219 = vrcp.pop %v1203
        %v1220 = vrcp.pop %v1204
        %v1221 = vrcp.pop %v1205
        %v1222 = vrcp.pop %v1206
        %v1223 = vrcp.pop %v1207
        %v1224 = vrcp.pop %v1208
        %v1225 = vrcp.pop %v1209
        %v1226 = vrcp.pop %v1210
        %v1227 = vrcp.pop %v1211
        %v1228 = vrcp.pop %v1212
        %v1230 = vlaneseq
        %v1231 = vshrl.u32 %v1230, 7
        %v1232 = vsub.s32 0, %v1231
        %v1233 = vrot.slane %v954, %v1232
        %v1235 = vmul.f32 %v1233, %v1005
        %v1236 = vmul.f32 %v1233, %v1006
        %v1237 = vmul.f32 %v1233, %v1007
        %v1238 = vmul.f32 %v1233, %v1008
        %v1239 = vmul.f32 %v1233, %v1009
        %v1240 = vmul.f32 %v1233, %v1010
        %v1241 = vmul.f32 %v1233, %v1011
        %v1242 = vmul.f32 %v1233, %v1012
        %v1243 = vmul.f32 %v1233, %v1013
        %v1244 = vmul.f32 %v1233, %v1014
        %v1245 = vmul.f32 %v1233, %v1015
        %v1246 = vmul.f32 %v1233, %v1016
        %v1247 = vmul.f32 %v1233, %v1017
        %v1248 = vmul.f32 %v1233, %v1018
        %v1249 = vmul.f32 %v1233, %v1019
        %v1250 = vmul.f32 %v1233, %v1020
        %v1251 = vmul.f32 %v1235, %v1213
        %v1252 = vmul.f32 %v1236, %v1214
        %v1253 = vmul.f32 %v1237, %v1215
        %v1254 = vmul.f32 %v1238, %v1216
        %v1255 = vmul.f32 %v1239, %v1217
        %v1256 = vmul.f32 %v1240, %v1218
        %v1257 = vmul.f32 %v1241, %v1219
        %v1258 = vmul.f32 %v1242, %v1220
        %v1259 = vmul.f32 %v1243, %v1221
        %v1260 = vmul.f32 %v1244, %v1222
        %v1261 = vmul.f32 %v1245, %v1223
        %v1262 = vmul.f32 %v1246, %v1224
        %v1263 = vmul.f32 %v1247, %v1225
        %v1264 = vmul.f32 %v1248, %v1226
        %v1265 = vmul.f32 %v1249, %v1227
        %v1266 = vmul.f32 %v1250, %v1228
        %v1268 = vlaneseq
        %v1269 = vshrl.u32 %v1268, 7
        %v1270 = vsub.s32 0, %v1269
        %v1271 = vrot.slane %v955, %v1270
        %v1273 = vadd.f32 %v1251, %v1271
        %v1274 = vadd.f32 %v1252, %v1271
        %v1275 = vadd.f32 %v1253, %v1271
        %v1276 = vadd.f32 %v1254, %v1271
        %v1277 = vadd.f32 %v1255, %v1271
        %v1278 = vadd.f32 %v1256, %v1271
        %v1279 = vadd.f32 %v1257, %v1271
        %v1280 = vadd.f32 %v1258, %v1271
        %v1281 = vadd.f32 %v1259, %v1271
        %v1282 = vadd.f32 %v1260, %v1271
        %v1283 = vadd.f32 %v1261, %v1271
        %v1284 = vadd.f32 %v1262, %v1271
        %v1285 = vadd.f32 %v1263, %v1271
        %v1286 = vadd.f32 %v1264, %v1271
        %v1287 = vadd.f32 %v1265, %v1271
        %v1288 = vadd.f32 %v1266, %v1271
        %v1289 = vpack.c.bf16 %v1274, %v1273
        %v1290 = vpack.c.bf16 %v1276, %v1275
        %v1291 = vpack.c.bf16 %v1278, %v1277
        %v1292 = vpack.c.bf16 %v1280, %v1279
        %v1293 = vpack.c.bf16 %v1282, %v1281
        %v1294 = vpack.c.bf16 %v1284, %v1283
        %v1295 = vpack.c.bf16 %v1286, %v1285
        %v1296 = vpack.c.bf16 %v1288, %v1287
        %v1297 = vld [vmem:[%s736] sm:$0xff]
        %v1298 = vld [vmem:[%s736 + $0x8] sm:$0xf]
        %v1299 = vld [vmem:[%s736 + $0xc] sm:$0xff]
        %v1300 = vld [vmem:[%s736 + $0x14] sm:$0xf]
        %v1301 = vld [vmem:[%s736 + $0x18] sm:$0xff]
        %v1302 = vld [vmem:[%s736 + $0x20] sm:$0xf]
        %v1303 = vld [vmem:[%s736 + $0x24] sm:$0xff]
        %v1304 = vld [vmem:[%s736 + $0x2c] sm:$0xf]
        %v1305 = vld [vmem:[%s736 + $0x30] sm:$0xff]
        %v1306 = vld [vmem:[%s736 + $0x38] sm:$0xf]
        %v1307 = vld [vmem:[%s736 + $0x3c] sm:$0xff]
        %v1308 = vld [vmem:[%s736 + $0x44] sm:$0xf]
        %v1309 = vld [vmem:[%s736 + $0x48] sm:$0xff]
        %v1310 = vld [vmem:[%s736 + $0x50] sm:$0xf]
        %v1311 = vld [vmem:[%s736 + $0x54] sm:$0xff]
        %v1312 = vld [vmem:[%s736 + $0x5c] sm:$0xf]
        %v1313 = vld [vmem:[%s736 + $0x60] sm:$0xff]
        %v1314 = vld [vmem:[%s736 + $0x68] sm:$0xf]
        %v1315 = vld [vmem:[%s736 + $0x6c] sm:$0xff]
        %v1316 = vld [vmem:[%s736 + $0x74] sm:$0xf]
        %v1317 = vld [vmem:[%s736 + $0x78] sm:$0xff]
        %v1318 = vld [vmem:[%s736 + $0x80] sm:$0xf]
        %v1319 = vld [vmem:[%s736 + $0x84] sm:$0xff]
        %v1320 = vld [vmem:[%s736 + $0x8c] sm:$0xf]
        %v1321 = vld [vmem:[%s736 + $0x90] sm:$0xff]
        %v1322 = vld [vmem:[%s736 + $0x98] sm:$0xf]
        %v1323 = vld [vmem:[%s736 + $0x9c] sm:$0xff]
        %v1324 = vld [vmem:[%s736 + $0xa4] sm:$0xf]
        %v1325 = vld [vmem:[%s736 + $0xa8] sm:$0xff]
        %v1326 = vld [vmem:[%s736 + $0xb0] sm:$0xf]
        %v1327 = vld [vmem:[%s736 + $0xb4] sm:$0xff]
        %v1328 = vld [vmem:[%s736 + $0xbc] sm:$0xf]
        %v1329 = vld [vmem:[%s890] sm:$0x7]
        %v1331 = vlaneseq
        %v1332 = vshrl.u32 %v1331, 7
        %v1333 = vsub.s32 0, %v1332
        %v1334 = vrot.slane %v1329, %v1333
        %v1335 = vlaneseq
        %v1336 = vshrl.u32 %v1335, 7
        %v1337 = vsub.s32 1, %v1336
        %v1338 = vrot.slane %v1329, %v1337
        %v1339 = vlaneseq
        %v1340 = vshrl.u32 %v1339, 7
        %v1341 = vsub.s32 2, %v1340
        %v1342 = vrot.slane %v1329, %v1341
        %v1378 = vunpack.c.l.b16 %v1297
        %v1379 = vunpack.c.h.b16 %v1297
        %v1380 = vunpack.c.l.b16 %v1298
        %v1381 = vunpack.c.l.b16 %v1299
        %v1382 = vunpack.c.h.b16 %v1299
        %v1383 = vunpack.c.l.b16 %v1300
        %v1384 = vunpack.c.l.b16 %v1301
        %v1385 = vunpack.c.h.b16 %v1301
        %v1386 = vunpack.c.l.b16 %v1302
        %v1387 = vunpack.c.l.b16 %v1303
        %v1388 = vunpack.c.h.b16 %v1303
        %v1389 = vunpack.c.l.b16 %v1304
        %v1390 = vunpack.c.l.b16 %v1305
        %v1391 = vunpack.c.h.b16 %v1305
        %v1392 = vunpack.c.l.b16 %v1306
        %v1393 = vunpack.c.l.b16 %v1307
        %v1394 = vunpack.c.h.b16 %v1307
        %v1395 = vunpack.c.l.b16 %v1308
        %v1396 = vunpack.c.l.b16 %v1309
        %v1397 = vunpack.c.h.b16 %v1309
        %v1398 = vunpack.c.l.b16 %v1310
        %v1399 = vunpack.c.l.b16 %v1311
        %v1400 = vunpack.c.h.b16 %v1311
        %v1401 = vunpack.c.l.b16 %v1312
        %v1402 = vunpack.c.l.b16 %v1313
        %v1403 = vunpack.c.h.b16 %v1313
        %v1404 = vunpack.c.l.b16 %v1314
        %v1405 = vunpack.c.l.b16 %v1315
        %v1406 = vunpack.c.h.b16 %v1315
        %v1407 = vunpack.c.l.b16 %v1316
        %v1408 = vunpack.c.l.b16 %v1317
        %v1409 = vunpack.c.h.b16 %v1317
        %v1410 = vunpack.c.l.b16 %v1318
        %v1411 = vunpack.c.l.b16 %v1319
        %v1412 = vunpack.c.h.b16 %v1319
        %v1413 = vunpack.c.l.b16 %v1320
        %v1414 = vunpack.c.l.b16 %v1321
        %v1415 = vunpack.c.h.b16 %v1321
        %v1416 = vunpack.c.l.b16 %v1322
        %v1417 = vunpack.c.l.b16 %v1323
        %v1418 = vunpack.c.h.b16 %v1323
        %v1419 = vunpack.c.l.b16 %v1324
        %v1420 = vunpack.c.l.b16 %v1325
        %v1421 = vunpack.c.h.b16 %v1325
        %v1422 = vunpack.c.l.b16 %v1326
        %v1423 = vunpack.c.l.b16 %v1327
        %v1424 = vunpack.c.h.b16 %v1327
        %v1425 = vunpack.c.l.b16 %v1328
        %v1426 = vpack.c.b16 %v1381, %v1378
        %v1427 = vpack.c.b16 %v1382, %v1379
        %v1428 = vpack.c.b16 %v1383, %v1380
        %v1429 = vpack.c.b16 %v1387, %v1384
        %v1430 = vpack.c.b16 %v1388, %v1385
        %v1431 = vpack.c.b16 %v1389, %v1386
        %v1432 = vpack.c.b16 %v1393, %v1390
        %v1433 = vpack.c.b16 %v1394, %v1391
        %v1434 = vpack.c.b16 %v1395, %v1392
        %v1435 = vpack.c.b16 %v1399, %v1396
        %v1436 = vpack.c.b16 %v1400, %v1397
        %v1437 = vpack.c.b16 %v1401, %v1398
        %v1438 = vpack.c.b16 %v1405, %v1402
        %v1439 = vpack.c.b16 %v1406, %v1403
        %v1440 = vpack.c.b16 %v1407, %v1404
        %v1441 = vpack.c.b16 %v1411, %v1408
        %v1442 = vpack.c.b16 %v1412, %v1409
        %v1443 = vpack.c.b16 %v1413, %v1410
        %v1444 = vpack.c.b16 %v1417, %v1414
        %v1445 = vpack.c.b16 %v1418, %v1415
        %v1446 = vpack.c.b16 %v1419, %v1416
        %v1447 = vpack.c.b16 %v1423, %v1420
        %v1448 = vpack.c.b16 %v1424, %v1421
        %v1449 = vpack.c.b16 %v1425, %v1422
        %1474 = vmatprep.subr.bf16.mxu0 %v1427
        %1475 = vmatpush1.bf16.msra.mxu0 %v1426
        %1476 = vmatprep.subr.bf16.mxu0 %v1430
        %1477 = vmatpush1.bf16.msra.mxu0 %v1429
        %1478 = vmatprep.subr.bf16.mxu0 %v1433
        %1479 = vmatpush1.bf16.msra.mxu0 %v1432
        %1480 = vmatprep.subr.bf16.mxu0 %v1436
        %1481 = vmatpush1.bf16.msra.mxu0 %v1435
        %1482 = vmatprep.subr.bf16.mxu0 %v1439
        %1483 = vmatpush1.bf16.msra.mxu0 %v1438
        %1484 = vmatprep.subr.bf16.mxu0 %v1442
        %1485 = vmatpush1.bf16.msra.mxu0 %v1441
        %1486 = vmatprep.subr.bf16.mxu0 %v1445
        %1487 = vmatpush1.bf16.msra.mxu0 %v1444
        %1488 = vmatprep.subr.bf16.mxu0 %v1448
        %1489 = vmatpush1.bf16.msra.mxu0 %v1447
        %1490 = vmatprep.subr.bf16.mxu0 0
        %1491 = vmatpush1.bf16.msra.mxu0 0
        %1492 = vmatprep.subr.bf16.mxu0 0
        %1493 = vmatpush1.bf16.msra.mxu0 0
        %1494 = vmatprep.subr.bf16.mxu0 0
        %1495 = vmatpush1.bf16.msra.mxu0 0
        %1496 = vmatprep.subr.bf16.mxu0 0
        %1497 = vmatpush1.bf16.msra.mxu0 0
        %1498 = vmatprep.subr.bf16.mxu0 0
        %1499 = vmatpush1.bf16.msra.mxu0 0
        %1500 = vmatprep.subr.bf16.mxu0 0
        %1501 = vmatpush1.bf16.msra.mxu0 0
        %1502 = vmatprep.subr.bf16.mxu0 0
        %1503 = vmatpush1.bf16.msra.mxu0 0
        %1504 = vmatprep.subr.bf16.mxu0 0
        %1505 = vmatpush1.bf16.msra.mxu0 0
        %1506 = vmatprep.mubr.bf16.mxu0 0
        %1507 = vmatmul.mubr.bf16.gmra.mrb[0].mxu0 %v1289
        %v1508 = vpop.f32.mrb[0].mxu0
        %v1509 = vadd.f32 %v1334, %v1508
        %v1510 = vpop.f32.mrb[0].mxu0
        %v1511 = vadd.f32 %v1338, %v1510
        %v1512 = vpop.f32.mrb[0].mxu0
        %v1513 = vadd.f32 %v1334, %v1512
        %v1514 = vpop.f32.mrb[0].mxu0
        %v1515 = vadd.f32 %v1338, %v1514
        %1516 = vmatprep.mubr.bf16.mxu0 0
        %1517 = vmatmul.mubr.bf16.gmra.mrb[0].mxu0 %v1290
        %v1518 = vpop.f32.mrb[0].mxu0
        %v1519 = vadd.f32 %v1334, %v1518
        %v1520 = vpop.f32.mrb[0].mxu0
        %v1521 = vadd.f32 %v1338, %v1520
        %v1522 = vpop.f32.mrb[0].mxu0
        %v1523 = vadd.f32 %v1334, %v1522
        %v1524 = vpop.f32.mrb[0].mxu0
        %v1525 = vadd.f32 %v1338, %v1524
        %1526 = vmatprep.mubr.bf16.mxu0 0
        %1527 = vmatmul.mubr.bf16.gmra.mrb[0].mxu0 %v1291
        %v1528 = vpop.f32.mrb[0].mxu0
        %v1529 = vadd.f32 %v1334, %v1528
        %v1530 = vpop.f32.mrb[0].mxu0
        %v1531 = vadd.f32 %v1338, %v1530
        %v1532 = vpop.f32.mrb[0].mxu0
        %v1533 = vadd.f32 %v1334, %v1532
        %v1534 = vpop.f32.mrb[0].mxu0
        %v1535 = vadd.f32 %v1338, %v1534
        %1536 = vmatprep.mubr.bf16.mxu0 0
        %1537 = vmatmul.mubr.bf16.gmra.mrb[0].mxu0 %v1292
        %v1538 = vpop.f32.mrb[0].mxu0
        %v1539 = vadd.f32 %v1334, %v1538
        %v1540 = vpop.f32.mrb[0].mxu0
        %v1541 = vadd.f32 %v1338, %v1540
        %v1542 = vpop.f32.mrb[0].mxu0
        %v1543 = vadd.f32 %v1334, %v1542
        %v1544 = vpop.f32.mrb[0].mxu0
        %v1545 = vadd.f32 %v1338, %v1544
        %1546 = vmatprep.mubr.bf16.mxu0 0
        %1547 = vmatmul.mubr.bf16.gmra.mrb[0].mxu0 %v1293
        %v1548 = vpop.f32.mrb[0].mxu0
        %v1549 = vadd.f32 %v1334, %v1548
        %v1550 = vpop.f32.mrb[0].mxu0
        %v1551 = vadd.f32 %v1338, %v1550
        %v1552 = vpop.f32.mrb[0].mxu0
        %v1553 = vadd.f32 %v1334, %v1552
        %v1554 = vpop.f32.mrb[0].mxu0
        %v1555 = vadd.f32 %v1338, %v1554
        %1556 = vmatprep.mubr.bf16.mxu0 0
        %1557 = vmatmul.mubr.bf16.gmra.mrb[0].mxu0 %v1294
        %v1558 = vpop.f32.mrb[0].mxu0
        %v1559 = vadd.f32 %v1334, %v1558
        %v1560 = vpop.f32.mrb[0].mxu0
        %v1561 = vadd.f32 %v1338, %v1560
        %v1562 = vpop.f32.mrb[0].mxu0
        %v1563 = vadd.f32 %v1334, %v1562
        %v1564 = vpop.f32.mrb[0].mxu0
        %v1565 = vadd.f32 %v1338, %v1564
        %1566 = vmatprep.mubr.bf16.mxu0 0
        %1567 = vmatmul.mubr.bf16.gmra.mrb[0].mxu0 %v1295
        %v1568 = vpop.f32.mrb[0].mxu0
        %v1569 = vadd.f32 %v1334, %v1568
        %v1570 = vpop.f32.mrb[0].mxu0
        %v1571 = vadd.f32 %v1338, %v1570
        %v1572 = vpop.f32.mrb[0].mxu0
        %v1573 = vadd.f32 %v1334, %v1572
        %v1574 = vpop.f32.mrb[0].mxu0
        %v1575 = vadd.f32 %v1338, %v1574
        %1576 = vmatprep.mubr.bf16.mxu0 0
        %1577 = vmatmul.mubr.bf16.gmra.mrb[0].mxu0 %v1296
        %v1578 = vpop.f32.mrb[0].mxu0
        %v1579 = vadd.f32 %v1334, %v1578
        %v1580 = vpop.f32.mrb[0].mxu0
        %v1581 = vadd.f32 %v1338, %v1580
        %v1582 = vpop.f32.mrb[0].mxu0
        %v1583 = vadd.f32 %v1334, %v1582
        %v1584 = vpop.f32.mrb[0].mxu0
        %v1585 = vadd.f32 %v1338, %v1584
        %1586 = vdwg.mxu0
        %1587 = vmatprep.subr.bf16.mxu0 0
        %1588 = vmatpush1.bf16.msra.mxu0 %v1428
        %1589 = vmatprep.subr.bf16.mxu0 0
        %1590 = vmatpush1.bf16.msra.mxu0 %v1431
        %1591 = vmatprep.subr.bf16.mxu0 0
        %1592 = vmatpush1.bf16.msra.mxu0 %v1434
        %1593 = vmatprep.subr.bf16.mxu0 0
        %1594 = vmatpush1.bf16.msra.mxu0 %v1437
        %1595 = vmatprep.subr.bf16.mxu0 0
        %1596 = vmatpush1.bf16.msra.mxu0 %v1440
        %1597 = vmatprep.subr.bf16.mxu0 0
        %1598 = vmatpush1.bf16.msra.mxu0 %v1443
        %1599 = vmatprep.subr.bf16.mxu0 0
        %1600 = vmatpush1.bf16.msra.mxu0 %v1446
        %1601 = vmatprep.subr.bf16.mxu0 0
        %1602 = vmatpush1.bf16.msra.mxu0 %v1449
        %1603 = vmatprep.subr.bf16.mxu0 0
        %1604 = vmatpush1.bf16.msra.mxu0 0
        %1605 = vmatprep.subr.bf16.mxu0 0
        %1606 = vmatpush1.bf16.msra.mxu0 0
        %1607 = vmatprep.subr.bf16.mxu0 0
        %1608 = vmatpush1.bf16.msra.mxu0 0
        %1609 = vmatprep.subr.bf16.mxu0 0
        %1610 = vmatpush1.bf16.msra.mxu0 0
        %1611 = vmatprep.subr.bf16.mxu0 0
        %1612 = vmatpush1.bf16.msra.mxu0 0
        %1613 = vmatprep.subr.bf16.mxu0 0
        %1614 = vmatpush1.bf16.msra.mxu0 0
        %1615 = vmatprep.subr.bf16.mxu0 0
        %1616 = vmatpush1.bf16.msra.mxu0 0
        %1617 = vmatprep.subr.bf16.mxu0 0
        %1618 = vmatpush1.bf16.msra.mxu0 0
        %1619 = vmatprep.mubr.bf16.mxu0 0
        %1620 = vmatmul.mubr.bf16.gmra.mrb[0].mxu0 %v1289
        %v1621 = vpop.f32.mrb[0].mxu0
        %v1622 = vadd.f32 %v1342, %v1621
        %v1623 = vpop.f32.mrb[0].mxu0
        %v1624 = vpop.f32.mrb[0].mxu0
        %v1625 = vadd.f32 %v1342, %v1624
        %v1626 = vpop.f32.mrb[0].mxu0
        %1627 = vmatprep.mubr.bf16.mxu0 0
        %1628 = vmatmul.mubr.bf16.gmra.mrb[0].mxu0 %v1290
        %v1629 = vpop.f32.mrb[0].mxu0
        %v1630 = vadd.f32 %v1342, %v1629
        %v1631 = vpop.f32.mrb[0].mxu0
        %v1632 = vpop.f32.mrb[0].mxu0
        %v1633 = vadd.f32 %v1342, %v1632
        %v1634 = vpop.f32.mrb[0].mxu0
        %1635 = vmatprep.mubr.bf16.mxu0 0
        %1636 = vmatmul.mubr.bf16.gmra.mrb[0].mxu0 %v1291
        %v1637 = vpop.f32.mrb[0].mxu0
        %v1638 = vadd.f32 %v1342, %v1637
        %v1639 = vpop.f32.mrb[0].mxu0
        %v1640 = vpop.f32.mrb[0].mxu0
        %v1641 = vadd.f32 %v1342, %v1640
        %v1642 = vpop.f32.mrb[0].mxu0
        %1643 = vmatprep.mubr.bf16.mxu0 0
        %1644 = vmatmul.mubr.bf16.gmra.mrb[0].mxu0 %v1292
        %v1645 = vpop.f32.mrb[0].mxu0
        %v1646 = vadd.f32 %v1342, %v1645
        %v1647 = vpop.f32.mrb[0].mxu0
        %v1648 = vpop.f32.mrb[0].mxu0
        %v1649 = vadd.f32 %v1342, %v1648
        %v1650 = vpop.f32.mrb[0].mxu0
        %1651 = vmatprep.mubr.bf16.mxu0 0
        %1652 = vmatmul.mubr.bf16.gmra.mrb[0].mxu0 %v1293
        %v1653 = vpop.f32.mrb[0].mxu0
        %v1654 = vadd.f32 %v1342, %v1653
        %v1655 = vpop.f32.mrb[0].mxu0
        %v1656 = vpop.f32.mrb[0].mxu0
        %v1657 = vadd.f32 %v1342, %v1656
        %v1658 = vpop.f32.mrb[0].mxu0
        %1659 = vmatprep.mubr.bf16.mxu0 0
        %1660 = vmatmul.mubr.bf16.gmra.mrb[0].mxu0 %v1294
        %v1661 = vpop.f32.mrb[0].mxu0
        %v1662 = vadd.f32 %v1342, %v1661
        %v1663 = vpop.f32.mrb[0].mxu0
        %v1664 = vpop.f32.mrb[0].mxu0
        %v1665 = vadd.f32 %v1342, %v1664
        %v1666 = vpop.f32.mrb[0].mxu0
        %1667 = vmatprep.mubr.bf16.mxu0 0
        %1668 = vmatmul.mubr.bf16.gmra.mrb[0].mxu0 %v1295
        %v1669 = vpop.f32.mrb[0].mxu0
        %v1670 = vadd.f32 %v1342, %v1669
        %v1671 = vpop.f32.mrb[0].mxu0
        %v1672 = vpop.f32.mrb[0].mxu0
        %v1673 = vadd.f32 %v1342, %v1672
        %v1674 = vpop.f32.mrb[0].mxu0
        %1675 = vmatprep.mubr.bf16.mxu0 0
        %1676 = vmatmul.mubr.bf16.gmra.mrb[0].mxu0 %v1296
        %v1677 = vpop.f32.mrb[0].mxu0
        %v1678 = vadd.f32 %v1342, %v1677
        %v1679 = vpop.f32.mrb[0].mxu0
        %v1680 = vpop.f32.mrb[0].mxu0
        %v1681 = vadd.f32 %v1342, %v1680
        %v1682 = vpop.f32.mrb[0].mxu0
        %1683 = vdwg.mxu0
        %v1684 = vld [vmem:[%s727] sm:$0xff]
        %v1685 = vld [vmem:[%s727 + $0x8] sm:$0xff]
        %v1686 = vld [vmem:[%s727 + $0x10] sm:$0xff]
        %v1687 = vld [vmem:[%s727 + $0x18] sm:$0xff]
        %v1688 = vld [vmem:[%s727 + $0x20] sm:$0xff]
        %v1689 = vld [vmem:[%s727 + $0x28] sm:$0xff]
        %v1690 = vld [vmem:[%s727 + $0x30] sm:$0xff]
        %v1691 = vld [vmem:[%s727 + $0x38] sm:$0xff]
        %v1692 = vld [vmem:[%s727 + $0x40] sm:$0xff]
        %v1693 = vld [vmem:[%s727 + $0x48] sm:$0xff]
        %v1694 = vld [vmem:[%s727 + $0x50] sm:$0xff]
        %v1695 = vld [vmem:[%s727 + $0x58] sm:$0xff]
        %v1696 = vld [vmem:[%s727 + $0x60] sm:$0xff]
        %v1697 = vld [vmem:[%s727 + $0x68] sm:$0xff]
        %v1698 = vld [vmem:[%s727 + $0x70] sm:$0xff]
        %v1699 = vld [vmem:[%s727 + $0x78] sm:$0xff]
        %vm1700 = vcmp.eq.f32.partialorder %v1684, 0.0
        %vm1701 = vcmp.eq.f32.partialorder %v1685, 0.0
        %vm1702 = vcmp.eq.f32.partialorder %v1686, 0.0
        %vm1703 = vcmp.eq.f32.partialorder %v1687, 0.0
        %vm1704 = vcmp.eq.f32.partialorder %v1688, 0.0
        %vm1705 = vcmp.eq.f32.partialorder %v1689, 0.0
        %vm1706 = vcmp.eq.f32.partialorder %v1690, 0.0
        %vm1707 = vcmp.eq.f32.partialorder %v1691, 0.0
        %vm1708 = vcmp.eq.f32.partialorder %v1692, 0.0
        %vm1709 = vcmp.eq.f32.partialorder %v1693, 0.0
        %vm1710 = vcmp.eq.f32.partialorder %v1694, 0.0
        %vm1711 = vcmp.eq.f32.partialorder %v1695, 0.0
        %vm1712 = vcmp.eq.f32.partialorder %v1696, 0.0
        %vm1713 = vcmp.eq.f32.partialorder %v1697, 0.0
        %vm1714 = vcmp.eq.f32.partialorder %v1698, 0.0
        %vm1715 = vcmp.eq.f32.partialorder %v1699, 0.0
        %v1716 = vsel %vm1700, -1e+09, 0.0
        %v1717 = vsel %vm1701, -1e+09, 0.0
        %v1718 = vsel %vm1702, -1e+09, 0.0
        %v1719 = vsel %vm1703, -1e+09, 0.0
        %v1720 = vsel %vm1704, -1e+09, 0.0
        %v1721 = vsel %vm1705, -1e+09, 0.0
        %v1722 = vsel %vm1706, -1e+09, 0.0
        %v1723 = vsel %vm1707, -1e+09, 0.0
        %v1724 = vsel %vm1708, -1e+09, 0.0
        %v1725 = vsel %vm1709, -1e+09, 0.0
        %v1726 = vsel %vm1710, -1e+09, 0.0
        %v1727 = vsel %vm1711, -1e+09, 0.0
        %v1728 = vsel %vm1712, -1e+09, 0.0
        %v1729 = vsel %vm1713, -1e+09, 0.0
        %v1730 = vsel %vm1714, -1e+09, 0.0
        %v1731 = vsel %vm1715, -1e+09, 0.0
        %v1732 = vpack.c.bf16 %v1513, %v1509
        %v1733 = vpack.c.bf16 %v1523, %v1519
        %v1734 = vpack.c.bf16 %v1533, %v1529
        %v1735 = vpack.c.bf16 %v1543, %v1539
        %v1736 = vpack.c.bf16 %v1553, %v1549
        %v1737 = vpack.c.bf16 %v1563, %v1559
        %v1738 = vpack.c.bf16 %v1573, %v1569
        %v1739 = vpack.c.bf16 %v1583, %v1579
        %v1740 = vpack.c.bf16 %v1515, %v1511
        %v1741 = vpack.c.bf16 %v1525, %v1521
        %v1742 = vpack.c.bf16 %v1535, %v1531
        %v1743 = vpack.c.bf16 %v1545, %v1541
        %v1744 = vpack.c.bf16 %v1555, %v1551
        %v1745 = vpack.c.bf16 %v1565, %v1561
        %v1746 = vpack.c.bf16 %v1575, %v1571
        %v1747 = vpack.c.bf16 %v1585, %v1581
        %v1748 = vpack.c.bf16 %v1625, %v1622
        %v1749 = vpack.c.bf16 %v1633, %v1630
        %v1750 = vpack.c.bf16 %v1641, %v1638
        %v1751 = vpack.c.bf16 %v1649, %v1646
        %v1752 = vpack.c.bf16 %v1657, %v1654
        %v1753 = vpack.c.bf16 %v1665, %v1662
        %v1754 = vpack.c.bf16 %v1673, %v1670
        %v1755 = vpack.c.bf16 %v1681, %v1678
        %vm1756 = vcmask 261120
        %v1758 = vsel %vm1756, %v1732, 0
        %v1761 = vsel %vm1756, %v1733, 0
        %v1764 = vsel %vm1756, %v1734, 0
        %v1767 = vsel %vm1756, %v1735, 0
        %v1770 = vsel %vm1756, %v1736, 0
        %v1773 = vsel %vm1756, %v1737, 0
        %v1776 = vsel %vm1756, %v1738, 0
        %v1779 = vsel %vm1756, %v1739, 0
        %v1782 = vsel %vm1756, %v1740, 0
        %v1785 = vsel %vm1756, %v1741, 0
        %v1788 = vsel %vm1756, %v1742, 0
        %v1791 = vsel %vm1756, %v1743, 0
        %v1794 = vsel %vm1756, %v1744, 0
        %v1797 = vsel %vm1756, %v1745, 0
        %v1800 = vsel %vm1756, %v1746, 0
        %v1803 = vsel %vm1756, %v1747, 0
        %1805 = vmatprep.subr.bf16.mxu0 0
        %1806 = vmatpush1.bf16.xpose.msra.mxu0 %v1782
        %1807 = vmatprep.subr.bf16.mxu0 0
        %1808 = vmatpush1.bf16.xpose.msra.mxu0 %v1785
        %1809 = vmatprep.subr.bf16.mxu0 0
        %1810 = vmatpush1.bf16.xpose.msra.mxu0 %v1788
        %1811 = vmatprep.subr.bf16.mxu0 0
        %1812 = vmatpush1.bf16.xpose.msra.mxu0 %v1791
        %1813 = vmatprep.subr.bf16.mxu0 0
        %1814 = vmatpush1.bf16.xpose.msra.mxu0 %v1794
        %1815 = vmatprep.subr.bf16.mxu0 0
        %1816 = vmatpush1.bf16.xpose.msra.mxu0 %v1797
        %1817 = vmatprep.subr.bf16.mxu0 0
        %1818 = vmatpush1.bf16.xpose.msra.mxu0 %v1800
        %1819 = vmatprep.subr.bf16.mxu0 0
        %1820 = vmatpush1.bf16.xpose.msra.mxu0 %v1803
        %1821 = vmatprep.subr.bf16.mxu0 0
        %1822 = vmatpush1.bf16.xpose.msra.mxu0 0
        %1823 = vmatprep.subr.bf16.mxu0 0
        %1824 = vmatpush1.bf16.xpose.msra.mxu0 0
        %1825 = vmatprep.subr.bf16.mxu0 0
        %1826 = vmatpush1.bf16.xpose.msra.mxu0 0
        %1827 = vmatprep.subr.bf16.mxu0 0
        %1828 = vmatpush1.bf16.xpose.msra.mxu0 0
        %1829 = vmatprep.subr.bf16.mxu0 0
        %1830 = vmatpush1.bf16.xpose.msra.mxu0 0
        %1831 = vmatprep.subr.bf16.mxu0 0
        %1832 = vmatpush1.bf16.xpose.msra.mxu0 0
        %1833 = vmatprep.subr.bf16.mxu0 0
        %1834 = vmatpush1.bf16.xpose.msra.mxu0 0
        %1835 = vmatprep.subr.bf16.mxu0 0
        %1836 = vmatpush1.bf16.xpose.msra.mxu0 0
        %1837 = vmatprep.mubr.bf16.mxu0 0
        %1838 = vmatmul.mubr.bf16.gmra.mrb[0].mxu0 %v1758
        %v1839 = vpop.f32.mrb[0].mxu0
        %v1840 = vadd.f32 %v1716, %v1839
        %v1841 = vpop.f32.mrb[0].mxu0
        %v1842 = vpop.f32.mrb[0].mxu0
        %v1843 = vadd.f32 %v1717, %v1842
        %v1844 = vpop.f32.mrb[0].mxu0
        %1845 = vmatprep.mubr.bf16.mxu0 0
        %1846 = vmatmul.mubr.bf16.gmra.mrb[0].mxu0 %v1761
        %v1847 = vpop.f32.mrb[0].mxu0
        %v1848 = vadd.f32 %v1718, %v1847
        %v1849 = vpop.f32.mrb[0].mxu0
        %v1850 = vpop.f32.mrb[0].mxu0
        %v1851 = vadd.f32 %v1719, %v1850
        %v1852 = vpop.f32.mrb[0].mxu0
        %1853 = vmatprep.mubr.bf16.mxu0 0
        %1854 = vmatmul.mubr.bf16.gmra.mrb[0].mxu0 %v1764
        %v1855 = vpop.f32.mrb[0].mxu0
        %v1856 = vadd.f32 %v1720, %v1855
        %v1857 = vpop.f32.mrb[0].mxu0
        %v1858 = vpop.f32.mrb[0].mxu0
        %v1859 = vadd.f32 %v1721, %v1858
        %v1860 = vpop.f32.mrb[0].mxu0
        %1861 = vmatprep.mubr.bf16.mxu0 0
        %1862 = vmatmul.mubr.bf16.gmra.mrb[0].mxu0 %v1767
        %v1863 = vpop.f32.mrb[0].mxu0
        %v1864 = vadd.f32 %v1722, %v1863
        %v1865 = vpop.f32.mrb[0].mxu0
        %v1866 = vpop.f32.mrb[0].mxu0
        %v1867 = vadd.f32 %v1723, %v1866
        %v1868 = vpop.f32.mrb[0].mxu0
        %1869 = vmatprep.mubr.bf16.mxu0 0
        %1870 = vmatmul.mubr.bf16.gmra.mrb[0].mxu0 %v1770
        %v1871 = vpop.f32.mrb[0].mxu0
        %v1872 = vadd.f32 %v1724, %v1871
        %v1873 = vpop.f32.mrb[0].mxu0
        %v1874 = vpop.f32.mrb[0].mxu0
        %v1875 = vadd.f32 %v1725, %v1874
        %v1876 = vpop.f32.mrb[0].mxu0
        %1877 = vmatprep.mubr.bf16.mxu0 0
        %1878 = vmatmul.mubr.bf16.gmra.mrb[0].mxu0 %v1773
        %v1879 = vpop.f32.mrb[0].mxu0
        %v1880 = vadd.f32 %v1726, %v1879
        %v1881 = vpop.f32.mrb[0].mxu0
        %v1882 = vpop.f32.mrb[0].mxu0
        %v1883 = vadd.f32 %v1727, %v1882
        %v1884 = vpop.f32.mrb[0].mxu0
        %1885 = vmatprep.mubr.bf16.mxu0 0
        %1886 = vmatmul.mubr.bf16.gmra.mrb[0].mxu0 %v1776
        %v1887 = vpop.f32.mrb[0].mxu0
        %v1888 = vadd.f32 %v1728, %v1887
        %v1889 = vpop.f32.mrb[0].mxu0
        %v1890 = vpop.f32.mrb[0].mxu0
        %v1891 = vadd.f32 %v1729, %v1890
        %v1892 = vpop.f32.mrb[0].mxu0
        %1893 = vmatprep.mubr.bf16.mxu0 0
        %1894 = vmatmul.mubr.bf16.gmra.mrb[0].mxu0 %v1779
        %v1895 = vpop.f32.mrb[0].mxu0
        %v1896 = vadd.f32 %v1730, %v1895
        %v1897 = vpop.f32.mrb[0].mxu0
        %v1898 = vpop.f32.mrb[0].mxu0
        %v1899 = vadd.f32 %v1731, %v1898
        %v1900 = vpop.f32.mrb[0].mxu0
        %1901 = vdwg.mxu0
        %1902 = vmax.xlane.f32.xlu0 %v1840
        %v1903 = vpop.xlane.xlu0 %1902
        %1904 = vmax.xlane.f32.xlu0 %v1843
        %v1905 = vpop.xlane.xlu0 %1904
        %1906 = vmax.xlane.f32.xlu0 %v1848
        %v1907 = vpop.xlane.xlu0 %1906
        %1908 = vmax.xlane.f32.xlu0 %v1851
        %v1909 = vpop.xlane.xlu0 %1908
        %1910 = vmax.xlane.f32.xlu0 %v1856
        %v1911 = vpop.xlane.xlu0 %1910
        %1912 = vmax.xlane.f32.xlu0 %v1859
        %v1913 = vpop.xlane.xlu0 %1912
        %1914 = vmax.xlane.f32.xlu0 %v1864
        %v1915 = vpop.xlane.xlu0 %1914
        %1916 = vmax.xlane.f32.xlu0 %v1867
        %v1917 = vpop.xlane.xlu0 %1916
        %1918 = vmax.xlane.f32.xlu0 %v1872
        %v1919 = vpop.xlane.xlu0 %1918
        %1920 = vmax.xlane.f32.xlu0 %v1875
        %v1921 = vpop.xlane.xlu0 %1920
        %1922 = vmax.xlane.f32.xlu0 %v1880
        %v1923 = vpop.xlane.xlu0 %1922
        %1924 = vmax.xlane.f32.xlu0 %v1883
        %v1925 = vpop.xlane.xlu0 %1924
        %1926 = vmax.xlane.f32.xlu0 %v1888
        %v1927 = vpop.xlane.xlu0 %1926
        %1928 = vmax.xlane.f32.xlu0 %v1891
        %v1929 = vpop.xlane.xlu0 %1928
        %1930 = vmax.xlane.f32.xlu0 %v1896
        %v1931 = vpop.xlane.xlu0 %1930
        %1932 = vmax.xlane.f32.xlu0 %v1899
        %v1933 = vpop.xlane.xlu0 %1932
        %v1934 = vsub.f32 %v1840, %v1903
        %v1935 = vsub.f32 %v1843, %v1905
        %v1936 = vsub.f32 %v1848, %v1907
        %v1937 = vsub.f32 %v1851, %v1909
        %v1938 = vsub.f32 %v1856, %v1911
        %v1939 = vsub.f32 %v1859, %v1913
        %v1940 = vsub.f32 %v1864, %v1915
        %v1941 = vsub.f32 %v1867, %v1917
        %v1942 = vsub.f32 %v1872, %v1919
        %v1943 = vsub.f32 %v1875, %v1921
        %v1944 = vsub.f32 %v1880, %v1923
        %v1945 = vsub.f32 %v1883, %v1925
        %v1946 = vsub.f32 %v1888, %v1927
        %v1947 = vsub.f32 %v1891, %v1929
        %v1948 = vsub.f32 %v1896, %v1931
        %v1949 = vsub.f32 %v1899, %v1933
        %v1950 = vmul.f32 %v1934, 1.442695
        %v1951 = vpow.pop %v1950
        %v1952 = vmul.f32 %v1935, 1.442695
        %v1953 = vpow.pop %v1952
        %v1954 = vmul.f32 %v1936, 1.442695
        %v1955 = vpow.pop %v1954
        %v1956 = vmul.f32 %v1937, 1.442695
        %v1957 = vpow.pop %v1956
        %v1958 = vmul.f32 %v1938, 1.442695
        %v1959 = vpow.pop %v1958
        %v1960 = vmul.f32 %v1939, 1.442695
        %v1961 = vpow.pop %v1960
        %v1962 = vmul.f32 %v1940, 1.442695
        %v1963 = vpow.pop %v1962
        %v1964 = vmul.f32 %v1941, 1.442695
        %v1965 = vpow.pop %v1964
        %v1966 = vmul.f32 %v1942, 1.442695
        %v1967 = vpow.pop %v1966
        %v1968 = vmul.f32 %v1943, 1.442695
        %v1969 = vpow.pop %v1968
        %v1970 = vmul.f32 %v1944, 1.442695
        %v1971 = vpow.pop %v1970
        %v1972 = vmul.f32 %v1945, 1.442695
        %v1973 = vpow.pop %v1972
        %v1974 = vmul.f32 %v1946, 1.442695
        %v1975 = vpow.pop %v1974
        %v1976 = vmul.f32 %v1947, 1.442695
        %v1977 = vpow.pop %v1976
        %v1978 = vmul.f32 %v1948, 1.442695
        %v1979 = vpow.pop %v1978
        %v1980 = vmul.f32 %v1949, 1.442695
        %v1981 = vpow.pop %v1980
        %1982 = vadd.xlane.f32.xlu0 %v1951
        %v1983 = vpop.xlane.xlu0 %1982
        %1984 = vadd.xlane.f32.xlu0 %v1953
        %v1985 = vpop.xlane.xlu0 %1984
        %1986 = vadd.xlane.f32.xlu0 %v1955
        %v1987 = vpop.xlane.xlu0 %1986
        %1988 = vadd.xlane.f32.xlu0 %v1957
        %v1989 = vpop.xlane.xlu0 %1988
        %1990 = vadd.xlane.f32.xlu0 %v1959
        %v1991 = vpop.xlane.xlu0 %1990
        %1992 = vadd.xlane.f32.xlu0 %v1961
        %v1993 = vpop.xlane.xlu0 %1992
        %1994 = vadd.xlane.f32.xlu0 %v1963
        %v1995 = vpop.xlane.xlu0 %1994
        %1996 = vadd.xlane.f32.xlu0 %v1965
        %v1997 = vpop.xlane.xlu0 %1996
        %1998 = vadd.xlane.f32.xlu0 %v1967
        %v1999 = vpop.xlane.xlu0 %1998
        %2000 = vadd.xlane.f32.xlu0 %v1969
        %v2001 = vpop.xlane.xlu0 %2000
        %2002 = vadd.xlane.f32.xlu0 %v1971
        %v2003 = vpop.xlane.xlu0 %2002
        %2004 = vadd.xlane.f32.xlu0 %v1973
        %v2005 = vpop.xlane.xlu0 %2004
        %2006 = vadd.xlane.f32.xlu0 %v1975
        %v2007 = vpop.xlane.xlu0 %2006
        %2008 = vadd.xlane.f32.xlu0 %v1977
        %v2009 = vpop.xlane.xlu0 %2008
        %2010 = vadd.xlane.f32.xlu0 %v1979
        %v2011 = vpop.xlane.xlu0 %2010
        %2012 = vadd.xlane.f32.xlu0 %v1981
        %v2013 = vpop.xlane.xlu0 %2012
        %v2014 = vrcp.pop %v1983
        %v2015 = vrcp.pop %v1985
        %v2016 = vrcp.pop %v1987
        %v2017 = vrcp.pop %v1989
        %v2018 = vrcp.pop %v1991
        %v2019 = vrcp.pop %v1993
        %v2020 = vrcp.pop %v1995
        %v2021 = vrcp.pop %v1997
        %v2022 = vrcp.pop %v1999
        %v2023 = vrcp.pop %v2001
        %v2024 = vrcp.pop %v2003
        %v2025 = vrcp.pop %v2005
        %v2026 = vrcp.pop %v2007
        %v2027 = vrcp.pop %v2009
        %v2028 = vrcp.pop %v2011
        %v2029 = vrcp.pop %v2013
        %v2030 = vmul.f32 %v1951, %v2014
        %v2031 = vmul.f32 %v1953, %v2015
        %v2032 = vmul.f32 %v1955, %v2016
        %v2033 = vmul.f32 %v1957, %v2017
        %v2034 = vmul.f32 %v1959, %v2018
        %v2035 = vmul.f32 %v1961, %v2019
        %v2036 = vmul.f32 %v1963, %v2020
        %v2037 = vmul.f32 %v1965, %v2021
        %v2038 = vmul.f32 %v1967, %v2022
        %v2039 = vmul.f32 %v1969, %v2023
        %v2040 = vmul.f32 %v1971, %v2024
        %v2041 = vmul.f32 %v1973, %v2025
        %v2042 = vmul.f32 %v1975, %v2026
        %v2043 = vmul.f32 %v1977, %v2027
        %v2044 = vmul.f32 %v1979, %v2028
        %v2045 = vmul.f32 %v1981, %v2029
        %v2046 = vpack.c.bf16 %v2031, %v2030
        %v2047 = vpack.c.bf16 %v2033, %v2032
        %v2048 = vpack.c.bf16 %v2035, %v2034
        %v2049 = vpack.c.bf16 %v2037, %v2036
        %v2050 = vpack.c.bf16 %v2039, %v2038
        %v2051 = vpack.c.bf16 %v2041, %v2040
        %v2052 = vpack.c.bf16 %v2043, %v2042
        %v2053 = vpack.c.bf16 %v2045, %v2044
        %2054 = vmatprep.subr.bf16.mxu0 0
        %2055 = vmatpush1.bf16.msra.mxu0 %v1748
        %2056 = vmatprep.subr.bf16.mxu0 0
        %2057 = vmatpush1.bf16.msra.mxu0 %v1749
        %2058 = vmatprep.subr.bf16.mxu0 0
        %2059 = vmatpush1.bf16.msra.mxu0 %v1750
        %2060 = vmatprep.subr.bf16.mxu0 0
        %2061 = vmatpush1.bf16.msra.mxu0 %v1751
        %2062 = vmatprep.subr.bf16.mxu0 0
        %2063 = vmatpush1.bf16.msra.mxu0 %v1752
        %2064 = vmatprep.subr.bf16.mxu0 0
        %2065 = vmatpush1.bf16.msra.mxu0 %v1753
        %2066 = vmatprep.subr.bf16.mxu0 0
        %2067 = vmatpush1.bf16.msra.mxu0 %v1754
        %2068 = vmatprep.subr.bf16.mxu0 0
        %2069 = vmatpush1.bf16.msra.mxu0 %v1755
        %2070 = vmatprep.subr.bf16.mxu0 0
        %2071 = vmatpush1.bf16.msra.mxu0 0
        %2072 = vmatprep.subr.bf16.mxu0 0
        %2073 = vmatpush1.bf16.msra.mxu0 0
        %2074 = vmatprep.subr.bf16.mxu0 0
        %2075 = vmatpush1.bf16.msra.mxu0 0
        %2076 = vmatprep.subr.bf16.mxu0 0
        %2077 = vmatpush1.bf16.msra.mxu0 0
        %2078 = vmatprep.subr.bf16.mxu0 0
        %2079 = vmatpush1.bf16.msra.mxu0 0
        %2080 = vmatprep.subr.bf16.mxu0 0
        %2081 = vmatpush1.bf16.msra.mxu0 0
        %2082 = vmatprep.subr.bf16.mxu0 0
        %2083 = vmatpush1.bf16.msra.mxu0 0
        %2084 = vmatprep.subr.bf16.mxu0 0
        %2085 = vmatpush1.bf16.msra.mxu0 0
        %2086 = vmatprep.mubr.bf16.mxu0 0
        %2087 = vmatmul.mubr.bf16.gmra.mrb[0].mxu0 %v2046
        %v2088 = vpop.f32.mrb[0].mxu0
        %v2089 = vadd.f32 0.0, %v2088
        %v2090 = vpop.f32.mrb[0].mxu0
        %v2091 = vpop.f32.mrb[0].mxu0
        %v2092 = vadd.f32 0.0, %v2091
        %v2093 = vpop.f32.mrb[0].mxu0
        %2094 = vmatprep.mubr.bf16.mxu0 0
        %2095 = vmatmul.mubr.bf16.gmra.mrb[0].mxu0 %v2047
        %v2096 = vpop.f32.mrb[0].mxu0
        %v2097 = vadd.f32 0.0, %v2096
        %v2098 = vpop.f32.mrb[0].mxu0
        %v2099 = vpop.f32.mrb[0].mxu0
        %v2100 = vadd.f32 0.0, %v2099
        %v2101 = vpop.f32.mrb[0].mxu0
        %2102 = vmatprep.mubr.bf16.mxu0 0
        %2103 = vmatmul.mubr.bf16.gmra.mrb[0].mxu0 %v2048
        %v2104 = vpop.f32.mrb[0].mxu0
        %v2105 = vadd.f32 0.0, %v2104
        %v2106 = vpop.f32.mrb[0].mxu0
        %v2107 = vpop.f32.mrb[0].mxu0
        %v2108 = vadd.f32 0.0, %v2107
        %v2109 = vpop.f32.mrb[0].mxu0
        %2110 = vmatprep.mubr.bf16.mxu0 0
        %2111 = vmatmul.mubr.bf16.gmra.mrb[0].mxu0 %v2049
        %v2112 = vpop.f32.mrb[0].mxu0
        %v2113 = vadd.f32 0.0, %v2112
        %v2114 = vpop.f32.mrb[0].mxu0
        %v2115 = vpop.f32.mrb[0].mxu0
        %v2116 = vadd.f32 0.0, %v2115
        %v2117 = vpop.f32.mrb[0].mxu0
        %2118 = vmatprep.mubr.bf16.mxu0 0
        %2119 = vmatmul.mubr.bf16.gmra.mrb[0].mxu0 %v2050
        %v2120 = vpop.f32.mrb[0].mxu0
        %v2121 = vadd.f32 0.0, %v2120
        %v2122 = vpop.f32.mrb[0].mxu0
        %v2123 = vpop.f32.mrb[0].mxu0
        %v2124 = vadd.f32 0.0, %v2123
        %v2125 = vpop.f32.mrb[0].mxu0
        %2126 = vmatprep.mubr.bf16.mxu0 0
        %2127 = vmatmul.mubr.bf16.gmra.mrb[0].mxu0 %v2051
        %v2128 = vpop.f32.mrb[0].mxu0
        %v2129 = vadd.f32 0.0, %v2128
        %v2130 = vpop.f32.mrb[0].mxu0
        %v2131 = vpop.f32.mrb[0].mxu0
        %v2132 = vadd.f32 0.0, %v2131
        %v2133 = vpop.f32.mrb[0].mxu0
        %2134 = vmatprep.mubr.bf16.mxu0 0
        %2135 = vmatmul.mubr.bf16.gmra.mrb[0].mxu0 %v2052
        %v2136 = vpop.f32.mrb[0].mxu0
        %v2137 = vadd.f32 0.0, %v2136
        %v2138 = vpop.f32.mrb[0].mxu0
        %v2139 = vpop.f32.mrb[0].mxu0
        %v2140 = vadd.f32 0.0, %v2139
        %v2141 = vpop.f32.mrb[0].mxu0
        %2142 = vmatprep.mubr.bf16.mxu0 0
        %2143 = vmatmul.mubr.bf16.gmra.mrb[0].mxu0 %v2053
        %v2144 = vpop.f32.mrb[0].mxu0
        %v2145 = vadd.f32 0.0, %v2144
        %v2146 = vpop.f32.mrb[0].mxu0
        %v2147 = vpop.f32.mrb[0].mxu0
        %v2148 = vadd.f32 0.0, %v2147
        %v2149 = vpop.f32.mrb[0].mxu0
        %2150 = vdwg.mxu0
        %2159 = vrot.lane.b32.xlu0 %v1732, 96
        %v2160 = vpop.permute.xlu0 %2159
        %2161 = vrot.lane.b32.xlu0 %v1733, 96
        %v2162 = vpop.permute.xlu0 %2161
        %2163 = vrot.lane.b32.xlu0 %v1734, 96
        %v2164 = vpop.permute.xlu0 %2163
        %2165 = vrot.lane.b32.xlu0 %v1735, 96
        %v2166 = vpop.permute.xlu0 %2165
        %2167 = vrot.lane.b32.xlu0 %v1736, 96
        %v2168 = vpop.permute.xlu0 %2167
        %2169 = vrot.lane.b32.xlu0 %v1737, 96
        %v2170 = vpop.permute.xlu0 %2169
        %2171 = vrot.lane.b32.xlu0 %v1738, 96
        %v2172 = vpop.permute.xlu0 %2171
        %2173 = vrot.lane.b32.xlu0 %v1739, 96
        %v2174 = vpop.permute.xlu0 %2173
        %2183 = vrot.lane.b32.xlu0 %v1740, 96
        %v2184 = vpop.permute.xlu0 %2183
        %2185 = vrot.lane.b32.xlu0 %v1741, 96
        %v2186 = vpop.permute.xlu0 %2185
        %2187 = vrot.lane.b32.xlu0 %v1742, 96
        %v2188 = vpop.permute.xlu0 %2187
        %2189 = vrot.lane.b32.xlu0 %v1743, 96
        %v2190 = vpop.permute.xlu0 %2189
        %2191 = vrot.lane.b32.xlu0 %v1744, 96
        %v2192 = vpop.permute.xlu0 %2191
        %2193 = vrot.lane.b32.xlu0 %v1745, 96
        %v2194 = vpop.permute.xlu0 %2193
        %2195 = vrot.lane.b32.xlu0 %v1746, 96
        %v2196 = vpop.permute.xlu0 %2195
        %2197 = vrot.lane.b32.xlu0 %v1747, 96
        %v2198 = vpop.permute.xlu0 %2197
        %v2200 = vsel %vm1756, %v2160, 0
        %v2203 = vsel %vm1756, %v2162, 0
        %v2206 = vsel %vm1756, %v2164, 0
        %v2209 = vsel %vm1756, %v2166, 0
        %v2212 = vsel %vm1756, %v2168, 0
        %v2215 = vsel %vm1756, %v2170, 0
        %v2218 = vsel %vm1756, %v2172, 0
        %v2221 = vsel %vm1756, %v2174, 0
        %v2224 = vsel %vm1756, %v2184, 0
        %v2227 = vsel %vm1756, %v2186, 0
        %v2230 = vsel %vm1756, %v2188, 0
        %v2233 = vsel %vm1756, %v2190, 0
        %v2236 = vsel %vm1756, %v2192, 0
        %v2239 = vsel %vm1756, %v2194, 0
        %v2242 = vsel %vm1756, %v2196, 0
        %v2245 = vsel %vm1756, %v2198, 0
        %2247 = vmatprep.subr.bf16.mxu0 0
        %2248 = vmatpush1.bf16.xpose.msra.mxu0 %v2224
        %2249 = vmatprep.subr.bf16.mxu0 0
        %2250 = vmatpush1.bf16.xpose.msra.mxu0 %v2227
        %2251 = vmatprep.subr.bf16.mxu0 0
        %2252 = vmatpush1.bf16.xpose.msra.mxu0 %v2230
        %2253 = vmatprep.subr.bf16.mxu0 0
        %2254 = vmatpush1.bf16.xpose.msra.mxu0 %v2233
        %2255 = vmatprep.subr.bf16.mxu0 0
        %2256 = vmatpush1.bf16.xpose.msra.mxu0 %v2236
        %2257 = vmatprep.subr.bf16.mxu0 0
        %2258 = vmatpush1.bf16.xpose.msra.mxu0 %v2239
        %2259 = vmatprep.subr.bf16.mxu0 0
        %2260 = vmatpush1.bf16.xpose.msra.mxu0 %v2242
        %2261 = vmatprep.subr.bf16.mxu0 0
        %2262 = vmatpush1.bf16.xpose.msra.mxu0 %v2245
        %2263 = vmatprep.subr.bf16.mxu0 0
        %2264 = vmatpush1.bf16.xpose.msra.mxu0 0
        %2265 = vmatprep.subr.bf16.mxu0 0
        %2266 = vmatpush1.bf16.xpose.msra.mxu0 0
        %2267 = vmatprep.subr.bf16.mxu0 0
        %2268 = vmatpush1.bf16.xpose.msra.mxu0 0
        %2269 = vmatprep.subr.bf16.mxu0 0
        %2270 = vmatpush1.bf16.xpose.msra.mxu0 0
        %2271 = vmatprep.subr.bf16.mxu0 0
        %2272 = vmatpush1.bf16.xpose.msra.mxu0 0
        %2273 = vmatprep.subr.bf16.mxu0 0
        %2274 = vmatpush1.bf16.xpose.msra.mxu0 0
        %2275 = vmatprep.subr.bf16.mxu0 0
        %2276 = vmatpush1.bf16.xpose.msra.mxu0 0
        %2277 = vmatprep.subr.bf16.mxu0 0
        %2278 = vmatpush1.bf16.xpose.msra.mxu0 0
        %2279 = vmatprep.mubr.bf16.mxu0 0
        %2280 = vmatmul.mubr.bf16.gmra.mrb[0].mxu0 %v2200
        %v2281 = vpop.f32.mrb[0].mxu0
        %v2282 = vadd.f32 %v1716, %v2281
        %v2283 = vpop.f32.mrb[0].mxu0
        %v2284 = vpop.f32.mrb[0].mxu0
        %v2285 = vadd.f32 %v1717, %v2284
        %v2286 = vpop.f32.mrb[0].mxu0
        %2287 = vmatprep.mubr.bf16.mxu0 0
        %2288 = vmatmul.mubr.bf16.gmra.mrb[0].mxu0 %v2203
        %v2289 = vpop.f32.mrb[0].mxu0
        %v2290 = vadd.f32 %v1718, %v2289
        %v2291 = vpop.f32.mrb[0].mxu0
        %v2292 = vpop.f32.mrb[0].mxu0
        %v2293 = vadd.f32 %v1719, %v2292
        %v2294 = vpop.f32.mrb[0].mxu0
        %2295 = vmatprep.mubr.bf16.mxu0 0
        %2296 = vmatmul.mubr.bf16.gmra.mrb[0].mxu0 %v2206
        %v2297 = vpop.f32.mrb[0].mxu0
        %v2298 = vadd.f32 %v1720, %v2297
        %v2299 = vpop.f32.mrb[0].mxu0
        %v2300 = vpop.f32.mrb[0].mxu0
        %v2301 = vadd.f32 %v1721, %v2300
        %v2302 = vpop.f32.mrb[0].mxu0
        %2303 = vmatprep.mubr.bf16.mxu0 0
        %2304 = vmatmul.mubr.bf16.gmra.mrb[0].mxu0 %v2209
        %v2305 = vpop.f32.mrb[0].mxu0
        %v2306 = vadd.f32 %v1722, %v2305
        %v2307 = vpop.f32.mrb[0].mxu0
        %v2308 = vpop.f32.mrb[0].mxu0
        %v2309 = vadd.f32 %v1723, %v2308
        %v2310 = vpop.f32.mrb[0].mxu0
        %2311 = vmatprep.mubr.bf16.mxu0 0
        %2312 = vmatmul.mubr.bf16.gmra.mrb[0].mxu0 %v2212
        %v2313 = vpop.f32.mrb[0].mxu0
        %v2314 = vadd.f32 %v1724, %v2313
        %v2315 = vpop.f32.mrb[0].mxu0
        %v2316 = vpop.f32.mrb[0].mxu0
        %v2317 = vadd.f32 %v1725, %v2316
        %v2318 = vpop.f32.mrb[0].mxu0
        %2319 = vmatprep.mubr.bf16.mxu0 0
        %2320 = vmatmul.mubr.bf16.gmra.mrb[0].mxu0 %v2215
        %v2321 = vpop.f32.mrb[0].mxu0
        %v2322 = vadd.f32 %v1726, %v2321
        %v2323 = vpop.f32.mrb[0].mxu0
        %v2324 = vpop.f32.mrb[0].mxu0
        %v2325 = vadd.f32 %v1727, %v2324
        %v2326 = vpop.f32.mrb[0].mxu0
        %2327 = vmatprep.mubr.bf16.mxu0 0
        %2328 = vmatmul.mubr.bf16.gmra.mrb[0].mxu0 %v2218
        %v2329 = vpop.f32.mrb[0].mxu0
        %v2330 = vadd.f32 %v1728, %v2329
        %v2331 = vpop.f32.mrb[0].mxu0
        %v2332 = vpop.f32.mrb[0].mxu0
        %v2333 = vadd.f32 %v1729, %v2332
        %v2334 = vpop.f32.mrb[0].mxu0
        %2335 = vmatprep.mubr.bf16.mxu0 0
        %2336 = vmatmul.mubr.bf16.gmra.mrb[0].mxu0 %v2221
        %v2337 = vpop.f32.mrb[0].mxu0
        %v2338 = vadd.f32 %v1730, %v2337
        %v2339 = vpop.f32.mrb[0].mxu0
        %v2340 = vpop.f32.mrb[0].mxu0
        %v2341 = vadd.f32 %v1731, %v2340
        %v2342 = vpop.f32.mrb[0].mxu0
        %2343 = vdwg.mxu0
        %2344 = vmax.xlane.f32.xlu0 %v2282
        %v2345 = vpop.xlane.xlu0 %2344
        %2346 = vmax.xlane.f32.xlu0 %v2285
        %v2347 = vpop.xlane.xlu0 %2346
        %2348 = vmax.xlane.f32.xlu0 %v2290
        %v2349 = vpop.xlane.xlu0 %2348
        %2350 = vmax.xlane.f32.xlu0 %v2293
        %v2351 = vpop.xlane.xlu0 %2350
        %2352 = vmax.xlane.f32.xlu0 %v2298
        %v2353 = vpop.xlane.xlu0 %2352
        %2354 = vmax.xlane.f32.xlu0 %v2301
        %v2355 = vpop.xlane.xlu0 %2354
        %2356 = vmax.xlane.f32.xlu0 %v2306
        %v2357 = vpop.xlane.xlu0 %2356
        %2358 = vmax.xlane.f32.xlu0 %v2309
        %v2359 = vpop.xlane.xlu0 %2358
        %2360 = vmax.xlane.f32.xlu0 %v2314
        %v2361 = vpop.xlane.xlu0 %2360
        %2362 = vmax.xlane.f32.xlu0 %v2317
        %v2363 = vpop.xlane.xlu0 %2362
        %2364 = vmax.xlane.f32.xlu0 %v2322
        %v2365 = vpop.xlane.xlu0 %2364
        %2366 = vmax.xlane.f32.xlu0 %v2325
        %v2367 = vpop.xlane.xlu0 %2366
        %2368 = vmax.xlane.f32.xlu0 %v2330
        %v2369 = vpop.xlane.xlu0 %2368
        %2370 = vmax.xlane.f32.xlu0 %v2333
        %v2371 = vpop.xlane.xlu0 %2370
        %2372 = vmax.xlane.f32.xlu0 %v2338
        %v2373 = vpop.xlane.xlu0 %2372
        %2374 = vmax.xlane.f32.xlu0 %v2341
        %v2375 = vpop.xlane.xlu0 %2374
        %v2376 = vsub.f32 %v2282, %v2345
        %v2377 = vsub.f32 %v2285, %v2347
        %v2378 = vsub.f32 %v2290, %v2349
        %v2379 = vsub.f32 %v2293, %v2351
        %v2380 = vsub.f32 %v2298, %v2353
        %v2381 = vsub.f32 %v2301, %v2355
        %v2382 = vsub.f32 %v2306, %v2357
        %v2383 = vsub.f32 %v2309, %v2359
        %v2384 = vsub.f32 %v2314, %v2361
        %v2385 = vsub.f32 %v2317, %v2363
        %v2386 = vsub.f32 %v2322, %v2365
        %v2387 = vsub.f32 %v2325, %v2367
        %v2388 = vsub.f32 %v2330, %v2369
        %v2389 = vsub.f32 %v2333, %v2371
        %v2390 = vsub.f32 %v2338, %v2373
        %v2391 = vsub.f32 %v2341, %v2375
        %v2392 = vmul.f32 %v2376, 1.442695
        %v2393 = vpow.pop %v2392
        %v2394 = vmul.f32 %v2377, 1.442695
        %v2395 = vpow.pop %v2394
        %v2396 = vmul.f32 %v2378, 1.442695
        %v2397 = vpow.pop %v2396
        %v2398 = vmul.f32 %v2379, 1.442695
        %v2399 = vpow.pop %v2398
        %v2400 = vmul.f32 %v2380, 1.442695
        %v2401 = vpow.pop %v2400
        %v2402 = vmul.f32 %v2381, 1.442695
        %v2403 = vpow.pop %v2402
        %v2404 = vmul.f32 %v2382, 1.442695
        %v2405 = vpow.pop %v2404
        %v2406 = vmul.f32 %v2383, 1.442695
        %v2407 = vpow.pop %v2406
        %v2408 = vmul.f32 %v2384, 1.442695
        %v2409 = vpow.pop %v2408
        %v2410 = vmul.f32 %v2385, 1.442695
        %v2411 = vpow.pop %v2410
        %v2412 = vmul.f32 %v2386, 1.442695
        %v2413 = vpow.pop %v2412
        %v2414 = vmul.f32 %v2387, 1.442695
        %v2415 = vpow.pop %v2414
        %v2416 = vmul.f32 %v2388, 1.442695
        %v2417 = vpow.pop %v2416
        %v2418 = vmul.f32 %v2389, 1.442695
        %v2419 = vpow.pop %v2418
        %v2420 = vmul.f32 %v2390, 1.442695
        %v2421 = vpow.pop %v2420
        %v2422 = vmul.f32 %v2391, 1.442695
        %v2423 = vpow.pop %v2422
        %2424 = vadd.xlane.f32.xlu0 %v2393
        %v2425 = vpop.xlane.xlu0 %2424
        %2426 = vadd.xlane.f32.xlu0 %v2395
        %v2427 = vpop.xlane.xlu0 %2426
        %2428 = vadd.xlane.f32.xlu0 %v2397
        %v2429 = vpop.xlane.xlu0 %2428
        %2430 = vadd.xlane.f32.xlu0 %v2399
        %v2431 = vpop.xlane.xlu0 %2430
        %2432 = vadd.xlane.f32.xlu0 %v2401
        %v2433 = vpop.xlane.xlu0 %2432
        %2434 = vadd.xlane.f32.xlu0 %v2403
        %v2435 = vpop.xlane.xlu0 %2434
        %2436 = vadd.xlane.f32.xlu0 %v2405
        %v2437 = vpop.xlane.xlu0 %2436
        %2438 = vadd.xlane.f32.xlu0 %v2407
        %v2439 = vpop.xlane.xlu0 %2438
        %2440 = vadd.xlane.f32.xlu0 %v2409
        %v2441 = vpop.xlane.xlu0 %2440
        %2442 = vadd.xlane.f32.xlu0 %v2411
        %v2443 = vpop.xlane.xlu0 %2442
        %2444 = vadd.xlane.f32.xlu0 %v2413
        %v2445 = vpop.xlane.xlu0 %2444
        %2446 = vadd.xlane.f32.xlu0 %v2415
        %v2447 = vpop.xlane.xlu0 %2446
        %2448 = vadd.xlane.f32.xlu0 %v2417
        %v2449 = vpop.xlane.xlu0 %2448
        %2450 = vadd.xlane.f32.xlu0 %v2419
        %v2451 = vpop.xlane.xlu0 %2450
        %2452 = vadd.xlane.f32.xlu0 %v2421
        %v2453 = vpop.xlane.xlu0 %2452
        %2454 = vadd.xlane.f32.xlu0 %v2423
        %v2455 = vpop.xlane.xlu0 %2454
        %v2456 = vrcp.pop %v2425
        %v2457 = vrcp.pop %v2427
        %v2458 = vrcp.pop %v2429
        %v2459 = vrcp.pop %v2431
        %v2460 = vrcp.pop %v2433
        %v2461 = vrcp.pop %v2435
        %v2462 = vrcp.pop %v2437
        %v2463 = vrcp.pop %v2439
        %v2464 = vrcp.pop %v2441
        %v2465 = vrcp.pop %v2443
        %v2466 = vrcp.pop %v2445
        %v2467 = vrcp.pop %v2447
        %v2468 = vrcp.pop %v2449
        %v2469 = vrcp.pop %v2451
        %v2470 = vrcp.pop %v2453
        %v2471 = vrcp.pop %v2455
        %v2472 = vmul.f32 %v2393, %v2456
        %v2473 = vmul.f32 %v2395, %v2457
        %v2474 = vmul.f32 %v2397, %v2458
        %v2475 = vmul.f32 %v2399, %v2459
        %v2476 = vmul.f32 %v2401, %v2460
        %v2477 = vmul.f32 %v2403, %v2461
        %v2478 = vmul.f32 %v2405, %v2462
        %v2479 = vmul.f32 %v2407, %v2463
        %v2480 = vmul.f32 %v2409, %v2464
        %v2481 = vmul.f32 %v2411, %v2465
        %v2482 = vmul.f32 %v2413, %v2466
        %v2483 = vmul.f32 %v2415, %v2467
        %v2484 = vmul.f32 %v2417, %v2468
        %v2485 = vmul.f32 %v2419, %v2469
        %v2486 = vmul.f32 %v2421, %v2470
        %v2487 = vmul.f32 %v2423, %v2471
        %v2488 = vpack.c.bf16 %v2473, %v2472
        %v2489 = vpack.c.bf16 %v2475, %v2474
        %v2490 = vpack.c.bf16 %v2477, %v2476
        %v2491 = vpack.c.bf16 %v2479, %v2478
        %v2492 = vpack.c.bf16 %v2481, %v2480
        %v2493 = vpack.c.bf16 %v2483, %v2482
        %v2494 = vpack.c.bf16 %v2485, %v2484
        %v2495 = vpack.c.bf16 %v2487, %v2486
        %2504 = vrot.lane.b32.xlu0 %v1748, 96
        %v2505 = vpop.permute.xlu0 %2504
        %2506 = vrot.lane.b32.xlu0 %v1749, 96
        %v2507 = vpop.permute.xlu0 %2506
        %2508 = vrot.lane.b32.xlu0 %v1750, 96
        %v2509 = vpop.permute.xlu0 %2508
        %2510 = vrot.lane.b32.xlu0 %v1751, 96
        %v2511 = vpop.permute.xlu0 %2510
        %2512 = vrot.lane.b32.xlu0 %v1752, 96
        %v2513 = vpop.permute.xlu0 %2512
        %2514 = vrot.lane.b32.xlu0 %v1753, 96
        %v2515 = vpop.permute.xlu0 %2514
        %2516 = vrot.lane.b32.xlu0 %v1754, 96
        %v2517 = vpop.permute.xlu0 %2516
        %2518 = vrot.lane.b32.xlu0 %v1755, 96
        %v2519 = vpop.permute.xlu0 %2518
        %2528 = vmatprep.subr.bf16.mxu0 0
        %2529 = vmatpush1.bf16.msra.mxu0 %v2505
        %2530 = vmatprep.subr.bf16.mxu0 0
        %2531 = vmatpush1.bf16.msra.mxu0 %v2507
        %2532 = vmatprep.subr.bf16.mxu0 0
        %2533 = vmatpush1.bf16.msra.mxu0 %v2509
        %2534 = vmatprep.subr.bf16.mxu0 0
        %2535 = vmatpush1.bf16.msra.mxu0 %v2511
        %2536 = vmatprep.subr.bf16.mxu0 0
        %2537 = vmatpush1.bf16.msra.mxu0 %v2513
        %2538 = vmatprep.subr.bf16.mxu0 0
        %2539 = vmatpush1.bf16.msra.mxu0 %v2515
        %2540 = vmatprep.subr.bf16.mxu0 0
        %2541 = vmatpush1.bf16.msra.mxu0 %v2517
        %2542 = vmatprep.subr.bf16.mxu0 0
        %2543 = vmatpush1.bf16.msra.mxu0 %v2519
        %2544 = vmatprep.subr.bf16.mxu0 0
        %2545 = vmatpush1.bf16.msra.mxu0 0
        %2546 = vmatprep.subr.bf16.mxu0 0
        %2547 = vmatpush1.bf16.msra.mxu0 0
        %2548 = vmatprep.subr.bf16.mxu0 0
        %2549 = vmatpush1.bf16.msra.mxu0 0
        %2550 = vmatprep.subr.bf16.mxu0 0
        %2551 = vmatpush1.bf16.msra.mxu0 0
        %2552 = vmatprep.subr.bf16.mxu0 0
        %2553 = vmatpush1.bf16.msra.mxu0 0
        %2554 = vmatprep.subr.bf16.mxu0 0
        %2555 = vmatpush1.bf16.msra.mxu0 0
        %2556 = vmatprep.subr.bf16.mxu0 0
        %2557 = vmatpush1.bf16.msra.mxu0 0
        %2558 = vmatprep.subr.bf16.mxu0 0
        %2559 = vmatpush1.bf16.msra.mxu0 0
        %2560 = vmatprep.mubr.bf16.mxu0 0
        %2561 = vmatmul.mubr.bf16.gmra.mrb[0].mxu0 %v2488
        %v2562 = vpop.f32.mrb[0].mxu0
        %v2563 = vadd.f32 0.0, %v2562
        %v2564 = vpop.f32.mrb[0].mxu0
        %v2565 = vpop.f32.mrb[0].mxu0
        %v2566 = vadd.f32 0.0, %v2565
        %v2567 = vpop.f32.mrb[0].mxu0
        %2568 = vmatprep.mubr.bf16.mxu0 0
        %2569 = vmatmul.mubr.bf16.gmra.mrb[0].mxu0 %v2489
        %v2570 = vpop.f32.mrb[0].mxu0
        %v2571 = vadd.f32 0.0, %v2570
        %v2572 = vpop.f32.mrb[0].mxu0
        %v2573 = vpop.f32.mrb[0].mxu0
        %v2574 = vadd.f32 0.0, %v2573
        %v2575 = vpop.f32.mrb[0].mxu0
        %2576 = vmatprep.mubr.bf16.mxu0 0
        %2577 = vmatmul.mubr.bf16.gmra.mrb[0].mxu0 %v2490
        %v2578 = vpop.f32.mrb[0].mxu0
        %v2579 = vadd.f32 0.0, %v2578
        %v2580 = vpop.f32.mrb[0].mxu0
        %v2581 = vpop.f32.mrb[0].mxu0
        %v2582 = vadd.f32 0.0, %v2581
        %v2583 = vpop.f32.mrb[0].mxu0
        %2584 = vmatprep.mubr.bf16.mxu0 0
        %2585 = vmatmul.mubr.bf16.gmra.mrb[0].mxu0 %v2491
        %v2586 = vpop.f32.mrb[0].mxu0
        %v2587 = vadd.f32 0.0, %v2586
        %v2588 = vpop.f32.mrb[0].mxu0
        %v2589 = vpop.f32.mrb[0].mxu0
        %v2590 = vadd.f32 0.0, %v2589
        %v2591 = vpop.f32.mrb[0].mxu0
        %2592 = vmatprep.mubr.bf16.mxu0 0
        %2593 = vmatmul.mubr.bf16.gmra.mrb[0].mxu0 %v2492
        %v2594 = vpop.f32.mrb[0].mxu0
        %v2595 = vadd.f32 0.0, %v2594
        %v2596 = vpop.f32.mrb[0].mxu0
        %v2597 = vpop.f32.mrb[0].mxu0
        %v2598 = vadd.f32 0.0, %v2597
        %v2599 = vpop.f32.mrb[0].mxu0
        %2600 = vmatprep.mubr.bf16.mxu0 0
        %2601 = vmatmul.mubr.bf16.gmra.mrb[0].mxu0 %v2493
        %v2602 = vpop.f32.mrb[0].mxu0
        %v2603 = vadd.f32 0.0, %v2602
        %v2604 = vpop.f32.mrb[0].mxu0
        %v2605 = vpop.f32.mrb[0].mxu0
        %v2606 = vadd.f32 0.0, %v2605
        %v2607 = vpop.f32.mrb[0].mxu0
        %2608 = vmatprep.mubr.bf16.mxu0 0
        %2609 = vmatmul.mubr.bf16.gmra.mrb[0].mxu0 %v2494
        %v2610 = vpop.f32.mrb[0].mxu0
        %v2611 = vadd.f32 0.0, %v2610
        %v2612 = vpop.f32.mrb[0].mxu0
        %v2613 = vpop.f32.mrb[0].mxu0
        %v2614 = vadd.f32 0.0, %v2613
        %v2615 = vpop.f32.mrb[0].mxu0
        %2616 = vmatprep.mubr.bf16.mxu0 0
        %2617 = vmatmul.mubr.bf16.gmra.mrb[0].mxu0 %v2495
        %v2618 = vpop.f32.mrb[0].mxu0
        %v2619 = vadd.f32 0.0, %v2618
        %v2620 = vpop.f32.mrb[0].mxu0
        %v2621 = vpop.f32.mrb[0].mxu0
        %v2622 = vadd.f32 0.0, %v2621
        %v2623 = vpop.f32.mrb[0].mxu0
        %2624 = vdwg.mxu0
        %2625 = vrot.lane.b32.xlu0 %v1732, 64
        %v2626 = vpop.permute.xlu0 %2625
        %2627 = vrot.lane.b32.xlu0 %v1733, 64
        %v2628 = vpop.permute.xlu0 %2627
        %2629 = vrot.lane.b32.xlu0 %v1734, 64
        %v2630 = vpop.permute.xlu0 %2629
        %2631 = vrot.lane.b32.xlu0 %v1735, 64
        %v2632 = vpop.permute.xlu0 %2631
        %2633 = vrot.lane.b32.xlu0 %v1736, 64
        %v2634 = vpop.permute.xlu0 %2633
        %2635 = vrot.lane.b32.xlu0 %v1737, 64
        %v2636 = vpop.permute.xlu0 %2635
        %2637 = vrot.lane.b32.xlu0 %v1738, 64
        %v2638 = vpop.permute.xlu0 %2637
        %2639 = vrot.lane.b32.xlu0 %v1739, 64
        %v2640 = vpop.permute.xlu0 %2639
        %2641 = vrot.lane.b32.xlu0 %v1740, 64
        %v2642 = vpop.permute.xlu0 %2641
        %2643 = vrot.lane.b32.xlu0 %v1741, 64
        %v2644 = vpop.permute.xlu0 %2643
        %2645 = vrot.lane.b32.xlu0 %v1742, 64
        %v2646 = vpop.permute.xlu0 %2645
        %2647 = vrot.lane.b32.xlu0 %v1743, 64
        %v2648 = vpop.permute.xlu0 %2647
        %2649 = vrot.lane.b32.xlu0 %v1744, 64
        %v2650 = vpop.permute.xlu0 %2649
        %2651 = vrot.lane.b32.xlu0 %v1745, 64
        %v2652 = vpop.permute.xlu0 %2651
        %2653 = vrot.lane.b32.xlu0 %v1746, 64
        %v2654 = vpop.permute.xlu0 %2653
        %2655 = vrot.lane.b32.xlu0 %v1747, 64
        %v2656 = vpop.permute.xlu0 %2655
        %v2658 = vsel %vm1756, %v2626, 0
        %v2661 = vsel %vm1756, %v2628, 0
        %v2664 = vsel %vm1756, %v2630, 0
        %v2667 = vsel %vm1756, %v2632, 0
        %v2670 = vsel %vm1756, %v2634, 0
        %v2673 = vsel %vm1756, %v2636, 0
        %v2676 = vsel %vm1756, %v2638, 0
        %v2679 = vsel %vm1756, %v2640, 0
        %v2682 = vsel %vm1756, %v2642, 0
        %v2685 = vsel %vm1756, %v2644, 0
        %v2688 = vsel %vm1756, %v2646, 0
        %v2691 = vsel %vm1756, %v2648, 0
        %v2694 = vsel %vm1756, %v2650, 0
        %v2697 = vsel %vm1756, %v2652, 0
        %v2700 = vsel %vm1756, %v2654, 0
        %v2703 = vsel %vm1756, %v2656, 0
        %2705 = vmatprep.subr.bf16.mxu0 0
        %2706 = vmatpush1.bf16.xpose.msra.mxu0 %v2682
        %2707 = vmatprep.subr.bf16.mxu0 0
        %2708 = vmatpush1.bf16.xpose.msra.mxu0 %v2685
        %2709 = vmatprep.subr.bf16.mxu0 0
        %2710 = vmatpush1.bf16.xpose.msra.mxu0 %v2688
        %2711 = vmatprep.subr.bf16.mxu0 0
        %2712 = vmatpush1.bf16.xpose.msra.mxu0 %v2691
        %2713 = vmatprep.subr.bf16.mxu0 0
        %2714 = vmatpush1.bf16.xpose.msra.mxu0 %v2694
        %2715 = vmatprep.subr.bf16.mxu0 0
        %2716 = vmatpush1.bf16.xpose.msra.mxu0 %v2697
        %2717 = vmatprep.subr.bf16.mxu0 0
        %2718 = vmatpush1.bf16.xpose.msra.mxu0 %v2700
        %2719 = vmatprep.subr.bf16.mxu0 0
        %2720 = vmatpush1.bf16.xpose.msra.mxu0 %v2703
        %2721 = vmatprep.subr.bf16.mxu0 0
        %2722 = vmatpush1.bf16.xpose.msra.mxu0 0
        %2723 = vmatprep.subr.bf16.mxu0 0
        %2724 = vmatpush1.bf16.xpose.msra.mxu0 0
        %2725 = vmatprep.subr.bf16.mxu0 0
        %2726 = vmatpush1.bf16.xpose.msra.mxu0 0
        %2727 = vmatprep.subr.bf16.mxu0 0
        %2728 = vmatpush1.bf16.xpose.msra.mxu0 0
        %2729 = vmatprep.subr.bf16.mxu0 0
        %2730 = vmatpush1.bf16.xpose.msra.mxu0 0
        %2731 = vmatprep.subr.bf16.mxu0 0
        %2732 = vmatpush1.bf16.xpose.msra.mxu0 0
        %2733 = vmatprep.subr.bf16.mxu0 0
        %2734 = vmatpush1.bf16.xpose.msra.mxu0 0
        %2735 = vmatprep.subr.bf16.mxu0 0
        %2736 = vmatpush1.bf16.xpose.msra.mxu0 0
        %2737 = vmatprep.mubr.bf16.mxu0 0
        %2738 = vmatmul.mubr.bf16.gmra.mrb[0].mxu0 %v2658
        %v2739 = vpop.f32.mrb[0].mxu0
        %v2740 = vadd.f32 %v1716, %v2739
        %v2741 = vpop.f32.mrb[0].mxu0
        %v2742 = vpop.f32.mrb[0].mxu0
        %v2743 = vadd.f32 %v1717, %v2742
        %v2744 = vpop.f32.mrb[0].mxu0
        %2745 = vmatprep.mubr.bf16.mxu0 0
        %2746 = vmatmul.mubr.bf16.gmra.mrb[0].mxu0 %v2661
        %v2747 = vpop.f32.mrb[0].mxu0
        %v2748 = vadd.f32 %v1718, %v2747
        %v2749 = vpop.f32.mrb[0].mxu0
        %v2750 = vpop.f32.mrb[0].mxu0
        %v2751 = vadd.f32 %v1719, %v2750
        %v2752 = vpop.f32.mrb[0].mxu0
        %2753 = vmatprep.mubr.bf16.mxu0 0
        %2754 = vmatmul.mubr.bf16.gmra.mrb[0].mxu0 %v2664
        %v2755 = vpop.f32.mrb[0].mxu0
        %v2756 = vadd.f32 %v1720, %v2755
        %v2757 = vpop.f32.mrb[0].mxu0
        %v2758 = vpop.f32.mrb[0].mxu0
        %v2759 = vadd.f32 %v1721, %v2758
        %v2760 = vpop.f32.mrb[0].mxu0
        %2761 = vmatprep.mubr.bf16.mxu0 0
        %2762 = vmatmul.mubr.bf16.gmra.mrb[0].mxu0 %v2667
        %v2763 = vpop.f32.mrb[0].mxu0
        %v2764 = vadd.f32 %v1722, %v2763
        %v2765 = vpop.f32.mrb[0].mxu0
        %v2766 = vpop.f32.mrb[0].mxu0
        %v2767 = vadd.f32 %v1723, %v2766
        %v2768 = vpop.f32.mrb[0].mxu0
        %2769 = vmatprep.mubr.bf16.mxu0 0
        %2770 = vmatmul.mubr.bf16.gmra.mrb[0].mxu0 %v2670
        %v2771 = vpop.f32.mrb[0].mxu0
        %v2772 = vadd.f32 %v1724, %v2771
        %v2773 = vpop.f32.mrb[0].mxu0
        %v2774 = vpop.f32.mrb[0].mxu0
        %v2775 = vadd.f32 %v1725, %v2774
        %v2776 = vpop.f32.mrb[0].mxu0
        %2777 = vmatprep.mubr.bf16.mxu0 0
        %2778 = vmatmul.mubr.bf16.gmra.mrb[0].mxu0 %v2673
        %v2779 = vpop.f32.mrb[0].mxu0
        %v2780 = vadd.f32 %v1726, %v2779
        %v2781 = vpop.f32.mrb[0].mxu0
        %v2782 = vpop.f32.mrb[0].mxu0
        %v2783 = vadd.f32 %v1727, %v2782
        %v2784 = vpop.f32.mrb[0].mxu0
        %2785 = vmatprep.mubr.bf16.mxu0 0
        %2786 = vmatmul.mubr.bf16.gmra.mrb[0].mxu0 %v2676
        %v2787 = vpop.f32.mrb[0].mxu0
        %v2788 = vadd.f32 %v1728, %v2787
        %v2789 = vpop.f32.mrb[0].mxu0
        %v2790 = vpop.f32.mrb[0].mxu0
        %v2791 = vadd.f32 %v1729, %v2790
        %v2792 = vpop.f32.mrb[0].mxu0
        %2793 = vmatprep.mubr.bf16.mxu0 0
        %2794 = vmatmul.mubr.bf16.gmra.mrb[0].mxu0 %v2679
        %v2795 = vpop.f32.mrb[0].mxu0
        %v2796 = vadd.f32 %v1730, %v2795
        %v2797 = vpop.f32.mrb[0].mxu0
        %v2798 = vpop.f32.mrb[0].mxu0
        %v2799 = vadd.f32 %v1731, %v2798
        %v2800 = vpop.f32.mrb[0].mxu0
        %2801 = vdwg.mxu0
        %2802 = vmax.xlane.f32.xlu0 %v2740
        %v2803 = vpop.xlane.xlu0 %2802
        %2804 = vmax.xlane.f32.xlu0 %v2743
        %v2805 = vpop.xlane.xlu0 %2804
        %2806 = vmax.xlane.f32.xlu0 %v2748
        %v2807 = vpop.xlane.xlu0 %2806
        %2808 = vmax.xlane.f32.xlu0 %v2751
        %v2809 = vpop.xlane.xlu0 %2808
        %2810 = vmax.xlane.f32.xlu0 %v2756
        %v2811 = vpop.xlane.xlu0 %2810
        %2812 = vmax.xlane.f32.xlu0 %v2759
        %v2813 = vpop.xlane.xlu0 %2812
        %2814 = vmax.xlane.f32.xlu0 %v2764
        %v2815 = vpop.xlane.xlu0 %2814
        %2816 = vmax.xlane.f32.xlu0 %v2767
        %v2817 = vpop.xlane.xlu0 %2816
        %2818 = vmax.xlane.f32.xlu0 %v2772
        %v2819 = vpop.xlane.xlu0 %2818
        %2820 = vmax.xlane.f32.xlu0 %v2775
        %v2821 = vpop.xlane.xlu0 %2820
        %2822 = vmax.xlane.f32.xlu0 %v2780
        %v2823 = vpop.xlane.xlu0 %2822
        %2824 = vmax.xlane.f32.xlu0 %v2783
        %v2825 = vpop.xlane.xlu0 %2824
        %2826 = vmax.xlane.f32.xlu0 %v2788
        %v2827 = vpop.xlane.xlu0 %2826
        %2828 = vmax.xlane.f32.xlu0 %v2791
        %v2829 = vpop.xlane.xlu0 %2828
        %2830 = vmax.xlane.f32.xlu0 %v2796
        %v2831 = vpop.xlane.xlu0 %2830
        %2832 = vmax.xlane.f32.xlu0 %v2799
        %v2833 = vpop.xlane.xlu0 %2832
        %v2834 = vsub.f32 %v2740, %v2803
        %v2835 = vsub.f32 %v2743, %v2805
        %v2836 = vsub.f32 %v2748, %v2807
        %v2837 = vsub.f32 %v2751, %v2809
        %v2838 = vsub.f32 %v2756, %v2811
        %v2839 = vsub.f32 %v2759, %v2813
        %v2840 = vsub.f32 %v2764, %v2815
        %v2841 = vsub.f32 %v2767, %v2817
        %v2842 = vsub.f32 %v2772, %v2819
        %v2843 = vsub.f32 %v2775, %v2821
        %v2844 = vsub.f32 %v2780, %v2823
        %v2845 = vsub.f32 %v2783, %v2825
        %v2846 = vsub.f32 %v2788, %v2827
        %v2847 = vsub.f32 %v2791, %v2829
        %v2848 = vsub.f32 %v2796, %v2831
        %v2849 = vsub.f32 %v2799, %v2833
        %v2850 = vmul.f32 %v2834, 1.442695
        %v2851 = vpow.pop %v2850
        %v2852 = vmul.f32 %v2835, 1.442695
        %v2853 = vpow.pop %v2852
        %v2854 = vmul.f32 %v2836, 1.442695
        %v2855 = vpow.pop %v2854
        %v2856 = vmul.f32 %v2837, 1.442695
        %v2857 = vpow.pop %v2856
        %v2858 = vmul.f32 %v2838, 1.442695
        %v2859 = vpow.pop %v2858
        %v2860 = vmul.f32 %v2839, 1.442695
        %v2861 = vpow.pop %v2860
        %v2862 = vmul.f32 %v2840, 1.442695
        %v2863 = vpow.pop %v2862
        %v2864 = vmul.f32 %v2841, 1.442695
        %v2865 = vpow.pop %v2864
        %v2866 = vmul.f32 %v2842, 1.442695
        %v2867 = vpow.pop %v2866
        %v2868 = vmul.f32 %v2843, 1.442695
        %v2869 = vpow.pop %v2868
        %v2870 = vmul.f32 %v2844, 1.442695
        %v2871 = vpow.pop %v2870
        %v2872 = vmul.f32 %v2845, 1.442695
        %v2873 = vpow.pop %v2872
        %v2874 = vmul.f32 %v2846, 1.442695
        %v2875 = vpow.pop %v2874
        %v2876 = vmul.f32 %v2847, 1.442695
        %v2877 = vpow.pop %v2876
        %v2878 = vmul.f32 %v2848, 1.442695
        %v2879 = vpow.pop %v2878
        %v2880 = vmul.f32 %v2849, 1.442695
        %v2881 = vpow.pop %v2880
        %2882 = vadd.xlane.f32.xlu0 %v2851
        %v2883 = vpop.xlane.xlu0 %2882
        %2884 = vadd.xlane.f32.xlu0 %v2853
        %v2885 = vpop.xlane.xlu0 %2884
        %2886 = vadd.xlane.f32.xlu0 %v2855
        %v2887 = vpop.xlane.xlu0 %2886
        %2888 = vadd.xlane.f32.xlu0 %v2857
        %v2889 = vpop.xlane.xlu0 %2888
        %2890 = vadd.xlane.f32.xlu0 %v2859
        %v2891 = vpop.xlane.xlu0 %2890
        %2892 = vadd.xlane.f32.xlu0 %v2861
        %v2893 = vpop.xlane.xlu0 %2892
        %2894 = vadd.xlane.f32.xlu0 %v2863
        %v2895 = vpop.xlane.xlu0 %2894
        %2896 = vadd.xlane.f32.xlu0 %v2865
        %v2897 = vpop.xlane.xlu0 %2896
        %2898 = vadd.xlane.f32.xlu0 %v2867
        %v2899 = vpop.xlane.xlu0 %2898
        %2900 = vadd.xlane.f32.xlu0 %v2869
        %v2901 = vpop.xlane.xlu0 %2900
        %2902 = vadd.xlane.f32.xlu0 %v2871
        %v2903 = vpop.xlane.xlu0 %2902
        %2904 = vadd.xlane.f32.xlu0 %v2873
        %v2905 = vpop.xlane.xlu0 %2904
        %2906 = vadd.xlane.f32.xlu0 %v2875
        %v2907 = vpop.xlane.xlu0 %2906
        %2908 = vadd.xlane.f32.xlu0 %v2877
        %v2909 = vpop.xlane.xlu0 %2908
        %2910 = vadd.xlane.f32.xlu0 %v2879
        %v2911 = vpop.xlane.xlu0 %2910
        %2912 = vadd.xlane.f32.xlu0 %v2881
        %v2913 = vpop.xlane.xlu0 %2912
        %v2914 = vrcp.pop %v2883
        %v2915 = vrcp.pop %v2885
        %v2916 = vrcp.pop %v2887
        %v2917 = vrcp.pop %v2889
        %v2918 = vrcp.pop %v2891
        %v2919 = vrcp.pop %v2893
        %v2920 = vrcp.pop %v2895
        %v2921 = vrcp.pop %v2897
        %v2922 = vrcp.pop %v2899
        %v2923 = vrcp.pop %v2901
        %v2924 = vrcp.pop %v2903
        %v2925 = vrcp.pop %v2905
        %v2926 = vrcp.pop %v2907
        %v2927 = vrcp.pop %v2909
        %v2928 = vrcp.pop %v2911
        %v2929 = vrcp.pop %v2913
        %v2930 = vmul.f32 %v2851, %v2914
        %v2931 = vmul.f32 %v2853, %v2915
        %v2932 = vmul.f32 %v2855, %v2916
        %v2933 = vmul.f32 %v2857, %v2917
        %v2934 = vmul.f32 %v2859, %v2918
        %v2935 = vmul.f32 %v2861, %v2919
        %v2936 = vmul.f32 %v2863, %v2920
        %v2937 = vmul.f32 %v2865, %v2921
        %v2938 = vmul.f32 %v2867, %v2922
        %v2939 = vmul.f32 %v2869, %v2923
        %v2940 = vmul.f32 %v2871, %v2924
        %v2941 = vmul.f32 %v2873, %v2925
        %v2942 = vmul.f32 %v2875, %v2926
        %v2943 = vmul.f32 %v2877, %v2927
        %v2944 = vmul.f32 %v2879, %v2928
        %v2945 = vmul.f32 %v2881, %v2929
        %v2946 = vpack.c.bf16 %v2931, %v2930
        %v2947 = vpack.c.bf16 %v2933, %v2932
        %v2948 = vpack.c.bf16 %v2935, %v2934
        %v2949 = vpack.c.bf16 %v2937, %v2936
        %v2950 = vpack.c.bf16 %v2939, %v2938
        %v2951 = vpack.c.bf16 %v2941, %v2940
        %v2952 = vpack.c.bf16 %v2943, %v2942
        %v2953 = vpack.c.bf16 %v2945, %v2944
        %2954 = vrot.lane.b32.xlu0 %v1748, 64
        %v2955 = vpop.permute.xlu0 %2954
        %2956 = vrot.lane.b32.xlu0 %v1749, 64
        %v2957 = vpop.permute.xlu0 %2956
        %2958 = vrot.lane.b32.xlu0 %v1750, 64
        %v2959 = vpop.permute.xlu0 %2958
        %2960 = vrot.lane.b32.xlu0 %v1751, 64
        %v2961 = vpop.permute.xlu0 %2960
        %2962 = vrot.lane.b32.xlu0 %v1752, 64
        %v2963 = vpop.permute.xlu0 %2962
        %2964 = vrot.lane.b32.xlu0 %v1753, 64
        %v2965 = vpop.permute.xlu0 %2964
        %2966 = vrot.lane.b32.xlu0 %v1754, 64
        %v2967 = vpop.permute.xlu0 %2966
        %2968 = vrot.lane.b32.xlu0 %v1755, 64
        %v2969 = vpop.permute.xlu0 %2968
        %2978 = vmatprep.subr.bf16.mxu0 0
        %2979 = vmatpush1.bf16.msra.mxu0 %v2955
        %2980 = vmatprep.subr.bf16.mxu0 0
        %2981 = vmatpush1.bf16.msra.mxu0 %v2957
        %2982 = vmatprep.subr.bf16.mxu0 0
        %2983 = vmatpush1.bf16.msra.mxu0 %v2959
        %2984 = vmatprep.subr.bf16.mxu0 0
        %2985 = vmatpush1.bf16.msra.mxu0 %v2961
        %2986 = vmatprep.subr.bf16.mxu0 0
        %2987 = vmatpush1.bf16.msra.mxu0 %v2963
        %2988 = vmatprep.subr.bf16.mxu0 0
        %2989 = vmatpush1.bf16.msra.mxu0 %v2965
        %2990 = vmatprep.subr.bf16.mxu0 0
        %2991 = vmatpush1.bf16.msra.mxu0 %v2967
        %2992 = vmatprep.subr.bf16.mxu0 0
        %2993 = vmatpush1.bf16.msra.mxu0 %v2969
        %2994 = vmatprep.subr.bf16.mxu0 0
        %2995 = vmatpush1.bf16.msra.mxu0 0
        %2996 = vmatprep.subr.bf16.mxu0 0
        %2997 = vmatpush1.bf16.msra.mxu0 0
        %2998 = vmatprep.subr.bf16.mxu0 0
        %2999 = vmatpush1.bf16.msra.mxu0 0
        %3000 = vmatprep.subr.bf16.mxu0 0
        %3001 = vmatpush1.bf16.msra.mxu0 0
        %3002 = vmatprep.subr.bf16.mxu0 0
        %3003 = vmatpush1.bf16.msra.mxu0 0
        %3004 = vmatprep.subr.bf16.mxu0 0
        %3005 = vmatpush1.bf16.msra.mxu0 0
        %3006 = vmatprep.subr.bf16.mxu0 0
        %3007 = vmatpush1.bf16.msra.mxu0 0
        %3008 = vmatprep.subr.bf16.mxu0 0
        %3009 = vmatpush1.bf16.msra.mxu0 0
        %3010 = vmatprep.mubr.bf16.mxu0 0
        %3011 = vmatmul.mubr.bf16.gmra.mrb[0].mxu0 %v2946
        %v3012 = vpop.f32.mrb[0].mxu0
        %v3013 = vadd.f32 0.0, %v3012
        %v3014 = vpop.f32.mrb[0].mxu0
        %v3015 = vpop.f32.mrb[0].mxu0
        %v3016 = vadd.f32 0.0, %v3015
        %v3017 = vpop.f32.mrb[0].mxu0
        %3018 = vmatprep.mubr.bf16.mxu0 0
        %3019 = vmatmul.mubr.bf16.gmra.mrb[0].mxu0 %v2947
        %v3020 = vpop.f32.mrb[0].mxu0
        %v3021 = vadd.f32 0.0, %v3020
        %v3022 = vpop.f32.mrb[0].mxu0
        %v3023 = vpop.f32.mrb[0].mxu0
        %v3024 = vadd.f32 0.0, %v3023
        %v3025 = vpop.f32.mrb[0].mxu0
        %3026 = vmatprep.mubr.bf16.mxu0 0
        %3027 = vmatmul.mubr.bf16.gmra.mrb[0].mxu0 %v2948
        %v3028 = vpop.f32.mrb[0].mxu0
        %v3029 = vadd.f32 0.0, %v3028
        %v3030 = vpop.f32.mrb[0].mxu0
        %v3031 = vpop.f32.mrb[0].mxu0
        %v3032 = vadd.f32 0.0, %v3031
        %v3033 = vpop.f32.mrb[0].mxu0
        %3034 = vmatprep.mubr.bf16.mxu0 0
        %3035 = vmatmul.mubr.bf16.gmra.mrb[0].mxu0 %v2949
        %v3036 = vpop.f32.mrb[0].mxu0
        %v3037 = vadd.f32 0.0, %v3036
        %v3038 = vpop.f32.mrb[0].mxu0
        %v3039 = vpop.f32.mrb[0].mxu0
        %v3040 = vadd.f32 0.0, %v3039
        %v3041 = vpop.f32.mrb[0].mxu0
        %3042 = vmatprep.mubr.bf16.mxu0 0
        %3043 = vmatmul.mubr.bf16.gmra.mrb[0].mxu0 %v2950
        %v3044 = vpop.f32.mrb[0].mxu0
        %v3045 = vadd.f32 0.0, %v3044
        %v3046 = vpop.f32.mrb[0].mxu0
        %v3047 = vpop.f32.mrb[0].mxu0
        %v3048 = vadd.f32 0.0, %v3047
        %v3049 = vpop.f32.mrb[0].mxu0
        %3050 = vmatprep.mubr.bf16.mxu0 0
        %3051 = vmatmul.mubr.bf16.gmra.mrb[0].mxu0 %v2951
        %v3052 = vpop.f32.mrb[0].mxu0
        %v3053 = vadd.f32 0.0, %v3052
        %v3054 = vpop.f32.mrb[0].mxu0
        %v3055 = vpop.f32.mrb[0].mxu0
        %v3056 = vadd.f32 0.0, %v3055
        %v3057 = vpop.f32.mrb[0].mxu0
        %3058 = vmatprep.mubr.bf16.mxu0 0
        %3059 = vmatmul.mubr.bf16.gmra.mrb[0].mxu0 %v2952
        %v3060 = vpop.f32.mrb[0].mxu0
        %v3061 = vadd.f32 0.0, %v3060
        %v3062 = vpop.f32.mrb[0].mxu0
        %v3063 = vpop.f32.mrb[0].mxu0
        %v3064 = vadd.f32 0.0, %v3063
        %v3065 = vpop.f32.mrb[0].mxu0
        %3066 = vmatprep.mubr.bf16.mxu0 0
        %3067 = vmatmul.mubr.bf16.gmra.mrb[0].mxu0 %v2953
        %v3068 = vpop.f32.mrb[0].mxu0
        %v3069 = vadd.f32 0.0, %v3068
        %v3070 = vpop.f32.mrb[0].mxu0
        %v3071 = vpop.f32.mrb[0].mxu0
        %v3072 = vadd.f32 0.0, %v3071
        %v3073 = vpop.f32.mrb[0].mxu0
        %3074 = vdwg.mxu0
        %3075 = vrot.lane.b32.xlu0 %v1732, 32
        %v3076 = vpop.permute.xlu0 %3075
        %3077 = vrot.lane.b32.xlu0 %v1733, 32
        %v3078 = vpop.permute.xlu0 %3077
        %3079 = vrot.lane.b32.xlu0 %v1734, 32
        %v3080 = vpop.permute.xlu0 %3079
        %3081 = vrot.lane.b32.xlu0 %v1735, 32
        %v3082 = vpop.permute.xlu0 %3081
        %3083 = vrot.lane.b32.xlu0 %v1736, 32
        %v3084 = vpop.permute.xlu0 %3083
        %3085 = vrot.lane.b32.xlu0 %v1737, 32
        %v3086 = vpop.permute.xlu0 %3085
        %3087 = vrot.lane.b32.xlu0 %v1738, 32
        %v3088 = vpop.permute.xlu0 %3087
        %3089 = vrot.lane.b32.xlu0 %v1739, 32
        %v3090 = vpop.permute.xlu0 %3089
        %3091 = vrot.lane.b32.xlu0 %v1740, 32
        %v3092 = vpop.permute.xlu0 %3091
        %3093 = vrot.lane.b32.xlu0 %v1741, 32
        %v3094 = vpop.permute.xlu0 %3093
        %3095 = vrot.lane.b32.xlu0 %v1742, 32
        %v3096 = vpop.permute.xlu0 %3095
        %3097 = vrot.lane.b32.xlu0 %v1743, 32
        %v3098 = vpop.permute.xlu0 %3097
        %3099 = vrot.lane.b32.xlu0 %v1744, 32
        %v3100 = vpop.permute.xlu0 %3099
        %3101 = vrot.lane.b32.xlu0 %v1745, 32
        %v3102 = vpop.permute.xlu0 %3101
        %3103 = vrot.lane.b32.xlu0 %v1746, 32
        %v3104 = vpop.permute.xlu0 %3103
        %3105 = vrot.lane.b32.xlu0 %v1747, 32
        %v3106 = vpop.permute.xlu0 %3105
        %v3108 = vsel %vm1756, %v3076, 0
        %v3111 = vsel %vm1756, %v3078, 0
        %v3114 = vsel %vm1756, %v3080, 0
        %v3117 = vsel %vm1756, %v3082, 0
        %v3120 = vsel %vm1756, %v3084, 0
        %v3123 = vsel %vm1756, %v3086, 0
        %v3126 = vsel %vm1756, %v3088, 0
        %v3129 = vsel %vm1756, %v3090, 0
        %v3132 = vsel %vm1756, %v3092, 0
        %v3135 = vsel %vm1756, %v3094, 0
        %v3138 = vsel %vm1756, %v3096, 0
        %v3141 = vsel %vm1756, %v3098, 0
        %v3144 = vsel %vm1756, %v3100, 0
        %v3147 = vsel %vm1756, %v3102, 0
        %v3150 = vsel %vm1756, %v3104, 0
        %v3153 = vsel %vm1756, %v3106, 0
        %3155 = vmatprep.subr.bf16.mxu0 0
        %3156 = vmatpush1.bf16.xpose.msra.mxu0 %v3132
        %3157 = vmatprep.subr.bf16.mxu0 0
        %3158 = vmatpush1.bf16.xpose.msra.mxu0 %v3135
        %3159 = vmatprep.subr.bf16.mxu0 0
        %3160 = vmatpush1.bf16.xpose.msra.mxu0 %v3138
        %3161 = vmatprep.subr.bf16.mxu0 0
        %3162 = vmatpush1.bf16.xpose.msra.mxu0 %v3141
        %3163 = vmatprep.subr.bf16.mxu0 0
        %3164 = vmatpush1.bf16.xpose.msra.mxu0 %v3144
        %3165 = vmatprep.subr.bf16.mxu0 0
        %3166 = vmatpush1.bf16.xpose.msra.mxu0 %v3147
        %3167 = vmatprep.subr.bf16.mxu0 0
        %3168 = vmatpush1.bf16.xpose.msra.mxu0 %v3150
        %3169 = vmatprep.subr.bf16.mxu0 0
        %3170 = vmatpush1.bf16.xpose.msra.mxu0 %v3153
        %3171 = vmatprep.subr.bf16.mxu0 0
        %3172 = vmatpush1.bf16.xpose.msra.mxu0 0
        %3173 = vmatprep.subr.bf16.mxu0 0
        %3174 = vmatpush1.bf16.xpose.msra.mxu0 0
        %3175 = vmatprep.subr.bf16.mxu0 0
        %3176 = vmatpush1.bf16.xpose.msra.mxu0 0
        %3177 = vmatprep.subr.bf16.mxu0 0
        %3178 = vmatpush1.bf16.xpose.msra.mxu0 0
        %3179 = vmatprep.subr.bf16.mxu0 0
        %3180 = vmatpush1.bf16.xpose.msra.mxu0 0
        %3181 = vmatprep.subr.bf16.mxu0 0
        %3182 = vmatpush1.bf16.xpose.msra.mxu0 0
        %3183 = vmatprep.subr.bf16.mxu0 0
        %3184 = vmatpush1.bf16.xpose.msra.mxu0 0
        %3185 = vmatprep.subr.bf16.mxu0 0
        %3186 = vmatpush1.bf16.xpose.msra.mxu0 0
        %3187 = vmatprep.mubr.bf16.mxu0 0
        %3188 = vmatmul.mubr.bf16.gmra.mrb[0].mxu0 %v3108
        %v3189 = vpop.f32.mrb[0].mxu0
        %v3190 = vadd.f32 %v1716, %v3189
        %v3191 = vpop.f32.mrb[0].mxu0
        %v3192 = vpop.f32.mrb[0].mxu0
        %v3193 = vadd.f32 %v1717, %v3192
        %v3194 = vpop.f32.mrb[0].mxu0
        %3195 = vmatprep.mubr.bf16.mxu0 0
        %3196 = vmatmul.mubr.bf16.gmra.mrb[0].mxu0 %v3111
        %v3197 = vpop.f32.mrb[0].mxu0
        %v3198 = vadd.f32 %v1718, %v3197
        %v3199 = vpop.f32.mrb[0].mxu0
        %v3200 = vpop.f32.mrb[0].mxu0
        %v3201 = vadd.f32 %v1719, %v3200
        %v3202 = vpop.f32.mrb[0].mxu0
        %3203 = vmatprep.mubr.bf16.mxu0 0
        %3204 = vmatmul.mubr.bf16.gmra.mrb[0].mxu0 %v3114
        %v3205 = vpop.f32.mrb[0].mxu0
        %v3206 = vadd.f32 %v1720, %v3205
        %v3207 = vpop.f32.mrb[0].mxu0
        %v3208 = vpop.f32.mrb[0].mxu0
        %v3209 = vadd.f32 %v1721, %v3208
        %v3210 = vpop.f32.mrb[0].mxu0
        %3211 = vmatprep.mubr.bf16.mxu0 0
        %3212 = vmatmul.mubr.bf16.gmra.mrb[0].mxu0 %v3117
        %v3213 = vpop.f32.mrb[0].mxu0
        %v3214 = vadd.f32 %v1722, %v3213
        %v3215 = vpop.f32.mrb[0].mxu0
        %v3216 = vpop.f32.mrb[0].mxu0
        %v3217 = vadd.f32 %v1723, %v3216
        %v3218 = vpop.f32.mrb[0].mxu0
        %3219 = vmatprep.mubr.bf16.mxu0 0
        %3220 = vmatmul.mubr.bf16.gmra.mrb[0].mxu0 %v3120
        %v3221 = vpop.f32.mrb[0].mxu0
        %v3222 = vadd.f32 %v1724, %v3221
        %v3223 = vpop.f32.mrb[0].mxu0
        %v3224 = vpop.f32.mrb[0].mxu0
        %v3225 = vadd.f32 %v1725, %v3224
        %v3226 = vpop.f32.mrb[0].mxu0
        %3227 = vmatprep.mubr.bf16.mxu0 0
        %3228 = vmatmul.mubr.bf16.gmra.mrb[0].mxu0 %v3123
        %v3229 = vpop.f32.mrb[0].mxu0
        %v3230 = vadd.f32 %v1726, %v3229
        %v3231 = vpop.f32.mrb[0].mxu0
        %v3232 = vpop.f32.mrb[0].mxu0
        %v3233 = vadd.f32 %v1727, %v3232
        %v3234 = vpop.f32.mrb[0].mxu0
        %3235 = vmatprep.mubr.bf16.mxu0 0
        %3236 = vmatmul.mubr.bf16.gmra.mrb[0].mxu0 %v3126
        %v3237 = vpop.f32.mrb[0].mxu0
        %v3238 = vadd.f32 %v1728, %v3237
        %v3239 = vpop.f32.mrb[0].mxu0
        %v3240 = vpop.f32.mrb[0].mxu0
        %v3241 = vadd.f32 %v1729, %v3240
        %v3242 = vpop.f32.mrb[0].mxu0
        %3243 = vmatprep.mubr.bf16.mxu0 0
        %3244 = vmatmul.mubr.bf16.gmra.mrb[0].mxu0 %v3129
        %v3245 = vpop.f32.mrb[0].mxu0
        %v3246 = vadd.f32 %v1730, %v3245
        %v3247 = vpop.f32.mrb[0].mxu0
        %v3248 = vpop.f32.mrb[0].mxu0
        %v3249 = vadd.f32 %v1731, %v3248
        %v3250 = vpop.f32.mrb[0].mxu0
        %3251 = vdwg.mxu0
        %3252 = vmax.xlane.f32.xlu0 %v3190
        %v3253 = vpop.xlane.xlu0 %3252
        %3254 = vmax.xlane.f32.xlu0 %v3193
        %v3255 = vpop.xlane.xlu0 %3254
        %3256 = vmax.xlane.f32.xlu0 %v3198
        %v3257 = vpop.xlane.xlu0 %3256
        %3258 = vmax.xlane.f32.xlu0 %v3201
        %v3259 = vpop.xlane.xlu0 %3258
        %3260 = vmax.xlane.f32.xlu0 %v3206
        %v3261 = vpop.xlane.xlu0 %3260
        %3262 = vmax.xlane.f32.xlu0 %v3209
        %v3263 = vpop.xlane.xlu0 %3262
        %3264 = vmax.xlane.f32.xlu0 %v3214
        %v3265 = vpop.xlane.xlu0 %3264
        %3266 = vmax.xlane.f32.xlu0 %v3217
        %v3267 = vpop.xlane.xlu0 %3266
        %3268 = vmax.xlane.f32.xlu0 %v3222
        %v3269 = vpop.xlane.xlu0 %3268
        %3270 = vmax.xlane.f32.xlu0 %v3225
        %v3271 = vpop.xlane.xlu0 %3270
        %3272 = vmax.xlane.f32.xlu0 %v3230
        %v3273 = vpop.xlane.xlu0 %3272
        %3274 = vmax.xlane.f32.xlu0 %v3233
        %v3275 = vpop.xlane.xlu0 %3274
        %3276 = vmax.xlane.f32.xlu0 %v3238
        %v3277 = vpop.xlane.xlu0 %3276
        %3278 = vmax.xlane.f32.xlu0 %v3241
        %v3279 = vpop.xlane.xlu0 %3278
        %3280 = vmax.xlane.f32.xlu0 %v3246
        %v3281 = vpop.xlane.xlu0 %3280
        %3282 = vmax.xlane.f32.xlu0 %v3249
        %v3283 = vpop.xlane.xlu0 %3282
        %v3284 = vsub.f32 %v3190, %v3253
        %v3285 = vsub.f32 %v3193, %v3255
        %v3286 = vsub.f32 %v3198, %v3257
        %v3287 = vsub.f32 %v3201, %v3259
        %v3288 = vsub.f32 %v3206, %v3261
        %v3289 = vsub.f32 %v3209, %v3263
        %v3290 = vsub.f32 %v3214, %v3265
        %v3291 = vsub.f32 %v3217, %v3267
        %v3292 = vsub.f32 %v3222, %v3269
        %v3293 = vsub.f32 %v3225, %v3271
        %v3294 = vsub.f32 %v3230, %v3273
        %v3295 = vsub.f32 %v3233, %v3275
        %v3296 = vsub.f32 %v3238, %v3277
        %v3297 = vsub.f32 %v3241, %v3279
        %v3298 = vsub.f32 %v3246, %v3281
        %v3299 = vsub.f32 %v3249, %v3283
        %v3300 = vmul.f32 %v3284, 1.442695
        %v3301 = vpow.pop %v3300
        %v3302 = vmul.f32 %v3285, 1.442695
        %v3303 = vpow.pop %v3302
        %v3304 = vmul.f32 %v3286, 1.442695
        %v3305 = vpow.pop %v3304
        %v3306 = vmul.f32 %v3287, 1.442695
        %v3307 = vpow.pop %v3306
        %v3308 = vmul.f32 %v3288, 1.442695
        %v3309 = vpow.pop %v3308
        %v3310 = vmul.f32 %v3289, 1.442695
        %v3311 = vpow.pop %v3310
        %v3312 = vmul.f32 %v3290, 1.442695
        %v3313 = vpow.pop %v3312
        %v3314 = vmul.f32 %v3291, 1.442695
        %v3315 = vpow.pop %v3314
        %v3316 = vmul.f32 %v3292, 1.442695
        %v3317 = vpow.pop %v3316
        %v3318 = vmul.f32 %v3293, 1.442695
        %v3319 = vpow.pop %v3318
        %v3320 = vmul.f32 %v3294, 1.442695
        %v3321 = vpow.pop %v3320
        %v3322 = vmul.f32 %v3295, 1.442695
        %v3323 = vpow.pop %v3322
        %v3324 = vmul.f32 %v3296, 1.442695
        %v3325 = vpow.pop %v3324
        %v3326 = vmul.f32 %v3297, 1.442695
        %v3327 = vpow.pop %v3326
        %v3328 = vmul.f32 %v3298, 1.442695
        %v3329 = vpow.pop %v3328
        %v3330 = vmul.f32 %v3299, 1.442695
        %v3331 = vpow.pop %v3330
        %3332 = vadd.xlane.f32.xlu0 %v3301
        %v3333 = vpop.xlane.xlu0 %3332
        %3334 = vadd.xlane.f32.xlu0 %v3303
        %v3335 = vpop.xlane.xlu0 %3334
        %3336 = vadd.xlane.f32.xlu0 %v3305
        %v3337 = vpop.xlane.xlu0 %3336
        %3338 = vadd.xlane.f32.xlu0 %v3307
        %v3339 = vpop.xlane.xlu0 %3338
        %3340 = vadd.xlane.f32.xlu0 %v3309
        %v3341 = vpop.xlane.xlu0 %3340
        %3342 = vadd.xlane.f32.xlu0 %v3311
        %v3343 = vpop.xlane.xlu0 %3342
        %3344 = vadd.xlane.f32.xlu0 %v3313
        %v3345 = vpop.xlane.xlu0 %3344
        %3346 = vadd.xlane.f32.xlu0 %v3315
        %v3347 = vpop.xlane.xlu0 %3346
        %3348 = vadd.xlane.f32.xlu0 %v3317
        %v3349 = vpop.xlane.xlu0 %3348
        %3350 = vadd.xlane.f32.xlu0 %v3319
        %v3351 = vpop.xlane.xlu0 %3350
        %3352 = vadd.xlane.f32.xlu0 %v3321
        %v3353 = vpop.xlane.xlu0 %3352
        %3354 = vadd.xlane.f32.xlu0 %v3323
        %v3355 = vpop.xlane.xlu0 %3354
        %3356 = vadd.xlane.f32.xlu0 %v3325
        %v3357 = vpop.xlane.xlu0 %3356
        %3358 = vadd.xlane.f32.xlu0 %v3327
        %v3359 = vpop.xlane.xlu0 %3358
        %3360 = vadd.xlane.f32.xlu0 %v3329
        %v3361 = vpop.xlane.xlu0 %3360
        %3362 = vadd.xlane.f32.xlu0 %v3331
        %v3363 = vpop.xlane.xlu0 %3362
        %v3364 = vrcp.pop %v3333
        %v3365 = vrcp.pop %v3335
        %v3366 = vrcp.pop %v3337
        %v3367 = vrcp.pop %v3339
        %v3368 = vrcp.pop %v3341
        %v3369 = vrcp.pop %v3343
        %v3370 = vrcp.pop %v3345
        %v3371 = vrcp.pop %v3347
        %v3372 = vrcp.pop %v3349
        %v3373 = vrcp.pop %v3351
        %v3374 = vrcp.pop %v3353
        %v3375 = vrcp.pop %v3355
        %v3376 = vrcp.pop %v3357
        %v3377 = vrcp.pop %v3359
        %v3378 = vrcp.pop %v3361
        %v3379 = vrcp.pop %v3363
        %v3380 = vmul.f32 %v3301, %v3364
        %v3381 = vmul.f32 %v3303, %v3365
        %v3382 = vmul.f32 %v3305, %v3366
        %v3383 = vmul.f32 %v3307, %v3367
        %v3384 = vmul.f32 %v3309, %v3368
        %v3385 = vmul.f32 %v3311, %v3369
        %v3386 = vmul.f32 %v3313, %v3370
        %v3387 = vmul.f32 %v3315, %v3371
        %v3388 = vmul.f32 %v3317, %v3372
        %v3389 = vmul.f32 %v3319, %v3373
        %v3390 = vmul.f32 %v3321, %v3374
        %v3391 = vmul.f32 %v3323, %v3375
        %v3392 = vmul.f32 %v3325, %v3376
        %v3393 = vmul.f32 %v3327, %v3377
        %v3394 = vmul.f32 %v3329, %v3378
        %v3395 = vmul.f32 %v3331, %v3379
        %v3396 = vpack.c.bf16 %v3381, %v3380
        %v3397 = vpack.c.bf16 %v3383, %v3382
        %v3398 = vpack.c.bf16 %v3385, %v3384
        %v3399 = vpack.c.bf16 %v3387, %v3386
        %v3400 = vpack.c.bf16 %v3389, %v3388
        %v3401 = vpack.c.bf16 %v3391, %v3390
        %v3402 = vpack.c.bf16 %v3393, %v3392
        %v3403 = vpack.c.bf16 %v3395, %v3394
        %3404 = vrot.lane.b32.xlu0 %v1748, 32
        %v3405 = vpop.permute.xlu0 %3404
        %3406 = vrot.lane.b32.xlu0 %v1749, 32
        %v3407 = vpop.permute.xlu0 %3406
        %3408 = vrot.lane.b32.xlu0 %v1750, 32
        %v3409 = vpop.permute.xlu0 %3408
        %3410 = vrot.lane.b32.xlu0 %v1751, 32
        %v3411 = vpop.permute.xlu0 %3410
        %3412 = vrot.lane.b32.xlu0 %v1752, 32
        %v3413 = vpop.permute.xlu0 %3412
        %3414 = vrot.lane.b32.xlu0 %v1753, 32
        %v3415 = vpop.permute.xlu0 %3414
        %3416 = vrot.lane.b32.xlu0 %v1754, 32
        %v3417 = vpop.permute.xlu0 %3416
        %3418 = vrot.lane.b32.xlu0 %v1755, 32
        %v3419 = vpop.permute.xlu0 %3418
        %3428 = vmatprep.subr.bf16.mxu0 0
        %3429 = vmatpush1.bf16.msra.mxu0 %v3405
        %3430 = vmatprep.subr.bf16.mxu0 0
        %3431 = vmatpush1.bf16.msra.mxu0 %v3407
        %3432 = vmatprep.subr.bf16.mxu0 0
        %3433 = vmatpush1.bf16.msra.mxu0 %v3409
        %3434 = vmatprep.subr.bf16.mxu0 0
        %3435 = vmatpush1.bf16.msra.mxu0 %v3411
        %3436 = vmatprep.subr.bf16.mxu0 0
        %3437 = vmatpush1.bf16.msra.mxu0 %v3413
        %3438 = vmatprep.subr.bf16.mxu0 0
        %3439 = vmatpush1.bf16.msra.mxu0 %v3415
        %3440 = vmatprep.subr.bf16.mxu0 0
        %3441 = vmatpush1.bf16.msra.mxu0 %v3417
        %3442 = vmatprep.subr.bf16.mxu0 0
        %3443 = vmatpush1.bf16.msra.mxu0 %v3419
        %3444 = vmatprep.subr.bf16.mxu0 0
        %3445 = vmatpush1.bf16.msra.mxu0 0
        %3446 = vmatprep.subr.bf16.mxu0 0
        %3447 = vmatpush1.bf16.msra.mxu0 0
        %3448 = vmatprep.subr.bf16.mxu0 0
        %3449 = vmatpush1.bf16.msra.mxu0 0
        %3450 = vmatprep.subr.bf16.mxu0 0
        %3451 = vmatpush1.bf16.msra.mxu0 0
        %3452 = vmatprep.subr.bf16.mxu0 0
        %3453 = vmatpush1.bf16.msra.mxu0 0
        %3454 = vmatprep.subr.bf16.mxu0 0
        %3455 = vmatpush1.bf16.msra.mxu0 0
        %3456 = vmatprep.subr.bf16.mxu0 0
        %3457 = vmatpush1.bf16.msra.mxu0 0
        %3458 = vmatprep.subr.bf16.mxu0 0
        %3459 = vmatpush1.bf16.msra.mxu0 0
        %3460 = vmatprep.mubr.bf16.mxu0 0
        %3461 = vmatmul.mubr.bf16.gmra.mrb[0].mxu0 %v3396
        %v3462 = vpop.f32.mrb[0].mxu0
        %v3463 = vadd.f32 0.0, %v3462
        %v3464 = vpop.f32.mrb[0].mxu0
        %v3465 = vpop.f32.mrb[0].mxu0
        %v3466 = vadd.f32 0.0, %v3465
        %v3467 = vpop.f32.mrb[0].mxu0
        %3468 = vmatprep.mubr.bf16.mxu0 0
        %3469 = vmatmul.mubr.bf16.gmra.mrb[0].mxu0 %v3397
        %v3470 = vpop.f32.mrb[0].mxu0
        %v3471 = vadd.f32 0.0, %v3470
        %v3472 = vpop.f32.mrb[0].mxu0
        %v3473 = vpop.f32.mrb[0].mxu0
        %v3474 = vadd.f32 0.0, %v3473
        %v3475 = vpop.f32.mrb[0].mxu0
        %3476 = vmatprep.mubr.bf16.mxu0 0
        %3477 = vmatmul.mubr.bf16.gmra.mrb[0].mxu0 %v3398
        %v3478 = vpop.f32.mrb[0].mxu0
        %v3479 = vadd.f32 0.0, %v3478
        %v3480 = vpop.f32.mrb[0].mxu0
        %v3481 = vpop.f32.mrb[0].mxu0
        %v3482 = vadd.f32 0.0, %v3481
        %v3483 = vpop.f32.mrb[0].mxu0
        %3484 = vmatprep.mubr.bf16.mxu0 0
        %3485 = vmatmul.mubr.bf16.gmra.mrb[0].mxu0 %v3399
        %v3486 = vpop.f32.mrb[0].mxu0
        %v3487 = vadd.f32 0.0, %v3486
        %v3488 = vpop.f32.mrb[0].mxu0
        %v3489 = vpop.f32.mrb[0].mxu0
        %v3490 = vadd.f32 0.0, %v3489
        %v3491 = vpop.f32.mrb[0].mxu0
        %3492 = vmatprep.mubr.bf16.mxu0 0
        %3493 = vmatmul.mubr.bf16.gmra.mrb[0].mxu0 %v3400
        %v3494 = vpop.f32.mrb[0].mxu0
        %v3495 = vadd.f32 0.0, %v3494
        %v3496 = vpop.f32.mrb[0].mxu0
        %v3497 = vpop.f32.mrb[0].mxu0
        %v3498 = vadd.f32 0.0, %v3497
        %v3499 = vpop.f32.mrb[0].mxu0
        %3500 = vmatprep.mubr.bf16.mxu0 0
        %3501 = vmatmul.mubr.bf16.gmra.mrb[0].mxu0 %v3401
        %v3502 = vpop.f32.mrb[0].mxu0
        %v3503 = vadd.f32 0.0, %v3502
        %v3504 = vpop.f32.mrb[0].mxu0
        %v3505 = vpop.f32.mrb[0].mxu0
        %v3506 = vadd.f32 0.0, %v3505
        %v3507 = vpop.f32.mrb[0].mxu0
        %3508 = vmatprep.mubr.bf16.mxu0 0
        %3509 = vmatmul.mubr.bf16.gmra.mrb[0].mxu0 %v3402
        %v3510 = vpop.f32.mrb[0].mxu0
        %v3511 = vadd.f32 0.0, %v3510
        %v3512 = vpop.f32.mrb[0].mxu0
        %v3513 = vpop.f32.mrb[0].mxu0
        %v3514 = vadd.f32 0.0, %v3513
        %v3515 = vpop.f32.mrb[0].mxu0
        %3516 = vmatprep.mubr.bf16.mxu0 0
        %3517 = vmatmul.mubr.bf16.gmra.mrb[0].mxu0 %v3403
        %v3518 = vpop.f32.mrb[0].mxu0
        %v3519 = vadd.f32 0.0, %v3518
        %v3520 = vpop.f32.mrb[0].mxu0
        %v3521 = vpop.f32.mrb[0].mxu0
        %v3522 = vadd.f32 0.0, %v3521
        %v3523 = vpop.f32.mrb[0].mxu0
        %3524 = vdwg.mxu0
        %3541 = vrot.lane.b32.xlu0 %v2563, 32
        %v3542 = vpop.permute.xlu0 %3541
        %3543 = vrot.lane.b32.xlu0 %v2566, 32
        %v3544 = vpop.permute.xlu0 %3543
        %3545 = vrot.lane.b32.xlu0 %v2571, 32
        %v3546 = vpop.permute.xlu0 %3545
        %3547 = vrot.lane.b32.xlu0 %v2574, 32
        %v3548 = vpop.permute.xlu0 %3547
        %3549 = vrot.lane.b32.xlu0 %v2579, 32
        %v3550 = vpop.permute.xlu0 %3549
        %3551 = vrot.lane.b32.xlu0 %v2582, 32
        %v3552 = vpop.permute.xlu0 %3551
        %3553 = vrot.lane.b32.xlu0 %v2587, 32
        %v3554 = vpop.permute.xlu0 %3553
        %3555 = vrot.lane.b32.xlu0 %v2590, 32
        %v3556 = vpop.permute.xlu0 %3555
        %3557 = vrot.lane.b32.xlu0 %v2595, 32
        %v3558 = vpop.permute.xlu0 %3557
        %3559 = vrot.lane.b32.xlu0 %v2598, 32
        %v3560 = vpop.permute.xlu0 %3559
        %3561 = vrot.lane.b32.xlu0 %v2603, 32
        %v3562 = vpop.permute.xlu0 %3561
        %3563 = vrot.lane.b32.xlu0 %v2606, 32
        %v3564 = vpop.permute.xlu0 %3563
        %3565 = vrot.lane.b32.xlu0 %v2611, 32
        %v3566 = vpop.permute.xlu0 %3565
        %3567 = vrot.lane.b32.xlu0 %v2614, 32
        %v3568 = vpop.permute.xlu0 %3567
        %3569 = vrot.lane.b32.xlu0 %v2619, 32
        %v3570 = vpop.permute.xlu0 %3569
        %3571 = vrot.lane.b32.xlu0 %v2622, 32
        %v3572 = vpop.permute.xlu0 %3571
        %3605 = vrot.lane.b32.xlu0 %v3013, 64
        %v3606 = vpop.permute.xlu0 %3605
        %3607 = vrot.lane.b32.xlu0 %v3016, 64
        %v3608 = vpop.permute.xlu0 %3607
        %3609 = vrot.lane.b32.xlu0 %v3021, 64
        %v3610 = vpop.permute.xlu0 %3609
        %3611 = vrot.lane.b32.xlu0 %v3024, 64
        %v3612 = vpop.permute.xlu0 %3611
        %3613 = vrot.lane.b32.xlu0 %v3029, 64
        %v3614 = vpop.permute.xlu0 %3613
        %3615 = vrot.lane.b32.xlu0 %v3032, 64
        %v3616 = vpop.permute.xlu0 %3615
        %3617 = vrot.lane.b32.xlu0 %v3037, 64
        %v3618 = vpop.permute.xlu0 %3617
        %3619 = vrot.lane.b32.xlu0 %v3040, 64
        %v3620 = vpop.permute.xlu0 %3619
        %3621 = vrot.lane.b32.xlu0 %v3045, 64
        %v3622 = vpop.permute.xlu0 %3621
        %3623 = vrot.lane.b32.xlu0 %v3048, 64
        %v3624 = vpop.permute.xlu0 %3623
        %3625 = vrot.lane.b32.xlu0 %v3053, 64
        %v3626 = vpop.permute.xlu0 %3625
        %3627 = vrot.lane.b32.xlu0 %v3056, 64
        %v3628 = vpop.permute.xlu0 %3627
        %3629 = vrot.lane.b32.xlu0 %v3061, 64
        %v3630 = vpop.permute.xlu0 %3629
        %3631 = vrot.lane.b32.xlu0 %v3064, 64
        %v3632 = vpop.permute.xlu0 %3631
        %3633 = vrot.lane.b32.xlu0 %v3069, 64
        %v3634 = vpop.permute.xlu0 %3633
        %3635 = vrot.lane.b32.xlu0 %v3072, 64
        %v3636 = vpop.permute.xlu0 %3635
        %3669 = vrot.lane.b32.xlu0 %v3463, 96
        %v3670 = vpop.permute.xlu0 %3669
        %3671 = vrot.lane.b32.xlu0 %v3466, 96
        %v3672 = vpop.permute.xlu0 %3671
        %3673 = vrot.lane.b32.xlu0 %v3471, 96
        %v3674 = vpop.permute.xlu0 %3673
        %3675 = vrot.lane.b32.xlu0 %v3474, 96
        %v3676 = vpop.permute.xlu0 %3675
        %3677 = vrot.lane.b32.xlu0 %v3479, 96
        %v3678 = vpop.permute.xlu0 %3677
        %3679 = vrot.lane.b32.xlu0 %v3482, 96
        %v3680 = vpop.permute.xlu0 %3679
        %3681 = vrot.lane.b32.xlu0 %v3487, 96
        %v3682 = vpop.permute.xlu0 %3681
        %3683 = vrot.lane.b32.xlu0 %v3490, 96
        %v3684 = vpop.permute.xlu0 %3683
        %3685 = vrot.lane.b32.xlu0 %v3495, 96
        %v3686 = vpop.permute.xlu0 %3685
        %3687 = vrot.lane.b32.xlu0 %v3498, 96
        %v3688 = vpop.permute.xlu0 %3687
        %3689 = vrot.lane.b32.xlu0 %v3503, 96
        %v3690 = vpop.permute.xlu0 %3689
        %3691 = vrot.lane.b32.xlu0 %v3506, 96
        %v3692 = vpop.permute.xlu0 %3691
        %3693 = vrot.lane.b32.xlu0 %v3511, 96
        %v3694 = vpop.permute.xlu0 %3693
        %3695 = vrot.lane.b32.xlu0 %v3514, 96
        %v3696 = vpop.permute.xlu0 %3695
        %3697 = vrot.lane.b32.xlu0 %v3519, 96
        %v3698 = vpop.permute.xlu0 %3697
        %3699 = vrot.lane.b32.xlu0 %v3522, 96
        %v3700 = vpop.permute.xlu0 %3699
        %v3717 = vsel %vm1756, %v2089, %v3542
        %v3718 = vsel %vm1756, %v2092, %v3544
        %v3719 = vsel %vm1756, %v2097, %v3546
        %v3720 = vsel %vm1756, %v2100, %v3548
        %v3721 = vsel %vm1756, %v2105, %v3550
        %v3722 = vsel %vm1756, %v2108, %v3552
        %v3723 = vsel %vm1756, %v2113, %v3554
        %v3724 = vsel %vm1756, %v2116, %v3556
        %v3725 = vsel %vm1756, %v2121, %v3558
        %v3726 = vsel %vm1756, %v2124, %v3560
        %v3727 = vsel %vm1756, %v2129, %v3562
        %v3728 = vsel %vm1756, %v2132, %v3564
        %v3729 = vsel %vm1756, %v2137, %v3566
        %v3730 = vsel %vm1756, %v2140, %v3568
        %v3731 = vsel %vm1756, %v2145, %v3570
        %v3732 = vsel %vm1756, %v2148, %v3572
        %vm3733 = vcmask 523264
        %v3734 = vsel %vm3733, %v3717, %v3606
        %v3735 = vsel %vm3733, %v3718, %v3608
        %v3736 = vsel %vm3733, %v3719, %v3610
        %v3737 = vsel %vm3733, %v3720, %v3612
        %v3738 = vsel %vm3733, %v3721, %v3614
        %v3739 = vsel %vm3733, %v3722, %v3616
        %v3740 = vsel %vm3733, %v3723, %v3618
        %v3741 = vsel %vm3733, %v3724, %v3620
        %v3742 = vsel %vm3733, %v3725, %v3622
        %v3743 = vsel %vm3733, %v3726, %v3624
        %v3744 = vsel %vm3733, %v3727, %v3626
        %v3745 = vsel %vm3733, %v3728, %v3628
        %v3746 = vsel %vm3733, %v3729, %v3630
        %v3747 = vsel %vm3733, %v3730, %v3632
        %v3748 = vsel %vm3733, %v3731, %v3634
        %v3749 = vsel %vm3733, %v3732, %v3636
        %vm3750 = vcmask 785408
        %v3751 = vsel %vm3750, %v3734, %v3670
        %v3752 = vsel %vm3750, %v3735, %v3672
        %v3753 = vsel %vm3750, %v3736, %v3674
        %v3754 = vsel %vm3750, %v3737, %v3676
        %v3755 = vsel %vm3750, %v3738, %v3678
        %v3756 = vsel %vm3750, %v3739, %v3680
        %v3757 = vsel %vm3750, %v3740, %v3682
        %v3758 = vsel %vm3750, %v3741, %v3684
        %v3759 = vsel %vm3750, %v3742, %v3686
        %v3760 = vsel %vm3750, %v3743, %v3688
        %v3761 = vsel %vm3750, %v3744, %v3690
        %v3762 = vsel %vm3750, %v3745, %v3692
        %v3763 = vsel %vm3750, %v3746, %v3694
        %v3764 = vsel %vm3750, %v3747, %v3696
        %v3765 = vsel %vm3750, %v3748, %v3698
        %v3766 = vsel %vm3750, %v3749, %v3700
        %v3767 = vld [vmem:[%s753] sm:$0x1]
        %v3769 = vlaneseq
        %v3770 = vshrl.u32 %v3769, 7
        %v3771 = vsub.s32 0, %v3770
        %v3772 = vrot.slane %v3767, %v3771
        %v3774 = vadd.f32 %v938, %v3772
        %v3775 = vadd.f32 %v939, %v3772
        %v3776 = vadd.f32 %v940, %v3772
        %v3777 = vadd.f32 %v941, %v3772
        %v3778 = vadd.f32 %v942, %v3772
        %v3779 = vadd.f32 %v943, %v3772
        %v3780 = vadd.f32 %v944, %v3772
        %v3781 = vadd.f32 %v945, %v3772
        %v3782 = vadd.f32 %v946, %v3772
        %v3783 = vadd.f32 %v947, %v3772
        %v3784 = vadd.f32 %v948, %v3772
        %v3785 = vadd.f32 %v949, %v3772
        %v3786 = vadd.f32 %v950, %v3772
        %v3787 = vadd.f32 %v951, %v3772
        %v3788 = vadd.f32 %v952, %v3772
        %v3789 = vadd.f32 %v953, %v3772
        %v3790 = vpack.c.bf16 %v3752, %v3751
        %v3791 = vpack.c.bf16 %v3754, %v3753
        %v3792 = vpack.c.bf16 %v3756, %v3755
        %v3793 = vpack.c.bf16 %v3758, %v3757
        %v3794 = vpack.c.bf16 %v3760, %v3759
        %v3795 = vpack.c.bf16 %v3762, %v3761
        %v3796 = vpack.c.bf16 %v3764, %v3763
        %v3797 = vpack.c.bf16 %v3766, %v3765
        %v3798 = vld [vmem:[%s745] sm:$0xf]
        %v3799 = vld [vmem:[%s745 + $0x4] sm:$0xf]
        %v3800 = vld [vmem:[%s745 + $0x8] sm:$0xf]
        %v3801 = vld [vmem:[%s745 + $0xc] sm:$0xf]
        %v3802 = vld [vmem:[%s745 + $0x10] sm:$0xf]
        %v3803 = vld [vmem:[%s745 + $0x14] sm:$0xf]
        %v3804 = vld [vmem:[%s745 + $0x18] sm:$0xf]
        %v3805 = vld [vmem:[%s745 + $0x1c] sm:$0xf]
        %v3806 = vld [vmem:[%s745 + $0x20] sm:$0xf]
        %v3807 = vld [vmem:[%s745 + $0x24] sm:$0xf]
        %v3808 = vld [vmem:[%s745 + $0x28] sm:$0xf]
        %v3809 = vld [vmem:[%s745 + $0x2c] sm:$0xf]
        %v3810 = vld [vmem:[%s745 + $0x30] sm:$0xf]
        %v3811 = vld [vmem:[%s745 + $0x34] sm:$0xf]
        %v3812 = vld [vmem:[%s745 + $0x38] sm:$0xf]
        %v3813 = vld [vmem:[%s745 + $0x3c] sm:$0xf]
        %v3830 = vunpack.c.l.b16 %v3798
        %v3831 = vunpack.c.l.b16 %v3799
        %v3832 = vunpack.c.l.b16 %v3800
        %v3833 = vunpack.c.l.b16 %v3801
        %v3834 = vunpack.c.l.b16 %v3802
        %v3835 = vunpack.c.l.b16 %v3803
        %v3836 = vunpack.c.l.b16 %v3804
        %v3837 = vunpack.c.l.b16 %v3805
        %v3838 = vunpack.c.l.b16 %v3806
        %v3839 = vunpack.c.l.b16 %v3807
        %v3840 = vunpack.c.l.b16 %v3808
        %v3841 = vunpack.c.l.b16 %v3809
        %v3842 = vunpack.c.l.b16 %v3810
        %v3843 = vunpack.c.l.b16 %v3811
        %v3844 = vunpack.c.l.b16 %v3812
        %v3845 = vunpack.c.l.b16 %v3813
        %v3846 = vpack.c.b16 %v3831, %v3830
        %v3847 = vpack.c.b16 %v3833, %v3832
        %v3848 = vpack.c.b16 %v3835, %v3834
        %v3849 = vpack.c.b16 %v3837, %v3836
        %v3850 = vpack.c.b16 %v3839, %v3838
        %v3851 = vpack.c.b16 %v3841, %v3840
        %v3852 = vpack.c.b16 %v3843, %v3842
        %v3853 = vpack.c.b16 %v3845, %v3844
        %3862 = vmatprep.subr.bf16.mxu0 0
        %3863 = vmatpush1.bf16.msra.mxu0 %v3846
        %3864 = vmatprep.subr.bf16.mxu0 0
        %3865 = vmatpush1.bf16.msra.mxu0 %v3847
        %3866 = vmatprep.subr.bf16.mxu0 0
        %3867 = vmatpush1.bf16.msra.mxu0 %v3848
        %3868 = vmatprep.subr.bf16.mxu0 0
        %3869 = vmatpush1.bf16.msra.mxu0 %v3849
        %3870 = vmatprep.subr.bf16.mxu0 0
        %3871 = vmatpush1.bf16.msra.mxu0 %v3850
        %3872 = vmatprep.subr.bf16.mxu0 0
        %3873 = vmatpush1.bf16.msra.mxu0 %v3851
        %3874 = vmatprep.subr.bf16.mxu0 0
        %3875 = vmatpush1.bf16.msra.mxu0 %v3852
        %3876 = vmatprep.subr.bf16.mxu0 0
        %3877 = vmatpush1.bf16.msra.mxu0 %v3853
        %3878 = vmatprep.subr.bf16.mxu0 0
        %3879 = vmatpush1.bf16.msra.mxu0 0
        %3880 = vmatprep.subr.bf16.mxu0 0
        %3881 = vmatpush1.bf16.msra.mxu0 0
        %3882 = vmatprep.subr.bf16.mxu0 0
        %3883 = vmatpush1.bf16.msra.mxu0 0
        %3884 = vmatprep.subr.bf16.mxu0 0
        %3885 = vmatpush1.bf16.msra.mxu0 0
        %3886 = vmatprep.subr.bf16.mxu0 0
        %3887 = vmatpush1.bf16.msra.mxu0 0
        %3888 = vmatprep.subr.bf16.mxu0 0
        %3889 = vmatpush1.bf16.msra.mxu0 0
        %3890 = vmatprep.subr.bf16.mxu0 0
        %3891 = vmatpush1.bf16.msra.mxu0 0
        %3892 = vmatprep.subr.bf16.mxu0 0
        %3893 = vmatpush1.bf16.msra.mxu0 0
        %3894 = vmatprep.mubr.bf16.mxu0 0
        %3895 = vmatmul.mubr.bf16.gmra.mrb[0].mxu0 %v3790
        %v3896 = vpop.f32.mrb[0].mxu0
        %v3897 = vadd.f32 0.0, %v3896
        %v3898 = vpop.f32.mrb[0].mxu0
        %v3899 = vpop.f32.mrb[0].mxu0
        %v3900 = vadd.f32 0.0, %v3899
        %v3901 = vpop.f32.mrb[0].mxu0
        %3902 = vmatprep.mubr.bf16.mxu0 0
        %3903 = vmatmul.mubr.bf16.gmra.mrb[0].mxu0 %v3791
        %v3904 = vpop.f32.mrb[0].mxu0
        %v3905 = vadd.f32 0.0, %v3904
        %v3906 = vpop.f32.mrb[0].mxu0
        %v3907 = vpop.f32.mrb[0].mxu0
        %v3908 = vadd.f32 0.0, %v3907
        %v3909 = vpop.f32.mrb[0].mxu0
        %3910 = vmatprep.mubr.bf16.mxu0 0
        %3911 = vmatmul.mubr.bf16.gmra.mrb[0].mxu0 %v3792
        %v3912 = vpop.f32.mrb[0].mxu0
        %v3913 = vadd.f32 0.0, %v3912
        %v3914 = vpop.f32.mrb[0].mxu0
        %v3915 = vpop.f32.mrb[0].mxu0
        %v3916 = vadd.f32 0.0, %v3915
        %v3917 = vpop.f32.mrb[0].mxu0
        %3918 = vmatprep.mubr.bf16.mxu0 0
        %3919 = vmatmul.mubr.bf16.gmra.mrb[0].mxu0 %v3793
        %v3920 = vpop.f32.mrb[0].mxu0
        %v3921 = vadd.f32 0.0, %v3920
        %v3922 = vpop.f32.mrb[0].mxu0
        %v3923 = vpop.f32.mrb[0].mxu0
        %v3924 = vadd.f32 0.0, %v3923
        %v3925 = vpop.f32.mrb[0].mxu0
        %3926 = vmatprep.mubr.bf16.mxu0 0
        %3927 = vmatmul.mubr.bf16.gmra.mrb[0].mxu0 %v3794
        %v3928 = vpop.f32.mrb[0].mxu0
        %v3929 = vadd.f32 0.0, %v3928
        %v3930 = vpop.f32.mrb[0].mxu0
        %v3931 = vpop.f32.mrb[0].mxu0
        %v3932 = vadd.f32 0.0, %v3931
        %v3933 = vpop.f32.mrb[0].mxu0
        %3934 = vmatprep.mubr.bf16.mxu0 0
        %3935 = vmatmul.mubr.bf16.gmra.mrb[0].mxu0 %v3795
        %v3936 = vpop.f32.mrb[0].mxu0
        %v3937 = vadd.f32 0.0, %v3936
        %v3938 = vpop.f32.mrb[0].mxu0
        %v3939 = vpop.f32.mrb[0].mxu0
        %v3940 = vadd.f32 0.0, %v3939
        %v3941 = vpop.f32.mrb[0].mxu0
        %3942 = vmatprep.mubr.bf16.mxu0 0
        %3943 = vmatmul.mubr.bf16.gmra.mrb[0].mxu0 %v3796
        %v3944 = vpop.f32.mrb[0].mxu0
        %v3945 = vadd.f32 0.0, %v3944
        %v3946 = vpop.f32.mrb[0].mxu0
        %v3947 = vpop.f32.mrb[0].mxu0
        %v3948 = vadd.f32 0.0, %v3947
        %v3949 = vpop.f32.mrb[0].mxu0
        %3950 = vmatprep.mubr.bf16.mxu0 0
        %3951 = vmatmul.mubr.bf16.gmra.mrb[0].mxu0 %v3797
        %v3952 = vpop.f32.mrb[0].mxu0
        %v3953 = vadd.f32 0.0, %v3952
        %v3954 = vpop.f32.mrb[0].mxu0
        %v3955 = vpop.f32.mrb[0].mxu0
        %v3956 = vadd.f32 0.0, %v3955
        %v3957 = vpop.f32.mrb[0].mxu0
        %3958 = vdwg.mxu0
        %v3959 = vadd.f32 %v3774, %v3897
        %v3960 = vadd.f32 %v3775, %v3900
        %v3961 = vadd.f32 %v3776, %v3905
        %v3962 = vadd.f32 %v3777, %v3908
        %v3963 = vadd.f32 %v3778, %v3913
        %v3964 = vadd.f32 %v3779, %v3916
        %v3965 = vadd.f32 %v3780, %v3921
        %v3966 = vadd.f32 %v3781, %v3924
        %v3967 = vadd.f32 %v3782, %v3929
        %v3968 = vadd.f32 %v3783, %v3932
        %v3969 = vadd.f32 %v3784, %v3937
        %v3970 = vadd.f32 %v3785, %v3940
        %v3971 = vadd.f32 %v3786, %v3945
        %v3972 = vadd.f32 %v3787, %v3948
        %v3973 = vadd.f32 %v3788, %v3953
        %v3974 = vadd.f32 %v3789, %v3956
        %v3975 = vld [vmem:[%s893] sm:$0x1]
        %v3976 = vld [vmem:[%s896] sm:$0x1]
        %3977 = vadd.xlane.f32.xlu0 %v3959
        %v3978 = vpop.xlane.xlu0 %3977
        %3979 = vadd.xlane.f32.xlu0 %v3960
        %v3980 = vpop.xlane.xlu0 %3979
        %3981 = vadd.xlane.f32.xlu0 %v3961
        %v3982 = vpop.xlane.xlu0 %3981
        %3983 = vadd.xlane.f32.xlu0 %v3962
        %v3984 = vpop.xlane.xlu0 %3983
        %3985 = vadd.xlane.f32.xlu0 %v3963
        %v3986 = vpop.xlane.xlu0 %3985
        %3987 = vadd.xlane.f32.xlu0 %v3964
        %v3988 = vpop.xlane.xlu0 %3987
        %3989 = vadd.xlane.f32.xlu0 %v3965
        %v3990 = vpop.xlane.xlu0 %3989
        %3991 = vadd.xlane.f32.xlu0 %v3966
        %v3992 = vpop.xlane.xlu0 %3991
        %3993 = vadd.xlane.f32.xlu0 %v3967
        %v3994 = vpop.xlane.xlu0 %3993
        %3995 = vadd.xlane.f32.xlu0 %v3968
        %v3996 = vpop.xlane.xlu0 %3995
        %3997 = vadd.xlane.f32.xlu0 %v3969
        %v3998 = vpop.xlane.xlu0 %3997
        %3999 = vadd.xlane.f32.xlu0 %v3970
        %v4000 = vpop.xlane.xlu0 %3999
        %4001 = vadd.xlane.f32.xlu0 %v3971
        %v4002 = vpop.xlane.xlu0 %4001
        %4003 = vadd.xlane.f32.xlu0 %v3972
        %v4004 = vpop.xlane.xlu0 %4003
        %4005 = vadd.xlane.f32.xlu0 %v3973
        %v4006 = vpop.xlane.xlu0 %4005
        %4007 = vadd.xlane.f32.xlu0 %v3974
        %v4008 = vpop.xlane.xlu0 %4007
        %v4009 = vmul.f32 %v3978, %v988
        %v4010 = vmul.f32 %v3980, %v988
        %v4011 = vmul.f32 %v3982, %v988
        %v4012 = vmul.f32 %v3984, %v988
        %v4013 = vmul.f32 %v3986, %v988
        %v4014 = vmul.f32 %v3988, %v988
        %v4015 = vmul.f32 %v3990, %v988
        %v4016 = vmul.f32 %v3992, %v988
        %v4017 = vmul.f32 %v3994, %v988
        %v4018 = vmul.f32 %v3996, %v988
        %v4019 = vmul.f32 %v3998, %v988
        %v4020 = vmul.f32 %v4000, %v988
        %v4021 = vmul.f32 %v4002, %v988
        %v4022 = vmul.f32 %v4004, %v988
        %v4023 = vmul.f32 %v4006, %v988
        %v4024 = vmul.f32 %v4008, %v988
        %v4025 = vsub.f32 %v3959, %v4009
        %v4026 = vsub.f32 %v3960, %v4010
        %v4027 = vsub.f32 %v3961, %v4011
        %v4028 = vsub.f32 %v3962, %v4012
        %v4029 = vsub.f32 %v3963, %v4013
        %v4030 = vsub.f32 %v3964, %v4014
        %v4031 = vsub.f32 %v3965, %v4015
        %v4032 = vsub.f32 %v3966, %v4016
        %v4033 = vsub.f32 %v3967, %v4017
        %v4034 = vsub.f32 %v3968, %v4018
        %v4035 = vsub.f32 %v3969, %v4019
        %v4036 = vsub.f32 %v3970, %v4020
        %v4037 = vsub.f32 %v3971, %v4021
        %v4038 = vsub.f32 %v3972, %v4022
        %v4039 = vsub.f32 %v3973, %v4023
        %v4040 = vsub.f32 %v3974, %v4024
        %v4041 = vmul.f32 %v4025, %v4025
        %v4042 = vmul.f32 %v4026, %v4026
        %v4043 = vmul.f32 %v4027, %v4027
        %v4044 = vmul.f32 %v4028, %v4028
        %v4045 = vmul.f32 %v4029, %v4029
        %v4046 = vmul.f32 %v4030, %v4030
        %v4047 = vmul.f32 %v4031, %v4031
        %v4048 = vmul.f32 %v4032, %v4032
        %v4049 = vmul.f32 %v4033, %v4033
        %v4050 = vmul.f32 %v4034, %v4034
        %v4051 = vmul.f32 %v4035, %v4035
        %v4052 = vmul.f32 %v4036, %v4036
        %v4053 = vmul.f32 %v4037, %v4037
        %v4054 = vmul.f32 %v4038, %v4038
        %v4055 = vmul.f32 %v4039, %v4039
        %v4056 = vmul.f32 %v4040, %v4040
        %4057 = vadd.xlane.f32.xlu0 %v4041
        %v4058 = vpop.xlane.xlu0 %4057
        %4059 = vadd.xlane.f32.xlu0 %v4042
        %v4060 = vpop.xlane.xlu0 %4059
        %4061 = vadd.xlane.f32.xlu0 %v4043
        %v4062 = vpop.xlane.xlu0 %4061
        %4063 = vadd.xlane.f32.xlu0 %v4044
        %v4064 = vpop.xlane.xlu0 %4063
        %4065 = vadd.xlane.f32.xlu0 %v4045
        %v4066 = vpop.xlane.xlu0 %4065
        %4067 = vadd.xlane.f32.xlu0 %v4046
        %v4068 = vpop.xlane.xlu0 %4067
        %4069 = vadd.xlane.f32.xlu0 %v4047
        %v4070 = vpop.xlane.xlu0 %4069
        %4071 = vadd.xlane.f32.xlu0 %v4048
        %v4072 = vpop.xlane.xlu0 %4071
        %4073 = vadd.xlane.f32.xlu0 %v4049
        %v4074 = vpop.xlane.xlu0 %4073
        %4075 = vadd.xlane.f32.xlu0 %v4050
        %v4076 = vpop.xlane.xlu0 %4075
        %4077 = vadd.xlane.f32.xlu0 %v4051
        %v4078 = vpop.xlane.xlu0 %4077
        %4079 = vadd.xlane.f32.xlu0 %v4052
        %v4080 = vpop.xlane.xlu0 %4079
        %4081 = vadd.xlane.f32.xlu0 %v4053
        %v4082 = vpop.xlane.xlu0 %4081
        %4083 = vadd.xlane.f32.xlu0 %v4054
        %v4084 = vpop.xlane.xlu0 %4083
        %4085 = vadd.xlane.f32.xlu0 %v4055
        %v4086 = vpop.xlane.xlu0 %4085
        %4087 = vadd.xlane.f32.xlu0 %v4056
        %v4088 = vpop.xlane.xlu0 %4087
        %v4089 = vmul.f32 %v4058, 0.007874016
        %v4090 = vmul.f32 %v4060, 0.007874016
        %v4091 = vmul.f32 %v4062, 0.007874016
        %v4092 = vmul.f32 %v4064, 0.007874016
        %v4093 = vmul.f32 %v4066, 0.007874016
        %v4094 = vmul.f32 %v4068, 0.007874016
        %v4095 = vmul.f32 %v4070, 0.007874016
        %v4096 = vmul.f32 %v4072, 0.007874016
        %v4097 = vmul.f32 %v4074, 0.007874016
        %v4098 = vmul.f32 %v4076, 0.007874016
        %v4099 = vmul.f32 %v4078, 0.007874016
        %v4100 = vmul.f32 %v4080, 0.007874016
        %v4101 = vmul.f32 %v4082, 0.007874016
        %v4102 = vmul.f32 %v4084, 0.007874016
        %v4103 = vmul.f32 %v4086, 0.007874016
        %v4104 = vmul.f32 %v4088, 0.007874016
        %v4105 = vrsqrt.pop %v4089
        %v4106 = vmul.f32 %v4089, %v4105
        %vm4107 = vcmp.eq.f32.partialorder %v4089, inf
        %v4108 = vsel %vm4107, %v4089, %v4106
        %vm4109 = vcmp.eq.f32.partialorder %v4089, 0.0
        %v4110 = vand.u32 %v4089, 2147483648
        %v4111 = vsel %vm4109, %v4110, %v4108
        %v4112 = vrsqrt.pop %v4090
        %v4113 = vmul.f32 %v4090, %v4112
        %vm4114 = vcmp.eq.f32.partialorder %v4090, inf
        %v4115 = vsel %vm4114, %v4090, %v4113
        %vm4116 = vcmp.eq.f32.partialorder %v4090, 0.0
        %v4117 = vand.u32 %v4090, 2147483648
        %v4118 = vsel %vm4116, %v4117, %v4115
        %v4119 = vrsqrt.pop %v4091
        %v4120 = vmul.f32 %v4091, %v4119
        %vm4121 = vcmp.eq.f32.partialorder %v4091, inf
        %v4122 = vsel %vm4121, %v4091, %v4120
        %vm4123 = vcmp.eq.f32.partialorder %v4091, 0.0
        %v4124 = vand.u32 %v4091, 2147483648
        %v4125 = vsel %vm4123, %v4124, %v4122
        %v4126 = vrsqrt.pop %v4092
        %v4127 = vmul.f32 %v4092, %v4126
        %vm4128 = vcmp.eq.f32.partialorder %v4092, inf
        %v4129 = vsel %vm4128, %v4092, %v4127
        %vm4130 = vcmp.eq.f32.partialorder %v4092, 0.0
        %v4131 = vand.u32 %v4092, 2147483648
        %v4132 = vsel %vm4130, %v4131, %v4129
        %v4133 = vrsqrt.pop %v4093
        %v4134 = vmul.f32 %v4093, %v4133
        %vm4135 = vcmp.eq.f32.partialorder %v4093, inf
        %v4136 = vsel %vm4135, %v4093, %v4134
        %vm4137 = vcmp.eq.f32.partialorder %v4093, 0.0
        %v4138 = vand.u32 %v4093, 2147483648
        %v4139 = vsel %vm4137, %v4138, %v4136
        %v4140 = vrsqrt.pop %v4094
        %v4141 = vmul.f32 %v4094, %v4140
        %vm4142 = vcmp.eq.f32.partialorder %v4094, inf
        %v4143 = vsel %vm4142, %v4094, %v4141
        %vm4144 = vcmp.eq.f32.partialorder %v4094, 0.0
        %v4145 = vand.u32 %v4094, 2147483648
        %v4146 = vsel %vm4144, %v4145, %v4143
        %v4147 = vrsqrt.pop %v4095
        %v4148 = vmul.f32 %v4095, %v4147
        %vm4149 = vcmp.eq.f32.partialorder %v4095, inf
        %v4150 = vsel %vm4149, %v4095, %v4148
        %vm4151 = vcmp.eq.f32.partialorder %v4095, 0.0
        %v4152 = vand.u32 %v4095, 2147483648
        %v4153 = vsel %vm4151, %v4152, %v4150
        %v4154 = vrsqrt.pop %v4096
        %v4155 = vmul.f32 %v4096, %v4154
        %vm4156 = vcmp.eq.f32.partialorder %v4096, inf
        %v4157 = vsel %vm4156, %v4096, %v4155
        %vm4158 = vcmp.eq.f32.partialorder %v4096, 0.0
        %v4159 = vand.u32 %v4096, 2147483648
        %v4160 = vsel %vm4158, %v4159, %v4157
        %v4161 = vrsqrt.pop %v4097
        %v4162 = vmul.f32 %v4097, %v4161
        %vm4163 = vcmp.eq.f32.partialorder %v4097, inf
        %v4164 = vsel %vm4163, %v4097, %v4162
        %vm4165 = vcmp.eq.f32.partialorder %v4097, 0.0
        %v4166 = vand.u32 %v4097, 2147483648
        %v4167 = vsel %vm4165, %v4166, %v4164
        %v4168 = vrsqrt.pop %v4098
        %v4169 = vmul.f32 %v4098, %v4168
        %vm4170 = vcmp.eq.f32.partialorder %v4098, inf
        %v4171 = vsel %vm4170, %v4098, %v4169
        %vm4172 = vcmp.eq.f32.partialorder %v4098, 0.0
        %v4173 = vand.u32 %v4098, 2147483648
        %v4174 = vsel %vm4172, %v4173, %v4171
        %v4175 = vrsqrt.pop %v4099
        %v4176 = vmul.f32 %v4099, %v4175
        %vm4177 = vcmp.eq.f32.partialorder %v4099, inf
        %v4178 = vsel %vm4177, %v4099, %v4176
        %vm4179 = vcmp.eq.f32.partialorder %v4099, 0.0
        %v4180 = vand.u32 %v4099, 2147483648
        %v4181 = vsel %vm4179, %v4180, %v4178
        %v4182 = vrsqrt.pop %v4100
        %v4183 = vmul.f32 %v4100, %v4182
        %vm4184 = vcmp.eq.f32.partialorder %v4100, inf
        %v4185 = vsel %vm4184, %v4100, %v4183
        %vm4186 = vcmp.eq.f32.partialorder %v4100, 0.0
        %v4187 = vand.u32 %v4100, 2147483648
        %v4188 = vsel %vm4186, %v4187, %v4185
        %v4189 = vrsqrt.pop %v4101
        %v4190 = vmul.f32 %v4101, %v4189
        %vm4191 = vcmp.eq.f32.partialorder %v4101, inf
        %v4192 = vsel %vm4191, %v4101, %v4190
        %vm4193 = vcmp.eq.f32.partialorder %v4101, 0.0
        %v4194 = vand.u32 %v4101, 2147483648
        %v4195 = vsel %vm4193, %v4194, %v4192
        %v4196 = vrsqrt.pop %v4102
        %v4197 = vmul.f32 %v4102, %v4196
        %vm4198 = vcmp.eq.f32.partialorder %v4102, inf
        %v4199 = vsel %vm4198, %v4102, %v4197
        %vm4200 = vcmp.eq.f32.partialorder %v4102, 0.0
        %v4201 = vand.u32 %v4102, 2147483648
        %v4202 = vsel %vm4200, %v4201, %v4199
        %v4203 = vrsqrt.pop %v4103
        %v4204 = vmul.f32 %v4103, %v4203
        %vm4205 = vcmp.eq.f32.partialorder %v4103, inf
        %v4206 = vsel %vm4205, %v4103, %v4204
        %vm4207 = vcmp.eq.f32.partialorder %v4103, 0.0
        %v4208 = vand.u32 %v4103, 2147483648
        %v4209 = vsel %vm4207, %v4208, %v4206
        %v4210 = vrsqrt.pop %v4104
        %v4211 = vmul.f32 %v4104, %v4210
        %vm4212 = vcmp.eq.f32.partialorder %v4104, inf
        %v4213 = vsel %vm4212, %v4104, %v4211
        %vm4214 = vcmp.eq.f32.partialorder %v4104, 0.0
        %v4215 = vand.u32 %v4104, 2147483648
        %v4216 = vsel %vm4214, %v4215, %v4213
        %v4217 = vadd.f32 %v4111, 1e-06
        %v4218 = vadd.f32 %v4118, 1e-06
        %v4219 = vadd.f32 %v4125, 1e-06
        %v4220 = vadd.f32 %v4132, 1e-06
        %v4221 = vadd.f32 %v4139, 1e-06
        %v4222 = vadd.f32 %v4146, 1e-06
        %v4223 = vadd.f32 %v4153, 1e-06
        %v4224 = vadd.f32 %v4160, 1e-06
        %v4225 = vadd.f32 %v4167, 1e-06
        %v4226 = vadd.f32 %v4174, 1e-06
        %v4227 = vadd.f32 %v4181, 1e-06
        %v4228 = vadd.f32 %v4188, 1e-06
        %v4229 = vadd.f32 %v4195, 1e-06
        %v4230 = vadd.f32 %v4202, 1e-06
        %v4231 = vadd.f32 %v4209, 1e-06
        %v4232 = vadd.f32 %v4216, 1e-06
        %v4233 = vrcp.pop %v4217
        %v4234 = vrcp.pop %v4218
        %v4235 = vrcp.pop %v4219
        %v4236 = vrcp.pop %v4220
        %v4237 = vrcp.pop %v4221
        %v4238 = vrcp.pop %v4222
        %v4239 = vrcp.pop %v4223
        %v4240 = vrcp.pop %v4224
        %v4241 = vrcp.pop %v4225
        %v4242 = vrcp.pop %v4226
        %v4243 = vrcp.pop %v4227
        %v4244 = vrcp.pop %v4228
        %v4245 = vrcp.pop %v4229
        %v4246 = vrcp.pop %v4230
        %v4247 = vrcp.pop %v4231
        %v4248 = vrcp.pop %v4232
        %v4250 = vlaneseq
        %v4251 = vshrl.u32 %v4250, 7
        %v4252 = vsub.s32 0, %v4251
        %v4253 = vrot.slane %v3975, %v4252
        %v4255 = vmul.f32 %v4253, %v4025
        %v4256 = vmul.f32 %v4253, %v4026
        %v4257 = vmul.f32 %v4253, %v4027
        %v4258 = vmul.f32 %v4253, %v4028
        %v4259 = vmul.f32 %v4253, %v4029
        %v4260 = vmul.f32 %v4253, %v4030
        %v4261 = vmul.f32 %v4253, %v4031
        %v4262 = vmul.f32 %v4253, %v4032
        %v4263 = vmul.f32 %v4253, %v4033
        %v4264 = vmul.f32 %v4253, %v4034
        %v4265 = vmul.f32 %v4253, %v4035
        %v4266 = vmul.f32 %v4253, %v4036
        %v4267 = vmul.f32 %v4253, %v4037
        %v4268 = vmul.f32 %v4253, %v4038
        %v4269 = vmul.f32 %v4253, %v4039
        %v4270 = vmul.f32 %v4253, %v4040
        %v4271 = vmul.f32 %v4255, %v4233
        %v4272 = vmul.f32 %v4256, %v4234
        %v4273 = vmul.f32 %v4257, %v4235
        %v4274 = vmul.f32 %v4258, %v4236
        %v4275 = vmul.f32 %v4259, %v4237
        %v4276 = vmul.f32 %v4260, %v4238
        %v4277 = vmul.f32 %v4261, %v4239
        %v4278 = vmul.f32 %v4262, %v4240
        %v4279 = vmul.f32 %v4263, %v4241
        %v4280 = vmul.f32 %v4264, %v4242
        %v4281 = vmul.f32 %v4265, %v4243
        %v4282 = vmul.f32 %v4266, %v4244
        %v4283 = vmul.f32 %v4267, %v4245
        %v4284 = vmul.f32 %v4268, %v4246
        %v4285 = vmul.f32 %v4269, %v4247
        %v4286 = vmul.f32 %v4270, %v4248
        %v4288 = vlaneseq
        %v4289 = vshrl.u32 %v4288, 7
        %v4290 = vsub.s32 0, %v4289
        %v4291 = vrot.slane %v3976, %v4290
        %v4293 = vadd.f32 %v4271, %v4291
        %v4294 = vadd.f32 %v4272, %v4291
        %v4295 = vadd.f32 %v4273, %v4291
        %v4296 = vadd.f32 %v4274, %v4291
        %v4297 = vadd.f32 %v4275, %v4291
        %v4298 = vadd.f32 %v4276, %v4291
        %v4299 = vadd.f32 %v4277, %v4291
        %v4300 = vadd.f32 %v4278, %v4291
        %v4301 = vadd.f32 %v4279, %v4291
        %v4302 = vadd.f32 %v4280, %v4291
        %v4303 = vadd.f32 %v4281, %v4291
        %v4304 = vadd.f32 %v4282, %v4291
        %v4305 = vadd.f32 %v4283, %v4291
        %v4306 = vadd.f32 %v4284, %v4291
        %v4307 = vadd.f32 %v4285, %v4291
        %v4308 = vadd.f32 %v4286, %v4291
        %v4309 = vpack.c.bf16 %v4294, %v4293
        %v4310 = vpack.c.bf16 %v4296, %v4295
        %v4311 = vpack.c.bf16 %v4298, %v4297
        %v4312 = vpack.c.bf16 %v4300, %v4299
        %v4313 = vpack.c.bf16 %v4302, %v4301
        %v4314 = vpack.c.bf16 %v4304, %v4303
        %v4315 = vpack.c.bf16 %v4306, %v4305
        %v4316 = vpack.c.bf16 %v4308, %v4307
        %v4317 = vld [vmem:[%s762] sm:$0xff]
        %v4318 = vld [vmem:[%s762 + $0x8] sm:$0xff]
        %v4319 = vld [vmem:[%s762 + $0x10] sm:$0xff]
        %v4320 = vld [vmem:[%s762 + $0x18] sm:$0xff]
        %v4321 = vld [vmem:[%s762 + $0x20] sm:$0xff]
        %v4322 = vld [vmem:[%s762 + $0x28] sm:$0xff]
        %v4323 = vld [vmem:[%s762 + $0x30] sm:$0xff]
        %v4324 = vld [vmem:[%s762 + $0x38] sm:$0xff]
        %v4325 = vld [vmem:[%s762 + $0x40] sm:$0xff]
        %v4326 = vld [vmem:[%s762 + $0x48] sm:$0xff]
        %v4327 = vld [vmem:[%s762 + $0x50] sm:$0xff]
        %v4328 = vld [vmem:[%s762 + $0x58] sm:$0xff]
        %v4329 = vld [vmem:[%s762 + $0x60] sm:$0xff]
        %v4330 = vld [vmem:[%s762 + $0x68] sm:$0xff]
        %v4331 = vld [vmem:[%s762 + $0x70] sm:$0xff]
        %v4332 = vld [vmem:[%s762 + $0x78] sm:$0xff]
        %v4333 = vld [vmem:[%s900] sm:$0x3]
        %v4335 = vlaneseq
        %v4336 = vshrl.u32 %v4335, 7
        %v4337 = vsub.s32 0, %v4336
        %v4338 = vrot.slane %v4333, %v4337
        %v4339 = vlaneseq
        %v4340 = vshrl.u32 %v4339, 7
        %v4341 = vsub.s32 1, %v4340
        %v4342 = vrot.slane %v4333, %v4341
        %v4361 = vunpack.c.l.b16 %v4317
        %v4362 = vunpack.c.h.b16 %v4317
        %v4363 = vunpack.c.l.b16 %v4318
        %v4364 = vunpack.c.h.b16 %v4318
        %v4365 = vunpack.c.l.b16 %v4319
        %v4366 = vunpack.c.h.b16 %v4319
        %v4367 = vunpack.c.l.b16 %v4320
        %v4368 = vunpack.c.h.b16 %v4320
        %v4369 = vunpack.c.l.b16 %v4321
        %v4370 = vunpack.c.h.b16 %v4321
        %v4371 = vunpack.c.l.b16 %v4322
        %v4372 = vunpack.c.h.b16 %v4322
        %v4373 = vunpack.c.l.b16 %v4323
        %v4374 = vunpack.c.h.b16 %v4323
        %v4375 = vunpack.c.l.b16 %v4324
        %v4376 = vunpack.c.h.b16 %v4324
        %v4377 = vunpack.c.l.b16 %v4325
        %v4378 = vunpack.c.h.b16 %v4325
        %v4379 = vunpack.c.l.b16 %v4326
        %v4380 = vunpack.c.h.b16 %v4326
        %v4381 = vunpack.c.l.b16 %v4327
        %v4382 = vunpack.c.h.b16 %v4327
        %v4383 = vunpack.c.l.b16 %v4328
        %v4384 = vunpack.c.h.b16 %v4328
        %v4385 = vunpack.c.l.b16 %v4329
        %v4386 = vunpack.c.h.b16 %v4329
        %v4387 = vunpack.c.l.b16 %v4330
        %v4388 = vunpack.c.h.b16 %v4330
        %v4389 = vunpack.c.l.b16 %v4331
        %v4390 = vunpack.c.h.b16 %v4331
        %v4391 = vunpack.c.l.b16 %v4332
        %v4392 = vunpack.c.h.b16 %v4332
        %v4393 = vpack.c.b16 %v4363, %v4361
        %v4394 = vpack.c.b16 %v4364, %v4362
        %v4395 = vpack.c.b16 %v4367, %v4365
        %v4396 = vpack.c.b16 %v4368, %v4366
        %v4397 = vpack.c.b16 %v4371, %v4369
        %v4398 = vpack.c.b16 %v4372, %v4370
        %v4399 = vpack.c.b16 %v4375, %v4373
        %v4400 = vpack.c.b16 %v4376, %v4374
        %v4401 = vpack.c.b16 %v4379, %v4377
        %v4402 = vpack.c.b16 %v4380, %v4378
        %v4403 = vpack.c.b16 %v4383, %v4381
        %v4404 = vpack.c.b16 %v4384, %v4382
        %v4405 = vpack.c.b16 %v4387, %v4385
        %v4406 = vpack.c.b16 %v4388, %v4386
        %v4407 = vpack.c.b16 %v4391, %v4389
        %v4408 = vpack.c.b16 %v4392, %v4390
        %4425 = vmatprep.subr.bf16.mxu0 %v4394
        %4426 = vmatpush1.bf16.msra.mxu0 %v4393
        %4427 = vmatprep.subr.bf16.mxu0 %v4396
        %4428 = vmatpush1.bf16.msra.mxu0 %v4395
        %4429 = vmatprep.subr.bf16.mxu0 %v4398
        %4430 = vmatpush1.bf16.msra.mxu0 %v4397
        %4431 = vmatprep.subr.bf16.mxu0 %v4400
        %4432 = vmatpush1.bf16.msra.mxu0 %v4399
        %4433 = vmatprep.subr.bf16.mxu0 %v4402
        %4434 = vmatpush1.bf16.msra.mxu0 %v4401
        %4435 = vmatprep.subr.bf16.mxu0 %v4404
        %4436 = vmatpush1.bf16.msra.mxu0 %v4403
        %4437 = vmatprep.subr.bf16.mxu0 %v4406
        %4438 = vmatpush1.bf16.msra.mxu0 %v4405
        %4439 = vmatprep.subr.bf16.mxu0 %v4408
        %4440 = vmatpush1.bf16.msra.mxu0 %v4407
        %4441 = vmatprep.subr.bf16.mxu0 0
        %4442 = vmatpush1.bf16.msra.mxu0 0
        %4443 = vmatprep.subr.bf16.mxu0 0
        %4444 = vmatpush1.bf16.msra.mxu0 0
        %4445 = vmatprep.subr.bf16.mxu0 0
        %4446 = vmatpush1.bf16.msra.mxu0 0
        %4447 = vmatprep.subr.bf16.mxu0 0
        %4448 = vmatpush1.bf16.msra.mxu0 0
        %4449 = vmatprep.subr.bf16.mxu0 0
        %4450 = vmatpush1.bf16.msra.mxu0 0
        %4451 = vmatprep.subr.bf16.mxu0 0
        %4452 = vmatpush1.bf16.msra.mxu0 0
        %4453 = vmatprep.subr.bf16.mxu0 0
        %4454 = vmatpush1.bf16.msra.mxu0 0
        %4455 = vmatprep.subr.bf16.mxu0 0
        %4456 = vmatpush1.bf16.msra.mxu0 0
        %4457 = vmatprep.mubr.bf16.mxu0 0
        %4458 = vmatmul.mubr.bf16.gmra.mrb[0].mxu0 %v4309
        %v4459 = vpop.f32.mrb[0].mxu0
        %v4460 = vadd.f32 %v4338, %v4459
        %v4461 = vpop.f32.mrb[0].mxu0
        %v4462 = vadd.f32 %v4342, %v4461
        %v4463 = vpop.f32.mrb[0].mxu0
        %v4464 = vadd.f32 %v4338, %v4463
        %v4465 = vpop.f32.mrb[0].mxu0
        %v4466 = vadd.f32 %v4342, %v4465
        %4467 = vmatprep.mubr.bf16.mxu0 0
        %4468 = vmatmul.mubr.bf16.gmra.mrb[0].mxu0 %v4310
        %v4469 = vpop.f32.mrb[0].mxu0
        %v4470 = vadd.f32 %v4338, %v4469
        %v4471 = vpop.f32.mrb[0].mxu0
        %v4472 = vadd.f32 %v4342, %v4471
        %v4473 = vpop.f32.mrb[0].mxu0
        %v4474 = vadd.f32 %v4338, %v4473
        %v4475 = vpop.f32.mrb[0].mxu0
        %v4476 = vadd.f32 %v4342, %v4475
        %4477 = vmatprep.mubr.bf16.mxu0 0
        %4478 = vmatmul.mubr.bf16.gmra.mrb[0].mxu0 %v4311
        %v4479 = vpop.f32.mrb[0].mxu0
        %v4480 = vadd.f32 %v4338, %v4479
        %v4481 = vpop.f32.mrb[0].mxu0
        %v4482 = vadd.f32 %v4342, %v4481
        %v4483 = vpop.f32.mrb[0].mxu0
        %v4484 = vadd.f32 %v4338, %v4483
        %v4485 = vpop.f32.mrb[0].mxu0
        %v4486 = vadd.f32 %v4342, %v4485
        %4487 = vmatprep.mubr.bf16.mxu0 0
        %4488 = vmatmul.mubr.bf16.gmra.mrb[0].mxu0 %v4312
        %v4489 = vpop.f32.mrb[0].mxu0
        %v4490 = vadd.f32 %v4338, %v4489
        %v4491 = vpop.f32.mrb[0].mxu0
        %v4492 = vadd.f32 %v4342, %v4491
        %v4493 = vpop.f32.mrb[0].mxu0
        %v4494 = vadd.f32 %v4338, %v4493
        %v4495 = vpop.f32.mrb[0].mxu0
        %v4496 = vadd.f32 %v4342, %v4495
        %4497 = vmatprep.mubr.bf16.mxu0 0
        %4498 = vmatmul.mubr.bf16.gmra.mrb[0].mxu0 %v4313
        %v4499 = vpop.f32.mrb[0].mxu0
        %v4500 = vadd.f32 %v4338, %v4499
        %v4501 = vpop.f32.mrb[0].mxu0
        %v4502 = vadd.f32 %v4342, %v4501
        %v4503 = vpop.f32.mrb[0].mxu0
        %v4504 = vadd.f32 %v4338, %v4503
        %v4505 = vpop.f32.mrb[0].mxu0
        %v4506 = vadd.f32 %v4342, %v4505
        %4507 = vmatprep.mubr.bf16.mxu0 0
        %4508 = vmatmul.mubr.bf16.gmra.mrb[0].mxu0 %v4314
        %v4509 = vpop.f32.mrb[0].mxu0
        %v4510 = vadd.f32 %v4338, %v4509
        %v4511 = vpop.f32.mrb[0].mxu0
        %v4512 = vadd.f32 %v4342, %v4511
        %v4513 = vpop.f32.mrb[0].mxu0
        %v4514 = vadd.f32 %v4338, %v4513
        %v4515 = vpop.f32.mrb[0].mxu0
        %v4516 = vadd.f32 %v4342, %v4515
        %4517 = vmatprep.mubr.bf16.mxu0 0
        %4518 = vmatmul.mubr.bf16.gmra.mrb[0].mxu0 %v4315
        %v4519 = vpop.f32.mrb[0].mxu0
        %v4520 = vadd.f32 %v4338, %v4519
        %v4521 = vpop.f32.mrb[0].mxu0
        %v4522 = vadd.f32 %v4342, %v4521
        %v4523 = vpop.f32.mrb[0].mxu0
        %v4524 = vadd.f32 %v4338, %v4523
        %v4525 = vpop.f32.mrb[0].mxu0
        %v4526 = vadd.f32 %v4342, %v4525
        %4527 = vmatprep.mubr.bf16.mxu0 0
        %4528 = vmatmul.mubr.bf16.gmra.mrb[0].mxu0 %v4316
        %v4529 = vpop.f32.mrb[0].mxu0
        %v4530 = vadd.f32 %v4338, %v4529
        %v4531 = vpop.f32.mrb[0].mxu0
        %v4532 = vadd.f32 %v4342, %v4531
        %v4533 = vpop.f32.mrb[0].mxu0
        %v4534 = vadd.f32 %v4338, %v4533
        %v4535 = vpop.f32.mrb[0].mxu0
        %v4536 = vadd.f32 %v4342, %v4535
        %4537 = vdwg.mxu0
        %v4538 = vmax.f32 %v4460, 0.0
        %v4539 = vmax.f32 %v4462, 0.0
        %v4540 = vmax.f32 %v4464, 0.0
        %v4541 = vmax.f32 %v4466, 0.0
        %v4542 = vmax.f32 %v4470, 0.0
        %v4543 = vmax.f32 %v4472, 0.0
        %v4544 = vmax.f32 %v4474, 0.0
        %v4545 = vmax.f32 %v4476, 0.0
        %v4546 = vmax.f32 %v4480, 0.0
        %v4547 = vmax.f32 %v4482, 0.0
        %v4548 = vmax.f32 %v4484, 0.0
        %v4549 = vmax.f32 %v4486, 0.0
        %v4550 = vmax.f32 %v4490, 0.0
        %v4551 = vmax.f32 %v4492, 0.0
        %v4552 = vmax.f32 %v4494, 0.0
        %v4553 = vmax.f32 %v4496, 0.0
        %v4554 = vmax.f32 %v4500, 0.0
        %v4555 = vmax.f32 %v4502, 0.0
        %v4556 = vmax.f32 %v4504, 0.0
        %v4557 = vmax.f32 %v4506, 0.0
        %v4558 = vmax.f32 %v4510, 0.0
        %v4559 = vmax.f32 %v4512, 0.0
        %v4560 = vmax.f32 %v4514, 0.0
        %v4561 = vmax.f32 %v4516, 0.0
        %v4562 = vmax.f32 %v4520, 0.0
        %v4563 = vmax.f32 %v4522, 0.0
        %v4564 = vmax.f32 %v4524, 0.0
        %v4565 = vmax.f32 %v4526, 0.0
        %v4566 = vmax.f32 %v4530, 0.0
        %v4567 = vmax.f32 %v4532, 0.0
        %v4568 = vmax.f32 %v4534, 0.0
        %v4569 = vmax.f32 %v4536, 0.0
        %v4570 = vpack.c.bf16 %v4540, %v4538
        %v4571 = vpack.c.bf16 %v4541, %v4539
        %v4572 = vpack.c.bf16 %v4544, %v4542
        %v4573 = vpack.c.bf16 %v4545, %v4543
        %v4574 = vpack.c.bf16 %v4548, %v4546
        %v4575 = vpack.c.bf16 %v4549, %v4547
        %v4576 = vpack.c.bf16 %v4552, %v4550
        %v4577 = vpack.c.bf16 %v4553, %v4551
        %v4578 = vpack.c.bf16 %v4556, %v4554
        %v4579 = vpack.c.bf16 %v4557, %v4555
        %v4580 = vpack.c.bf16 %v4560, %v4558
        %v4581 = vpack.c.bf16 %v4561, %v4559
        %v4582 = vpack.c.bf16 %v4564, %v4562
        %v4583 = vpack.c.bf16 %v4565, %v4563
        %v4584 = vpack.c.bf16 %v4568, %v4566
        %v4585 = vpack.c.bf16 %v4569, %v4567
        %v4586 = vld [vmem:[%s771] sm:$0xf]
        %v4587 = vld [vmem:[%s771 + $0x4] sm:$0xf]
        %v4588 = vld [vmem:[%s771 + $0x8] sm:$0xf]
        %v4589 = vld [vmem:[%s771 + $0xc] sm:$0xf]
        %v4590 = vld [vmem:[%s771 + $0x10] sm:$0xf]
        %v4591 = vld [vmem:[%s771 + $0x14] sm:$0xf]
        %v4592 = vld [vmem:[%s771 + $0x18] sm:$0xf]
        %v4593 = vld [vmem:[%s771 + $0x1c] sm:$0xf]
        %v4594 = vld [vmem:[%s771 + $0x20] sm:$0xf]
        %v4595 = vld [vmem:[%s771 + $0x24] sm:$0xf]
        %v4596 = vld [vmem:[%s771 + $0x28] sm:$0xf]
        %v4597 = vld [vmem:[%s771 + $0x2c] sm:$0xf]
        %v4598 = vld [vmem:[%s771 + $0x30] sm:$0xf]
        %v4599 = vld [vmem:[%s771 + $0x34] sm:$0xf]
        %v4600 = vld [vmem:[%s771 + $0x38] sm:$0xf]
        %v4601 = vld [vmem:[%s771 + $0x3c] sm:$0xf]
        %v4602 = vld [vmem:[%s771 + $0x40] sm:$0xf]
        %v4603 = vld [vmem:[%s771 + $0x44] sm:$0xf]
        %v4604 = vld [vmem:[%s771 + $0x48] sm:$0xf]
        %v4605 = vld [vmem:[%s771 + $0x4c] sm:$0xf]
        %v4606 = vld [vmem:[%s771 + $0x50] sm:$0xf]
        %v4607 = vld [vmem:[%s771 + $0x54] sm:$0xf]
        %v4608 = vld [vmem:[%s771 + $0x58] sm:$0xf]
        %v4609 = vld [vmem:[%s771 + $0x5c] sm:$0xf]
        %v4610 = vld [vmem:[%s771 + $0x60] sm:$0xf]
        %v4611 = vld [vmem:[%s771 + $0x64] sm:$0xf]
        %v4612 = vld [vmem:[%s771 + $0x68] sm:$0xf]
        %v4613 = vld [vmem:[%s771 + $0x6c] sm:$0xf]
        %v4614 = vld [vmem:[%s771 + $0x70] sm:$0xf]
        %v4615 = vld [vmem:[%s771 + $0x74] sm:$0xf]
        %v4616 = vld [vmem:[%s771 + $0x78] sm:$0xf]
        %v4617 = vld [vmem:[%s771 + $0x7c] sm:$0xf]
        %v4650 = vunpack.c.l.b16 %v4586
        %v4651 = vunpack.c.l.b16 %v4587
        %v4652 = vunpack.c.l.b16 %v4588
        %v4653 = vunpack.c.l.b16 %v4589
        %v4654 = vunpack.c.l.b16 %v4590
        %v4655 = vunpack.c.l.b16 %v4591
        %v4656 = vunpack.c.l.b16 %v4592
        %v4657 = vunpack.c.l.b16 %v4593
        %v4658 = vunpack.c.l.b16 %v4594
        %v4659 = vunpack.c.l.b16 %v4595
        %v4660 = vunpack.c.l.b16 %v4596
        %v4661 = vunpack.c.l.b16 %v4597
        %v4662 = vunpack.c.l.b16 %v4598
        %v4663 = vunpack.c.l.b16 %v4599
        %v4664 = vunpack.c.l.b16 %v4600
        %v4665 = vunpack.c.l.b16 %v4601
        %v4666 = vunpack.c.l.b16 %v4602
        %v4667 = vunpack.c.l.b16 %v4603
        %v4668 = vunpack.c.l.b16 %v4604
        %v4669 = vunpack.c.l.b16 %v4605
        %v4670 = vunpack.c.l.b16 %v4606
        %v4671 = vunpack.c.l.b16 %v4607
        %v4672 = vunpack.c.l.b16 %v4608
        %v4673 = vunpack.c.l.b16 %v4609
        %v4674 = vunpack.c.l.b16 %v4610
        %v4675 = vunpack.c.l.b16 %v4611
        %v4676 = vunpack.c.l.b16 %v4612
        %v4677 = vunpack.c.l.b16 %v4613
        %v4678 = vunpack.c.l.b16 %v4614
        %v4679 = vunpack.c.l.b16 %v4615
        %v4680 = vunpack.c.l.b16 %v4616
        %v4681 = vunpack.c.l.b16 %v4617
        %v4682 = vpack.c.b16 %v4651, %v4650
        %v4683 = vpack.c.b16 %v4653, %v4652
        %v4684 = vpack.c.b16 %v4655, %v4654
        %v4685 = vpack.c.b16 %v4657, %v4656
        %v4686 = vpack.c.b16 %v4659, %v4658
        %v4687 = vpack.c.b16 %v4661, %v4660
        %v4688 = vpack.c.b16 %v4663, %v4662
        %v4689 = vpack.c.b16 %v4665, %v4664
        %v4690 = vpack.c.b16 %v4667, %v4666
        %v4691 = vpack.c.b16 %v4669, %v4668
        %v4692 = vpack.c.b16 %v4671, %v4670
        %v4693 = vpack.c.b16 %v4673, %v4672
        %v4694 = vpack.c.b16 %v4675, %v4674
        %v4695 = vpack.c.b16 %v4677, %v4676
        %v4696 = vpack.c.b16 %v4679, %v4678
        %v4697 = vpack.c.b16 %v4681, %v4680
        %4714 = vmatprep.subr.bf16.mxu0 0
        %4715 = vmatpush1.bf16.msra.mxu0 %v4682
        %4716 = vmatprep.subr.bf16.mxu0 0
        %4717 = vmatpush1.bf16.msra.mxu0 %v4683
        %4718 = vmatprep.subr.bf16.mxu0 0
        %4719 = vmatpush1.bf16.msra.mxu0 %v4684
        %4720 = vmatprep.subr.bf16.mxu0 0
        %4721 = vmatpush1.bf16.msra.mxu0 %v4685
        %4722 = vmatprep.subr.bf16.mxu0 0
        %4723 = vmatpush1.bf16.msra.mxu0 %v4686
        %4724 = vmatprep.subr.bf16.mxu0 0
        %4725 = vmatpush1.bf16.msra.mxu0 %v4687
        %4726 = vmatprep.subr.bf16.mxu0 0
        %4727 = vmatpush1.bf16.msra.mxu0 %v4688
        %4728 = vmatprep.subr.bf16.mxu0 0
        %4729 = vmatpush1.bf16.msra.mxu0 %v4689
        %4730 = vmatprep.subr.bf16.mxu0 0
        %4731 = vmatpush1.bf16.msra.mxu0 %v4690
        %4732 = vmatprep.subr.bf16.mxu0 0
        %4733 = vmatpush1.bf16.msra.mxu0 %v4691
        %4734 = vmatprep.subr.bf16.mxu0 0
        %4735 = vmatpush1.bf16.msra.mxu0 %v4692
        %4736 = vmatprep.subr.bf16.mxu0 0
        %4737 = vmatpush1.bf16.msra.mxu0 %v4693
        %4738 = vmatprep.subr.bf16.mxu0 0
        %4739 = vmatpush1.bf16.msra.mxu0 %v4694
        %4740 = vmatprep.subr.bf16.mxu0 0
        %4741 = vmatpush1.bf16.msra.mxu0 %v4695
        %4742 = vmatprep.subr.bf16.mxu0 0
        %4743 = vmatpush1.bf16.msra.mxu0 %v4696
        %4744 = vmatprep.subr.bf16.mxu0 0
        %4745 = vmatpush1.bf16.msra.mxu0 %v4697
        %4746 = vmatprep.mubr.bf16.mxu0 %v4571
        %4747 = vmatmul.mubr.bf16.gmra.mrb[0].mxu0 %v4570
        %v4748 = vpop.f32.mrb[0].mxu0
        %v4749 = vadd.f32 0.0, %v4748
        %v4750 = vpop.f32.mrb[0].mxu0
        %v4751 = vpop.f32.mrb[0].mxu0
        %v4752 = vadd.f32 0.0, %v4751
        %v4753 = vpop.f32.mrb[0].mxu0
        %4754 = vmatprep.mubr.bf16.mxu0 %v4573
        %4755 = vmatmul.mubr.bf16.gmra.mrb[0].mxu0 %v4572
        %v4756 = vpop.f32.mrb[0].mxu0
        %v4757 = vadd.f32 0.0, %v4756
        %v4758 = vpop.f32.mrb[0].mxu0
        %v4759 = vpop.f32.mrb[0].mxu0
        %v4760 = vadd.f32 0.0, %v4759
        %v4761 = vpop.f32.mrb[0].mxu0
        %4762 = vmatprep.mubr.bf16.mxu0 %v4575
        %4763 = vmatmul.mubr.bf16.gmra.mrb[0].mxu0 %v4574
        %v4764 = vpop.f32.mrb[0].mxu0
        %v4765 = vadd.f32 0.0, %v4764
        %v4766 = vpop.f32.mrb[0].mxu0
        %v4767 = vpop.f32.mrb[0].mxu0
        %v4768 = vadd.f32 0.0, %v4767
        %v4769 = vpop.f32.mrb[0].mxu0
        %4770 = vmatprep.mubr.bf16.mxu0 %v4577
        %4771 = vmatmul.mubr.bf16.gmra.mrb[0].mxu0 %v4576
        %v4772 = vpop.f32.mrb[0].mxu0
        %v4773 = vadd.f32 0.0, %v4772
        %v4774 = vpop.f32.mrb[0].mxu0
        %v4775 = vpop.f32.mrb[0].mxu0
        %v4776 = vadd.f32 0.0, %v4775
        %v4777 = vpop.f32.mrb[0].mxu0
        %4778 = vmatprep.mubr.bf16.mxu0 %v4579
        %4779 = vmatmul.mubr.bf16.gmra.mrb[0].mxu0 %v4578
        %v4780 = vpop.f32.mrb[0].mxu0
        %v4781 = vadd.f32 0.0, %v4780
        %v4782 = vpop.f32.mrb[0].mxu0
        %v4783 = vpop.f32.mrb[0].mxu0
        %v4784 = vadd.f32 0.0, %v4783
        %v4785 = vpop.f32.mrb[0].mxu0
        %4786 = vmatprep.mubr.bf16.mxu0 %v4581
        %4787 = vmatmul.mubr.bf16.gmra.mrb[0].mxu0 %v4580
        %v4788 = vpop.f32.mrb[0].mxu0
        %v4789 = vadd.f32 0.0, %v4788
        %v4790 = vpop.f32.mrb[0].mxu0
        %v4791 = vpop.f32.mrb[0].mxu0
        %v4792 = vadd.f32 0.0, %v4791
        %v4793 = vpop.f32.mrb[0].mxu0
        %4794 = vmatprep.mubr.bf16.mxu0 %v4583
        %4795 = vmatmul.mubr.bf16.gmra.mrb[0].mxu0 %v4582
        %v4796 = vpop.f32.mrb[0].mxu0
        %v4797 = vadd.f32 0.0, %v4796
        %v4798 = vpop.f32.mrb[0].mxu0
        %v4799 = vpop.f32.mrb[0].mxu0
        %v4800 = vadd.f32 0.0, %v4799
        %v4801 = vpop.f32.mrb[0].mxu0
        %4802 = vmatprep.mubr.bf16.mxu0 %v4585
        %4803 = vmatmul.mubr.bf16.gmra.mrb[0].mxu0 %v4584
        %v4804 = vpop.f32.mrb[0].mxu0
        %v4805 = vadd.f32 0.0, %v4804
        %v4806 = vpop.f32.mrb[0].mxu0
        %v4807 = vpop.f32.mrb[0].mxu0
        %v4808 = vadd.f32 0.0, %v4807
        %v4809 = vpop.f32.mrb[0].mxu0
        %4810 = vdwg.mxu0
        %v4811 = vadd.f32 %v3959, %v4749
        %v4812 = vadd.f32 %v3960, %v4752
        %v4813 = vadd.f32 %v3961, %v4757
        %v4814 = vadd.f32 %v3962, %v4760
        %v4815 = vadd.f32 %v3963, %v4765
        %v4816 = vadd.f32 %v3964, %v4768
        %v4817 = vadd.f32 %v3965, %v4773
        %v4818 = vadd.f32 %v3966, %v4776
        %v4819 = vadd.f32 %v3967, %v4781
        %v4820 = vadd.f32 %v3968, %v4784
        %v4821 = vadd.f32 %v3969, %v4789
        %v4822 = vadd.f32 %v3970, %v4792
        %v4823 = vadd.f32 %v3971, %v4797
        %v4824 = vadd.f32 %v3972, %v4800
        %v4825 = vadd.f32 %v3973, %v4805
        %v4826 = vadd.f32 %v3974, %v4808
        %v4827 = vld [vmem:[%s779] sm:$0x1]
        %v4829 = vlaneseq
        %v4830 = vshrl.u32 %v4829, 7
        %v4831 = vsub.s32 0, %v4830
        %v4832 = vrot.slane %v4827, %v4831
        %v4834 = vadd.f32 %v4811, %v4832
        %v4835 = vadd.f32 %v4812, %v4832
        %v4836 = vadd.f32 %v4813, %v4832
        %v4837 = vadd.f32 %v4814, %v4832
        %v4838 = vadd.f32 %v4815, %v4832
        %v4839 = vadd.f32 %v4816, %v4832
        %v4840 = vadd.f32 %v4817, %v4832
        %v4841 = vadd.f32 %v4818, %v4832
        %v4842 = vadd.f32 %v4819, %v4832
        %v4843 = vadd.f32 %v4820, %v4832
        %v4844 = vadd.f32 %v4821, %v4832
        %v4845 = vadd.f32 %v4822, %v4832
        %v4846 = vadd.f32 %v4823, %v4832
        %v4847 = vadd.f32 %v4824, %v4832
        %v4848 = vadd.f32 %v4825, %v4832
        %v4849 = vadd.f32 %v4826, %v4832
        %4850 = vst [vmem:[#allocation2] sm:$0xff] %v4834
        %4851 = vst [vmem:[#allocation2 + $0x8] sm:$0xff] %v4835
        %4852 = vst [vmem:[#allocation2 + $0x10] sm:$0xff] %v4836
        %4853 = vst [vmem:[#allocation2 + $0x18] sm:$0xff] %v4837
        %4854 = vst [vmem:[#allocation2 + $0x20] sm:$0xff] %v4838
        %4855 = vst [vmem:[#allocation2 + $0x28] sm:$0xff] %v4839
        %4856 = vst [vmem:[#allocation2 + $0x30] sm:$0xff] %v4840
        %4857 = vst [vmem:[#allocation2 + $0x38] sm:$0xff] %v4841
        %4858 = vst [vmem:[#allocation2 + $0x40] sm:$0xff] %v4842
        %4859 = vst [vmem:[#allocation2 + $0x48] sm:$0xff] %v4843
        %4860 = vst [vmem:[#allocation2 + $0x50] sm:$0xff] %v4844
        %4861 = vst [vmem:[#allocation2 + $0x58] sm:$0xff] %v4845
        %4862 = vst [vmem:[#allocation2 + $0x60] sm:$0xff] %v4846
        %4863 = vst [vmem:[#allocation2 + $0x68] sm:$0xff] %v4847
        %4864 = vst [vmem:[#allocation2 + $0x70] sm:$0xff] %v4848
        %4865 = vst [vmem:[#allocation2 + $0x78] sm:$0xff] %v4849
        %p4866 = scmp.eq.s32.totalorder %s50, 1
        // Predicated region
        $region121: #{encoder_forward.1} parent=83 // pred_check
          %p4867 = pneg %p4866
        $region122: #{encoder_forward.1} parent=83 // pred_check_branch
          %4869 = sbr.rel (%p4867) target = $region124
        $region123: #{encoder_forward.1} parent=83 // pred_region
          %v4870 = vld [vmem:[%s14] sm:$0x1]
          %v4871 = vld [vmem:[%s15] sm:$0x1]
          %4872 = vadd.xlane.f32.xlu0 %v4834
          %v4873 = vpop.xlane.xlu0 %4872
          %4874 = vadd.xlane.f32.xlu0 %v4835
          %v4875 = vpop.xlane.xlu0 %4874
          %4876 = vadd.xlane.f32.xlu0 %v4836
          %v4877 = vpop.xlane.xlu0 %4876
          %4878 = vadd.xlane.f32.xlu0 %v4837
          %v4879 = vpop.xlane.xlu0 %4878
          %4880 = vadd.xlane.f32.xlu0 %v4838
          %v4881 = vpop.xlane.xlu0 %4880
          %4882 = vadd.xlane.f32.xlu0 %v4839
          %v4883 = vpop.xlane.xlu0 %4882
          %4884 = vadd.xlane.f32.xlu0 %v4840
          %v4885 = vpop.xlane.xlu0 %4884
          %4886 = vadd.xlane.f32.xlu0 %v4841
          %v4887 = vpop.xlane.xlu0 %4886
          %4888 = vadd.xlane.f32.xlu0 %v4842
          %v4889 = vpop.xlane.xlu0 %4888
          %4890 = vadd.xlane.f32.xlu0 %v4843
          %v4891 = vpop.xlane.xlu0 %4890
          %4892 = vadd.xlane.f32.xlu0 %v4844
          %v4893 = vpop.xlane.xlu0 %4892
          %4894 = vadd.xlane.f32.xlu0 %v4845
          %v4895 = vpop.xlane.xlu0 %4894
          %4896 = vadd.xlane.f32.xlu0 %v4846
          %v4897 = vpop.xlane.xlu0 %4896
          %4898 = vadd.xlane.f32.xlu0 %v4847
          %v4899 = vpop.xlane.xlu0 %4898
          %4900 = vadd.xlane.f32.xlu0 %v4848
          %v4901 = vpop.xlane.xlu0 %4900
          %4902 = vadd.xlane.f32.xlu0 %v4849
          %v4903 = vpop.xlane.xlu0 %4902
          %v4904 = vmul.f32 %v4873, %v988
          %v4905 = vmul.f32 %v4875, %v988
          %v4906 = vmul.f32 %v4877, %v988
          %v4907 = vmul.f32 %v4879, %v988
          %v4908 = vmul.f32 %v4881, %v988
          %v4909 = vmul.f32 %v4883, %v988
          %v4910 = vmul.f32 %v4885, %v988
          %v4911 = vmul.f32 %v4887, %v988
          %v4912 = vmul.f32 %v4889, %v988
          %v4913 = vmul.f32 %v4891, %v988
          %v4914 = vmul.f32 %v4893, %v988
          %v4915 = vmul.f32 %v4895, %v988
          %v4916 = vmul.f32 %v4897, %v988
          %v4917 = vmul.f32 %v4899, %v988
          %v4918 = vmul.f32 %v4901, %v988
          %v4919 = vmul.f32 %v4903, %v988
          %v4920 = vsub.f32 %v4834, %v4904
          %v4921 = vsub.f32 %v4835, %v4905
          %v4922 = vsub.f32 %v4836, %v4906
          %v4923 = vsub.f32 %v4837, %v4907
          %v4924 = vsub.f32 %v4838, %v4908
          %v4925 = vsub.f32 %v4839, %v4909
          %v4926 = vsub.f32 %v4840, %v4910
          %v4927 = vsub.f32 %v4841, %v4911
          %v4928 = vsub.f32 %v4842, %v4912
          %v4929 = vsub.f32 %v4843, %v4913
          %v4930 = vsub.f32 %v4844, %v4914
          %v4931 = vsub.f32 %v4845, %v4915
          %v4932 = vsub.f32 %v4846, %v4916
          %v4933 = vsub.f32 %v4847, %v4917
          %v4934 = vsub.f32 %v4848, %v4918
          %v4935 = vsub.f32 %v4849, %v4919
          %v4936 = vmul.f32 %v4920, %v4920
          %v4937 = vmul.f32 %v4921, %v4921
          %v4938 = vmul.f32 %v4922, %v4922
          %v4939 = vmul.f32 %v4923, %v4923
          %v4940 = vmul.f32 %v4924, %v4924
          %v4941 = vmul.f32 %v4925, %v4925
          %v4942 = vmul.f32 %v4926, %v4926
          %v4943 = vmul.f32 %v4927, %v4927
          %v4944 = vmul.f32 %v4928, %v4928
          %v4945 = vmul.f32 %v4929, %v4929
          %v4946 = vmul.f32 %v4930, %v4930
          %v4947 = vmul.f32 %v4931, %v4931
          %v4948 = vmul.f32 %v4932, %v4932
          %v4949 = vmul.f32 %v4933, %v4933
          %v4950 = vmul.f32 %v4934, %v4934
          %v4951 = vmul.f32 %v4935, %v4935
          %4952 = vadd.xlane.f32.xlu0 %v4936
          %v4953 = vpop.xlane.xlu0 %4952
          %4954 = vadd.xlane.f32.xlu0 %v4937
          %v4955 = vpop.xlane.xlu0 %4954
          %4956 = vadd.xlane.f32.xlu0 %v4938
          %v4957 = vpop.xlane.xlu0 %4956
          %4958 = vadd.xlane.f32.xlu0 %v4939
          %v4959 = vpop.xlane.xlu0 %4958
          %4960 = vadd.xlane.f32.xlu0 %v4940
          %v4961 = vpop.xlane.xlu0 %4960
          %4962 = vadd.xlane.f32.xlu0 %v4941
          %v4963 = vpop.xlane.xlu0 %4962
          %4964 = vadd.xlane.f32.xlu0 %v4942
          %v4965 = vpop.xlane.xlu0 %4964
          %4966 = vadd.xlane.f32.xlu0 %v4943
          %v4967 = vpop.xlane.xlu0 %4966
          %4968 = vadd.xlane.f32.xlu0 %v4944
          %v4969 = vpop.xlane.xlu0 %4968
          %4970 = vadd.xlane.f32.xlu0 %v4945
          %v4971 = vpop.xlane.xlu0 %4970
          %4972 = vadd.xlane.f32.xlu0 %v4946
          %v4973 = vpop.xlane.xlu0 %4972
          %4974 = vadd.xlane.f32.xlu0 %v4947
          %v4975 = vpop.xlane.xlu0 %4974
          %4976 = vadd.xlane.f32.xlu0 %v4948
          %v4977 = vpop.xlane.xlu0 %4976
          %4978 = vadd.xlane.f32.xlu0 %v4949
          %v4979 = vpop.xlane.xlu0 %4978
          %4980 = vadd.xlane.f32.xlu0 %v4950
          %v4981 = vpop.xlane.xlu0 %4980
          %4982 = vadd.xlane.f32.xlu0 %v4951
          %v4983 = vpop.xlane.xlu0 %4982
          %v4984 = vmul.f32 %v4953, 0.007874016
          %v4985 = vmul.f32 %v4955, 0.007874016
          %v4986 = vmul.f32 %v4957, 0.007874016
          %v4987 = vmul.f32 %v4959, 0.007874016
          %v4988 = vmul.f32 %v4961, 0.007874016
          %v4989 = vmul.f32 %v4963, 0.007874016
          %v4990 = vmul.f32 %v4965, 0.007874016
          %v4991 = vmul.f32 %v4967, 0.007874016
          %v4992 = vmul.f32 %v4969, 0.007874016
          %v4993 = vmul.f32 %v4971, 0.007874016
          %v4994 = vmul.f32 %v4973, 0.007874016
          %v4995 = vmul.f32 %v4975, 0.007874016
          %v4996 = vmul.f32 %v4977, 0.007874016
          %v4997 = vmul.f32 %v4979, 0.007874016
          %v4998 = vmul.f32 %v4981, 0.007874016
          %v4999 = vmul.f32 %v4983, 0.007874016
          %v5000 = vrsqrt.pop %v4984
          %v5001 = vmul.f32 %v4984, %v5000
          %vm5002 = vcmp.eq.f32.partialorder %v4984, inf
          %v5003 = vsel %vm5002, %v4984, %v5001
          %vm5004 = vcmp.eq.f32.partialorder %v4984, 0.0
          %v5005 = vand.u32 %v4984, 2147483648
          %v5006 = vsel %vm5004, %v5005, %v5003
          %v5007 = vrsqrt.pop %v4985
          %v5008 = vmul.f32 %v4985, %v5007
          %vm5009 = vcmp.eq.f32.partialorder %v4985, inf
          %v5010 = vsel %vm5009, %v4985, %v5008
          %vm5011 = vcmp.eq.f32.partialorder %v4985, 0.0
          %v5012 = vand.u32 %v4985, 2147483648
          %v5013 = vsel %vm5011, %v5012, %v5010
          %v5014 = vrsqrt.pop %v4986
          %v5015 = vmul.f32 %v4986, %v5014
          %vm5016 = vcmp.eq.f32.partialorder %v4986, inf
          %v5017 = vsel %vm5016, %v4986, %v5015
          %vm5018 = vcmp.eq.f32.partialorder %v4986, 0.0
          %v5019 = vand.u32 %v4986, 2147483648
          %v5020 = vsel %vm5018, %v5019, %v5017
          %v5021 = vrsqrt.pop %v4987
          %v5022 = vmul.f32 %v4987, %v5021
          %vm5023 = vcmp.eq.f32.partialorder %v4987, inf
          %v5024 = vsel %vm5023, %v4987, %v5022
          %vm5025 = vcmp.eq.f32.partialorder %v4987, 0.0
          %v5026 = vand.u32 %v4987, 2147483648
          %v5027 = vsel %vm5025, %v5026, %v5024
          %v5028 = vrsqrt.pop %v4988
          %v5029 = vmul.f32 %v4988, %v5028
          %vm5030 = vcmp.eq.f32.partialorder %v4988, inf
          %v5031 = vsel %vm5030, %v4988, %v5029
          %vm5032 = vcmp.eq.f32.partialorder %v4988, 0.0
          %v5033 = vand.u32 %v4988, 2147483648
          %v5034 = vsel %vm5032, %v5033, %v5031
          %v5035 = vrsqrt.pop %v4989
          %v5036 = vmul.f32 %v4989, %v5035
          %vm5037 = vcmp.eq.f32.partialorder %v4989, inf
          %v5038 = vsel %vm5037, %v4989, %v5036
          %vm5039 = vcmp.eq.f32.partialorder %v4989, 0.0
          %v5040 = vand.u32 %v4989, 2147483648
          %v5041 = vsel %vm5039, %v5040, %v5038
          %v5042 = vrsqrt.pop %v4990
          %v5043 = vmul.f32 %v4990, %v5042
          %vm5044 = vcmp.eq.f32.partialorder %v4990, inf
          %v5045 = vsel %vm5044, %v4990, %v5043
          %vm5046 = vcmp.eq.f32.partialorder %v4990, 0.0
          %v5047 = vand.u32 %v4990, 2147483648
          %v5048 = vsel %vm5046, %v5047, %v5045
          %v5049 = vrsqrt.pop %v4991
          %v5050 = vmul.f32 %v4991, %v5049
          %vm5051 = vcmp.eq.f32.partialorder %v4991, inf
          %v5052 = vsel %vm5051, %v4991, %v5050
          %vm5053 = vcmp.eq.f32.partialorder %v4991, 0.0
          %v5054 = vand.u32 %v4991, 2147483648
          %v5055 = vsel %vm5053, %v5054, %v5052
          %v5056 = vrsqrt.pop %v4992
          %v5057 = vmul.f32 %v4992, %v5056
          %vm5058 = vcmp.eq.f32.partialorder %v4992, inf
          %v5059 = vsel %vm5058, %v4992, %v5057
          %vm5060 = vcmp.eq.f32.partialorder %v4992, 0.0
          %v5061 = vand.u32 %v4992, 2147483648
          %v5062 = vsel %vm5060, %v5061, %v5059
          %v5063 = vrsqrt.pop %v4993
          %v5064 = vmul.f32 %v4993, %v5063
          %vm5065 = vcmp.eq.f32.partialorder %v4993, inf
          %v5066 = vsel %vm5065, %v4993, %v5064
          %vm5067 = vcmp.eq.f32.partialorder %v4993, 0.0
          %v5068 = vand.u32 %v4993, 2147483648
          %v5069 = vsel %vm5067, %v5068, %v5066
          %v5070 = vrsqrt.pop %v4994
          %v5071 = vmul.f32 %v4994, %v5070
          %vm5072 = vcmp.eq.f32.partialorder %v4994, inf
          %v5073 = vsel %vm5072, %v4994, %v5071
          %vm5074 = vcmp.eq.f32.partialorder %v4994, 0.0
          %v5075 = vand.u32 %v4994, 2147483648
          %v5076 = vsel %vm5074, %v5075, %v5073
          %v5077 = vrsqrt.pop %v4995
          %v5078 = vmul.f32 %v4995, %v5077
          %vm5079 = vcmp.eq.f32.partialorder %v4995, inf
          %v5080 = vsel %vm5079, %v4995, %v5078
          %vm5081 = vcmp.eq.f32.partialorder %v4995, 0.0
          %v5082 = vand.u32 %v4995, 2147483648
          %v5083 = vsel %vm5081, %v5082, %v5080
          %v5084 = vrsqrt.pop %v4996
          %v5085 = vmul.f32 %v4996, %v5084
          %vm5086 = vcmp.eq.f32.partialorder %v4996, inf
          %v5087 = vsel %vm5086, %v4996, %v5085
          %vm5088 = vcmp.eq.f32.partialorder %v4996, 0.0
          %v5089 = vand.u32 %v4996, 2147483648
          %v5090 = vsel %vm5088, %v5089, %v5087
          %v5091 = vrsqrt.pop %v4997
          %v5092 = vmul.f32 %v4997, %v5091
          %vm5093 = vcmp.eq.f32.partialorder %v4997, inf
          %v5094 = vsel %vm5093, %v4997, %v5092
          %vm5095 = vcmp.eq.f32.partialorder %v4997, 0.0
          %v5096 = vand.u32 %v4997, 2147483648
          %v5097 = vsel %vm5095, %v5096, %v5094
          %v5098 = vrsqrt.pop %v4998
          %v5099 = vmul.f32 %v4998, %v5098
          %vm5100 = vcmp.eq.f32.partialorder %v4998, inf
          %v5101 = vsel %vm5100, %v4998, %v5099
          %vm5102 = vcmp.eq.f32.partialorder %v4998, 0.0
          %v5103 = vand.u32 %v4998, 2147483648
          %v5104 = vsel %vm5102, %v5103, %v5101
          %v5105 = vrsqrt.pop %v4999
          %v5106 = vmul.f32 %v4999, %v5105
          %vm5107 = vcmp.eq.f32.partialorder %v4999, inf
          %v5108 = vsel %vm5107, %v4999, %v5106
          %vm5109 = vcmp.eq.f32.partialorder %v4999, 0.0
          %v5110 = vand.u32 %v4999, 2147483648
          %v5111 = vsel %vm5109, %v5110, %v5108
          %v5112 = vadd.f32 %v5006, 1e-06
          %v5113 = vadd.f32 %v5013, 1e-06
          %v5114 = vadd.f32 %v5020, 1e-06
          %v5115 = vadd.f32 %v5027, 1e-06
          %v5116 = vadd.f32 %v5034, 1e-06
          %v5117 = vadd.f32 %v5041, 1e-06
          %v5118 = vadd.f32 %v5048, 1e-06
          %v5119 = vadd.f32 %v5055, 1e-06
          %v5120 = vadd.f32 %v5062, 1e-06
          %v5121 = vadd.f32 %v5069, 1e-06
          %v5122 = vadd.f32 %v5076, 1e-06
          %v5123 = vadd.f32 %v5083, 1e-06
          %v5124 = vadd.f32 %v5090, 1e-06
          %v5125 = vadd.f32 %v5097, 1e-06
          %v5126 = vadd.f32 %v5104, 1e-06
          %v5127 = vadd.f32 %v5111, 1e-06
          %v5128 = vrcp.pop %v5112
          %v5129 = vrcp.pop %v5113
          %v5130 = vrcp.pop %v5114
          %v5131 = vrcp.pop %v5115
          %v5132 = vrcp.pop %v5116
          %v5133 = vrcp.pop %v5117
          %v5134 = vrcp.pop %v5118
          %v5135 = vrcp.pop %v5119
          %v5136 = vrcp.pop %v5120
          %v5137 = vrcp.pop %v5121
          %v5138 = vrcp.pop %v5122
          %v5139 = vrcp.pop %v5123
          %v5140 = vrcp.pop %v5124
          %v5141 = vrcp.pop %v5125
          %v5142 = vrcp.pop %v5126
          %v5143 = vrcp.pop %v5127
          %v5145 = vlaneseq
          %v5146 = vshrl.u32 %v5145, 7
          %v5147 = vsub.s32 0, %v5146
          %v5148 = vrot.slane %v4870, %v5147
          %v5150 = vmul.f32 %v5148, %v4920
          %v5151 = vmul.f32 %v5148, %v4921
          %v5152 = vmul.f32 %v5148, %v4922
          %v5153 = vmul.f32 %v5148, %v4923
          %v5154 = vmul.f32 %v5148, %v4924
          %v5155 = vmul.f32 %v5148, %v4925
          %v5156 = vmul.f32 %v5148, %v4926
          %v5157 = vmul.f32 %v5148, %v4927
          %v5158 = vmul.f32 %v5148, %v4928
          %v5159 = vmul.f32 %v5148, %v4929
          %v5160 = vmul.f32 %v5148, %v4930
          %v5161 = vmul.f32 %v5148, %v4931
          %v5162 = vmul.f32 %v5148, %v4932
          %v5163 = vmul.f32 %v5148, %v4933
          %v5164 = vmul.f32 %v5148, %v4934
          %v5165 = vmul.f32 %v5148, %v4935
          %v5166 = vmul.f32 %v5150, %v5128
          %v5167 = vmul.f32 %v5151, %v5129
          %v5168 = vmul.f32 %v5152, %v5130
          %v5169 = vmul.f32 %v5153, %v5131
          %v5170 = vmul.f32 %v5154, %v5132
          %v5171 = vmul.f32 %v5155, %v5133
          %v5172 = vmul.f32 %v5156, %v5134
          %v5173 = vmul.f32 %v5157, %v5135
          %v5174 = vmul.f32 %v5158, %v5136
          %v5175 = vmul.f32 %v5159, %v5137
          %v5176 = vmul.f32 %v5160, %v5138
          %v5177 = vmul.f32 %v5161, %v5139
          %v5178 = vmul.f32 %v5162, %v5140
          %v5179 = vmul.f32 %v5163, %v5141
          %v5180 = vmul.f32 %v5164, %v5142
          %v5181 = vmul.f32 %v5165, %v5143
          %v5183 = vlaneseq
          %v5184 = vshrl.u32 %v5183, 7
          %v5185 = vsub.s32 0, %v5184
          %v5186 = vrot.slane %v4871, %v5185
          %v5188 = vadd.f32 %v5166, %v5186
          %v5189 = vadd.f32 %v5167, %v5186
          %v5190 = vadd.f32 %v5168, %v5186
          %v5191 = vadd.f32 %v5169, %v5186
          %v5192 = vadd.f32 %v5170, %v5186
          %v5193 = vadd.f32 %v5171, %v5186
          %v5194 = vadd.f32 %v5172, %v5186
          %v5195 = vadd.f32 %v5173, %v5186
          %v5196 = vadd.f32 %v5174, %v5186
          %v5197 = vadd.f32 %v5175, %v5186
          %v5198 = vadd.f32 %v5176, %v5186
          %v5199 = vadd.f32 %v5177, %v5186
          %v5200 = vadd.f32 %v5178, %v5186
          %v5201 = vadd.f32 %v5179, %v5186
          %v5202 = vadd.f32 %v5180, %v5186
          %v5203 = vadd.f32 %v5181, %v5186
          %5204 = vst [vmem:[%s880] sm:$0xff] %v5188
          %5205 = vst [vmem:[%s880 + $0x8] sm:$0xff] %v5189
          %5206 = vst [vmem:[%s880 + $0x10] sm:$0xff] %v5190
          %5207 = vst [vmem:[%s880 + $0x18] sm:$0xff] %v5191
          %5208 = vst [vmem:[%s880 + $0x20] sm:$0xff] %v5192
          %5209 = vst [vmem:[%s880 + $0x28] sm:$0xff] %v5193
          %5210 = vst [vmem:[%s880 + $0x30] sm:$0xff] %v5194
          %5211 = vst [vmem:[%s880 + $0x38] sm:$0xff] %v5195
          %5212 = vst [vmem:[%s880 + $0x40] sm:$0xff] %v5196
          %5213 = vst [vmem:[%s880 + $0x48] sm:$0xff] %v5197
          %5214 = vst [vmem:[%s880 + $0x50] sm:$0xff] %v5198
          %5215 = vst [vmem:[%s880 + $0x58] sm:$0xff] %v5199
          %5216 = vst [vmem:[%s880 + $0x60] sm:$0xff] %v5200
          %5217 = vst [vmem:[%s880 + $0x68] sm:$0xff] %v5201
          %5218 = vst [vmem:[%s880 + $0x70] sm:$0xff] %v5202
          %5219 = vst [vmem:[%s880 + $0x78] sm:$0xff] %v5203
        $region124: #{encoder_forward.1} parent=83 // pred_fallthru
          _
        %s5220 = sand.u32 %s471, 1
        %s5221 = scalar_lea.sflag [#allocation5], %s5220
        %s5222 = sand.u32 %s471, 1
        %s5223 = smul.addr %s5222, 128
        %s5224 = scalar_lea.vmem [#allocation17], %s5223
        // Predicated region
        $region125: #{encoder_forward.1} parent=83 // pred_check
          %p5225 = pneg %p481
        $region126: #{encoder_forward.1} parent=83 // pred_check_branch
          %5227 = sbr.rel (%p5225) target = $region128
        $region127: #{encoder_forward.1} parent=83 // pred_region
          %s5229 = ssub.s32 2048, 2048
          %5230 = vsyncadd %s5221, %s5229
          %s5231 = smul.addr %s49, 16
          %s5232 = smul.addr %s5231, 128
          %s5233 = scalar_lea.hbm %s16, %s5232
          %s5234 = sshll.u32 %s5224, 4
          %s5235 = int_to_ptr.vmem [resolvable:$true] %s5234
          %5240 = dma.vmem_to_hbm [thread:$0]  %s5235, 2048, %s5233, %s5221, 128, 128, 8
        $region128: #{encoder_forward.1} parent=83 // pred_fallthru
          _
      $region84: #{encoder_forward.1} parent=5 // pred_fallthru
        _
      %p5241 = scmp.le.s32.totalorder 2, %s40
      // Predicated region
      $region129: #{encoder_forward.1} parent=5 // pred_check
        %p5242 = pneg %p5241
      $region130: #{encoder_forward.1} parent=5 // pred_check_branch
        %5244 = sbr.rel (%p5242) target = $region132
      $region131: #{encoder_forward.1} parent=5 // pred_region
        %s5245 = ssub.s32 %s40, 2
        // Predicated region
        $region133: #{encoder_forward.1} parent=131 // pred_check
          %p5246 = pneg %p487
        $region134: #{encoder_forward.1} parent=131 // pred_check_branch
          %5248 = sbr.rel (%p5246) target = $region136
        $region135: #{encoder_forward.1} parent=131 // pred_region
          %s5249 = sand.u32 %s472, 1
          %s5250 = scalar_lea.sflag [#allocation5], %s5249
          %s5251 = sand.u32 %s472, 1
          %s5252 = smul.addr %s5251, 128
          %s5253 = scalar_lea.vmem [#allocation17], %s5252
          %5254 = dma.done %s5250, 2048
        $region136: #{encoder_forward.1} parent=131 // pred_fallthru
          _
      $region132: #{encoder_forward.1} parent=5 // pred_fallthru
        _
    $region6: #{encoder_forward.1} parent=1 // loop_footer
      %s44 = sadd.s32 1, %s40
    $region7: #{encoder_forward.1} parent=1 // loop_footer_branch
      %39 = sbr.rel target = $region3
    $region8: #{encoder_forward.1} parent=1 // loop_exit
      _
    %5255 = vsyncpa [#allocation4], 1
    %s5256 = scalar_lea.sflag [#allocation4], 1
    %5257 = vsyncpa %s5256, 1
    %5258 = vsyncpa [#allocation7], 1
    %s5259 = scalar_lea.sflag [#allocation7], 1
    %5260 = vsyncpa %s5259, 1
    %5261 = vsyncpa [#allocation10], 1
    %s5262 = scalar_lea.sflag [#allocation10], 1
    %5263 = vsyncpa %s5262, 1
    %5264 = vsyncpa [#allocation13], 1
    %s5265 = scalar_lea.sflag [#allocation13], 1
    %5266 = vsyncpa %s5265, 1
    %5267 = vsyncpa [#allocation16], 1
    %s5268 = scalar_lea.sflag [#allocation16], 1
    %5269 = vsyncpa %s5268, 1
    %5270 = vsyncpa [#allocation5], 1
    %s5271 = scalar_lea.sflag [#allocation5], 1
    %5272 = vsyncpa %s5271, 1

</llo_original>
